<compile_context>
chip_gen: v5e
topology: v5e:2x2
jax: 0.10.0
libtpu: 0.0.40
codegen_flags: <defaults>
</compile_context>

<pallas_src>
import jax
import jax.numpy as jnp
from jax.experimental import pallas as pl
from jax.experimental.pallas import tpu as pltpu


_CONV_SPECS = [(1, 32), (32, 64), (64, 128), (128, 64), (64, 32)]
_TAPS = ((0, 0), (0, 1), (1, 0), (1, 1))


# ------------------------------ fused kernel -------------------------------- #

def _net_kernel(x_ref,
                w1_ref, b1_ref, w2_ref, b2_ref, w3_ref, b3_ref,
                w4_ref, b4_ref, w5_ref, b5_ref,
                fc1w_ref, fc1b_ref, fc2w_ref, fc2b_ref,
                o_ref,
                pad1_ref, pad2_ref, pad3_ref, pad4_ref):
    """One image per grid step (grid=(N,)); activations never leave VMEM."""
    f32, bf16 = jnp.float32, jnp.bfloat16

    def pad_halo_store(pad_ref, a):
        # Zero only the 1-px halo strips (top/bottom rows, left/right columns)
        # instead of the whole buffer, then write the interior once.
        h, w, c = a.shape
        hp, wp = h + 2, w + 2
        dt = pad_ref.dtype
        pad_ref[0:1, :, :] = jnp.zeros((1, wp, c), dt)
        pad_ref[hp - 1:hp, :, :] = jnp.zeros((1, wp, c), dt)
        pad_ref[:, 0:1, :] = jnp.zeros((hp, 1, c), dt)
        pad_ref[:, wp - 1:wp, :] = jnp.zeros((hp, 1, c), dt)
        pad_ref[1:h + 1, 1:w + 1, :] = a.astype(dt)
        return pad_ref[...]

    def conv2x2_mxu(xp, w_ref, b_ref):
        # 2x2 "valid" conv as a single im2col matmul (K = 4*Cin), bf16
        # operands, f32 accumulation; bias + ReLU epilogue in f32.
        hp, wp, cin = xp.shape
        ho, wo = hp - 1, wp - 1
        taps = [xp[dy:dy + ho, dx:dx + wo, :] for dy, dx in _TAPS]
        patches = jnp.concatenate(taps, axis=-1).reshape(ho * wo, 4 * cin)
        y = jnp.dot(patches, w_ref[...], preferred_element_type=f32)
        y = jnp.maximum(y + b_ref[...], 0.0)
        return y, ho, wo

    # ---- conv1 (Cin=1): 4 VPU broadcast multiply-adds, no MXU/im2col ------- #
    x = x_ref[0].astype(f32)                               # (H, W, 1)
    xp1 = pad_halo_store(pad1_ref, x)                      # (H+2, W+2, 1) f32
    ho1, wo1 = xp1.shape[0] - 1, xp1.shape[1] - 1
    c1 = w1_ref.shape[-1]
    a = jnp.zeros((ho1, wo1, c1), f32)
    for t, (dy, dx) in enumerate(_TAPS):
        a = a + xp1[dy:dy + ho1, dx:dx + wo1, :] * w1_ref[t:t + 1, :].reshape(1, 1, c1)
    a = jnp.maximum(a + b1_ref[...].reshape(1, 1, c1), 0.0)

    # ---- conv2..conv4 (pad=1): bf16 padded scratch -> im2col MXU matmul ---- #
    for w_ref, b_ref, pad_ref in ((w2_ref, b2_ref, pad2_ref),
                                  (w3_ref, b3_ref, pad3_ref),
                                  (w4_ref, b4_ref, pad4_ref)):
        xp = pad_halo_store(pad_ref, a)                    # bf16 padded input
        y, ho, wo = conv2x2_mxu(xp, w_ref, b_ref)
        a = y.reshape(ho, wo, w_ref.shape[-1])             # (ho, wo, cout) f32

    # ---- conv5 (pad=0) ------------------------------------------------------ #
    y5, ho5, wo5 = conv2x2_mxu(a.astype(bf16), w5_ref, b5_ref)   # (ho5*wo5, 32) f32

    # ---- fc1: accumulate over spatial positions (no flatten stores) -------- #
    n_pos = fc1w_ref.shape[0]
    assert n_pos == ho5 * wo5 and fc1w_ref.shape[1] == y5.shape[-1]
    acc = jnp.zeros((1, fc1w_ref.shape[-1]), f32)
    for p in range(n_pos):
        acc = acc + jnp.dot(y5[p:p + 1, :].astype(bf16), fc1w_ref[p],
                            preferred_element_type=f32)
    hid = jnp.maximum(acc + fc1b_ref[...], 0.0)

    # ---- fc2 ---------------------------------------------------------------- #
    out = jnp.dot(hid.astype(bf16), fc2w_ref[...],
                  preferred_element_type=f32) + fc2b_ref[...]
    o_ref[0] = out.astype(o_ref.dtype)


# --------------------------------- wrapper ----------------------------------- #

def net_forward(params, x_nchw):
    N, C, H, W = x_nchw.shape
    assert C == 1, "Net.conv1 expects a single input channel"
    f32, bf16 = jnp.float32, jnp.bfloat16

    x = jnp.transpose(x_nchw, (0, 2, 3, 1))                # NCHW -> NHWC

    # conv1..conv4 (k=2, s=1, p=1) grow spatial by +1 each; conv5 (p=0) shrinks by 1.
    H1, W1 = H + 1, W + 1
    H2, W2 = H + 2, W + 2
    H3, W3 = H + 3, W + 3
    H5, W5 = H + 3, W + 3
    n_pos = H5 * W5
    flat = 32 * n_pos
    assert params["fc1_w"].shape == (flat, 64)

    ins = [x]
    in_specs = [pl.BlockSpec((1, H, W, 1), lambda i: (i, 0, 0, 0))]

    def add_resident(arr):
        # Full-array block, constant index map: DMA'd once, resident across grid.
        ins.append(arr)
        in_specs.append(pl.BlockSpec(arr.shape, lambda i, nd=arr.ndim: (0,) * nd))

    # conv1 stays f32 (VPU path); conv2..5 / fc weights pre-cast to bf16.
    add_resident(params["conv1_w"].reshape(4, 32))
    add_resident(params["conv1_b"].reshape(1, 32))
    for idx, (cin, cout) in list(enumerate(_CONV_SPECS, start=1))[1:]:
        add_resident(params[f"conv{idx}_w"].reshape(4 * cin, cout).astype(bf16))
        add_resident(params[f"conv{idx}_b"].reshape(1, cout))
    # fc1 rows regrouped per spatial position (NHWC order): block p is the
    # (32, 64) weight slab for position p = h*W5 + w.  Weight-only reorder.
    fc1_w = (params["fc1_w"].reshape(32, H5, W5, 64)
             .transpose(1, 2, 0, 3).reshape(n_pos, 32, 64).astype(bf16))
    add_resident(fc1_w)
    add_resident(params["fc1_b"].reshape(1, 64))
    add_resident(params["fc2_w"].astype(bf16))
    add_resident(params["fc2_b"].reshape(1, 10))

    scratch = [
        pltpu.VMEM((H + 2, W + 2, 1), f32),       # conv1 padded input (VPU path)
        pltpu.VMEM((H1 + 2, W1 + 2, 32), bf16),   # conv2 padded input
        pltpu.VMEM((H2 + 2, W2 + 2, 64), bf16),   # conv3 padded input
        pltpu.VMEM((H3 + 2, W3 + 2, 128), bf16),  # conv4 padded input
    ]

    # Advisory cost estimate + VMEM budget from the actual buffer sizes.
    flops = 2 * N * (H1 * W1) * 4 * 32                       # conv1 (VPU)
    h_sp, w_sp = H1, W1
    for cin, cout in _CONV_SPECS[1:4]:                       # conv2..conv4
        ho, wo = h_sp + 1, w_sp + 1
        flops += 2 * N * ho * wo * (4 * cin) * cout
        h_sp, w_sp = ho, wo
    flops += 2 * N * (H5 * W5) * (4 * 64) * 32               # conv5
    flops += 2 * N * flat * 64 + 2 * N * 64 * 10             # fc1, fc2
    in_bytes = sum(int(a.size) * a.dtype.itemsize for a in ins)
    out_bytes = N * 10 * 4
    scratch_bytes = ((H + 2) * (W + 2) * 4
                     + (H1 + 2) * (W1 + 2) * 32 * 2
                     + (H2 + 2) * (W2 + 2) * 64 * 2
                     + (H3 + 2) * (W3 + 2) * 128 * 2)
    vmem_limit = int(2 * (in_bytes + out_bytes) + scratch_bytes + (8 << 20))

    out = pl.pallas_call(
        _net_kernel,
        out_shape=jax.ShapeDtypeStruct((N, 1, 10), f32),
        grid=(N,),
        in_specs=in_specs,
        out_specs=pl.BlockSpec((1, 1, 10), lambda i: (i, 0, 0)),
        scratch_shapes=scratch,
        compiler_params=pltpu.CompilerParams(
            dimension_semantics=("parallel",),               # both TCs on v7x
            vmem_limit_bytes=vmem_limit),
        cost_estimate=pl.CostEstimate(flops=int(flops), transcendentals=0,
                                      bytes_accessed=int(in_bytes + out_bytes)),
    )(*ins)
    return out.reshape(N, 10)


# --------------------------- parameters / reference -------------------------- #

def init_params(key, in_hw):
    """Deterministic synthetic parameters (PyTorch-default-style uniform init)."""
    params = {}
    keys = jax.random.split(key, 14)
    ki = 0
    for idx, (cin, cout) in enumerate(_CONV_SPECS, start=1):
        bound = float(cin * 4) ** -0.5
        params[f"conv{idx}_w"] = jax.random.uniform(
            keys[ki], (2, 2, cin, cout), jnp.float32, -bound, bound); ki += 1
        params[f"conv{idx}_b"] = jax.random.uniform(
            keys[ki], (cout,), jnp.float32, -bound, bound); ki += 1

    H, W = in_hw
    H5, W5 = H + 3, W + 3
    flat = 32 * H5 * W5
    # TODO(synk): the source module declares nn.Linear(32, 64), which is
    # shape-inconsistent with its own conv stack for any input size; fc1
    # in_features is derived from the real flattened conv5 size instead.
    bound = float(flat) ** -0.5
    params["fc1_w"] = jax.random.uniform(keys[ki], (flat, 64), jnp.float32, -bound, bound); ki += 1
    params["fc1_b"] = jax.random.uniform(keys[ki], (64,), jnp.float32, -bound, bound); ki += 1
    bound = 64.0 ** -0.5
    params["fc2_w"] = jax.random.uniform(keys[ki], (64, 10), jnp.float32, -bound, bound); ki += 1
    params["fc2_b"] = jax.random.uniform(keys[ki], (10,), jnp.float32, -bound, bound); ki += 1
    return params


def net_forward_ref(params, x_nchw):
    """Pure-JAX reference (NCHW like PyTorch), matched mixed precision:
    conv1 in f32, conv2..5 / fc1 / fc2 with bf16 operands and f32 accumulation."""
    f32, bf16 = jnp.float32, jnp.bfloat16

    def conv_ref(x, w, b, pad, use_bf16):
        w_oihw = jnp.transpose(w, (3, 2, 0, 1))
        if use_bf16:
            x, w_oihw = x.astype(bf16), w_oihw.astype(bf16)
        y = jax.lax.conv_general_dilated(
            x, w_oihw, (1, 1), [(pad, pad), (pad, pad)],
            dimension_numbers=("NCHW", "OIHW", "NCHW"),
            preferred_element_type=f32,
            precision=jax.lax.Precision.HIGHEST)
        return jax.nn.relu(y + b.reshape(1, -1, 1, 1))

    x = x_nchw
    x = conv_ref(x, params["conv1_w"], params["conv1_b"], 1, False)
    x = conv_ref(x, params["conv2_w"], params["conv2_b"], 1, True)
    x = conv_ref(x, params["conv3_w"], params["conv3_b"], 1, True)
    x = conv_ref(x, params["conv4_w"], params["conv4_b"], 1, True)
    x = conv_ref(x, params["conv5_w"], params["conv5_b"], 0, True)
    x = x.reshape(x.shape[0], -1)                           # torch.flatten(x, 1)
    x = jax.nn.relu(jnp.dot(x.astype(bf16), params["fc1_w"].astype(bf16),
                            preferred_element_type=f32,
                            precision=jax.lax.Precision.HIGHEST) + params["fc1_b"])
    x = jnp.dot(x.astype(bf16), params["fc2_w"].astype(bf16),
                preferred_element_type=f32,
                precision=jax.lax.Precision.HIGHEST) + params["fc2_b"]
    return x


# ----------------------------------- main ------------------------------------ #

if __name__ == "__main__":
    # TODO(synk): the reference module's debug print() calls are omitted.
    key = jax.random.PRNGKey(0)
    k_params, k_x = jax.random.split(key)

    N, C, H, W = 2, 1, 4, 4                  # conv1 expects 1 input channel
    x = jax.random.normal(k_x, (N, C, H, W), jnp.float32)
    params = init_params(k_params, (H, W))

    out = jax.block_until_ready(jax.jit(net_forward)(params, x))
    assert out.shape == (N, 10), out.shape

    ref = jax.block_until_ready(net_forward_ref(params, x))
    assert jnp.allclose(out, ref, rtol=1e-2, atol=1e-2), (
        "Pallas output mismatch vs JAX reference")

    print("KERNEL_OK")
</pallas_src>

<mosaic_0001>
module attributes {stable_mosaic.version = 11 : i64} {
  func.func @_net_kernel(%arg0: i32, %arg1: memref<1x4x4x1xf32, #tpu.memory_space<vmem>>, %arg2: memref<4x32xf32, #tpu.memory_space<vmem>>, %arg3: memref<1x32xf32, #tpu.memory_space<vmem>>, %arg4: memref<128x64xbf16, #tpu.memory_space<vmem>>, %arg5: memref<1x64xf32, #tpu.memory_space<vmem>>, %arg6: memref<256x128xbf16, #tpu.memory_space<vmem>>, %arg7: memref<1x128xf32, #tpu.memory_space<vmem>>, %arg8: memref<512x64xbf16, #tpu.memory_space<vmem>>, %arg9: memref<1x64xf32, #tpu.memory_space<vmem>>, %arg10: memref<256x32xbf16, #tpu.memory_space<vmem>>, %arg11: memref<1x32xf32, #tpu.memory_space<vmem>>, %arg12: memref<49x32x64xbf16, #tpu.memory_space<vmem>>, %arg13: memref<1x64xf32, #tpu.memory_space<vmem>>, %arg14: memref<64x10xbf16, #tpu.memory_space<vmem>>, %arg15: memref<1x10xf32, #tpu.memory_space<vmem>>, %arg16: memref<1x1x10xf32, #tpu.memory_space<vmem>>, %arg17: memref<6x6x1xf32, #tpu.memory_space<vmem>>, %arg18: memref<7x7x32xbf16, #tpu.memory_space<vmem>>, %arg19: memref<8x8x64xbf16, #tpu.memory_space<vmem>>, %arg20: memref<9x9x128xbf16, #tpu.memory_space<vmem>>) attributes {dimension_semantics = [#tpu.dimension_semantics<parallel>], iteration_bounds = array<i64: 2>, scalar_prefetch = 0 : i64, scratch_operands = 4 : i64, tpu.core_type = #tpu.core_type<tc>, window_params = [{transform_indices = @transform_0, window_bounds = array<i64: 1, 4, 4, 1>}, {pipeline_mode = #tpu.pipeline_mode<synchronous>, transform_indices = @transform_1, window_bounds = array<i64: 4, 32>}, {pipeline_mode = #tpu.pipeline_mode<synchronous>, transform_indices = @transform_2, window_bounds = array<i64: 1, 32>}, {pipeline_mode = #tpu.pipeline_mode<synchronous>, transform_indices = @transform_3, window_bounds = array<i64: 128, 64>}, {pipeline_mode = #tpu.pipeline_mode<synchronous>, transform_indices = @transform_4, window_bounds = array<i64: 1, 64>}, {pipeline_mode = #tpu.pipeline_mode<synchronous>, transform_indices = @transform_5, window_bounds = array<i64: 256, 128>}, {pipeline_mode = #tpu.pipeline_mode<synchronous>, transform_indices = @transform_6, window_bounds = array<i64: 1, 128>}, {pipeline_mode = #tpu.pipeline_mode<synchronous>, transform_indices = @transform_7, window_bounds = array<i64: 512, 64>}, {pipeline_mode = #tpu.pipeline_mode<synchronous>, transform_indices = @transform_8, window_bounds = array<i64: 1, 64>}, {pipeline_mode = #tpu.pipeline_mode<synchronous>, transform_indices = @transform_9, window_bounds = array<i64: 256, 32>}, {pipeline_mode = #tpu.pipeline_mode<synchronous>, transform_indices = @transform_10, window_bounds = array<i64: 1, 32>}, {pipeline_mode = #tpu.pipeline_mode<synchronous>, transform_indices = @transform_11, window_bounds = array<i64: 49, 32, 64>}, {pipeline_mode = #tpu.pipeline_mode<synchronous>, transform_indices = @transform_12, window_bounds = array<i64: 1, 64>}, {pipeline_mode = #tpu.pipeline_mode<synchronous>, transform_indices = @transform_13, window_bounds = array<i64: 64, 10>}, {pipeline_mode = #tpu.pipeline_mode<synchronous>, transform_indices = @transform_14, window_bounds = array<i64: 1, 10>}, {transform_indices = @transform_15, window_bounds = array<i64: 1, 1, 10>}]} {
    %c0 = arith.constant 0 : index
    %c0_0 = arith.constant 0 : index
    %c0_1 = arith.constant 0 : index
    %c0_2 = arith.constant 0 : index
    %0 = vector.load %arg1[%c0, %c0_0, %c0_1, %c0_2] : memref<1x4x4x1xf32, #tpu.memory_space<vmem>>, vector<1x4x4x1xf32>
    %1 = vector.shape_cast %0 : vector<1x4x4x1xf32> to vector<4x4x1xf32>
    %cst = arith.constant 0.000000e+00 : f32
    %2 = vector.broadcast %cst : f32 to vector<1x6x1xf32>
    %c0_3 = arith.constant 0 : index
    %c0_4 = arith.constant 0 : index
    %c0_5 = arith.constant 0 : index
    %3 = vector.load %arg17[%c0_3, %c0_4, %c0_5] : memref<6x6x1xf32, #tpu.memory_space<vmem>>, vector<1x6x1xf32>
    tpu.vector_store %arg17[%c0_3, %c0_4, %c0_5], %2 {strides = array<i32>} : memref<6x6x1xf32, #tpu.memory_space<vmem>>, vector<1x6x1xf32>,
    %cst_6 = arith.constant 0.000000e+00 : f32
    %4 = vector.broadcast %cst_6 : f32 to vector<1x6x1xf32>
    %c5 = arith.constant 5 : index
    %c0_7 = arith.constant 0 : index
    %c0_8 = arith.constant 0 : index
    %5 = vector.load %arg17[%c5, %c0_7, %c0_8] : memref<6x6x1xf32, #tpu.memory_space<vmem>>, vector<1x6x1xf32>
    tpu.vector_store %arg17[%c5, %c0_7, %c0_8], %4 {strides = array<i32>} : memref<6x6x1xf32, #tpu.memory_space<vmem>>, vector<1x6x1xf32>,
    %cst_9 = arith.constant 0.000000e+00 : f32
    %6 = vector.broadcast %cst_9 : f32 to vector<6x1x1xf32>
    %c0_10 = arith.constant 0 : index
    %c0_11 = arith.constant 0 : index
    %c0_12 = arith.constant 0 : index
    %7 = vector.load %arg17[%c0_10, %c0_11, %c0_12] : memref<6x6x1xf32, #tpu.memory_space<vmem>>, vector<6x1x1xf32>
    tpu.vector_store %arg17[%c0_10, %c0_11, %c0_12], %6 {strides = array<i32>} : memref<6x6x1xf32, #tpu.memory_space<vmem>>, vector<6x1x1xf32>,
    %cst_13 = arith.constant 0.000000e+00 : f32
    %8 = vector.broadcast %cst_13 : f32 to vector<6x1x1xf32>
    %c0_14 = arith.constant 0 : index
    %c5_15 = arith.constant 5 : index
    %c0_16 = arith.constant 0 : index
    %9 = vector.load %arg17[%c0_14, %c5_15, %c0_16] : memref<6x6x1xf32, #tpu.memory_space<vmem>>, vector<6x1x1xf32>
    tpu.vector_store %arg17[%c0_14, %c5_15, %c0_16], %8 {strides = array<i32>} : memref<6x6x1xf32, #tpu.memory_space<vmem>>, vector<6x1x1xf32>,
    %c1 = arith.constant 1 : index
    %c1_17 = arith.constant 1 : index
    %c0_18 = arith.constant 0 : index
    %10 = vector.load %arg17[%c1, %c1_17, %c0_18] : memref<6x6x1xf32, #tpu.memory_space<vmem>>, vector<4x4x1xf32>
    tpu.vector_store %arg17[%c1, %c1_17, %c0_18], %1 {strides = array<i32>} : memref<6x6x1xf32, #tpu.memory_space<vmem>>, vector<4x4x1xf32>,
    %c0_19 = arith.constant 0 : index
    %c0_20 = arith.constant 0 : index
    %c0_21 = arith.constant 0 : index
    %11 = vector.load %arg17[%c0_19, %c0_20, %c0_21] : memref<6x6x1xf32, #tpu.memory_space<vmem>>, vector<6x6x1xf32>
    %cst_22 = arith.constant 0.000000e+00 : f32
    %12 = vector.broadcast %cst_22 : f32 to vector<5x5x32xf32>
    %13 = vector.extract_strided_slice %11 {offsets = [0, 0, 0], sizes = [5, 5, 1], strides = [1, 1, 1]} : vector<6x6x1xf32> to vector<5x5x1xf32>
    %c0_23 = arith.constant 0 : index
    %c0_24 = arith.constant 0 : index
    %14 = vector.load %arg2[%c0_23, %c0_24] : memref<4x32xf32, #tpu.memory_space<vmem>>, vector<1x32xf32>
    %15 = vector.shape_cast %14 : vector<1x32xf32> to vector<1x1x32xf32>
    %16 = vector.broadcast %13 : vector<5x5x1xf32> to vector<5x5x32xf32>
    %17 = vector.broadcast %15 : vector<1x1x32xf32> to vector<5x5x32xf32>
    %18 = arith.mulf %16, %17 : vector<5x5x32xf32>
    %19 = arith.addf %12, %18 : vector<5x5x32xf32>
    %20 = vector.extract_strided_slice %11 {offsets = [0, 1, 0], sizes = [5, 5, 1], strides = [1, 1, 1]} : vector<6x6x1xf32> to vector<5x5x1xf32>
    %c1_25 = arith.constant 1 : index
    %c0_26 = arith.constant 0 : index
    %21 = vector.load %arg2[%c1_25, %c0_26] : memref<4x32xf32, #tpu.memory_space<vmem>>, vector<1x32xf32>
    %22 = vector.shape_cast %21 : vector<1x32xf32> to vector<1x1x32xf32>
    %23 = vector.broadcast %20 : vector<5x5x1xf32> to vector<5x5x32xf32>
    %24 = vector.broadcast %22 : vector<1x1x32xf32> to vector<5x5x32xf32>
    %25 = arith.mulf %23, %24 : vector<5x5x32xf32>
    %26 = arith.addf %19, %25 : vector<5x5x32xf32>
    %27 = vector.extract_strided_slice %11 {offsets = [1, 0, 0], sizes = [5, 5, 1], strides = [1, 1, 1]} : vector<6x6x1xf32> to vector<5x5x1xf32>
    %c2 = arith.constant 2 : index
    %c0_27 = arith.constant 0 : index
    %28 = vector.load %arg2[%c2, %c0_27] : memref<4x32xf32, #tpu.memory_space<vmem>>, vector<1x32xf32>
    %29 = vector.shape_cast %28 : vector<1x32xf32> to vector<1x1x32xf32>
    %30 = vector.broadcast %27 : vector<5x5x1xf32> to vector<5x5x32xf32>
    %31 = vector.broadcast %29 : vector<1x1x32xf32> to vector<5x5x32xf32>
    %32 = arith.mulf %30, %31 : vector<5x5x32xf32>
    %33 = arith.addf %26, %32 : vector<5x5x32xf32>
    %34 = vector.extract_strided_slice %11 {offsets = [1, 1, 0], sizes = [5, 5, 1], strides = [1, 1, 1]} : vector<6x6x1xf32> to vector<5x5x1xf32>
    %c3 = arith.constant 3 : index
    %c0_28 = arith.constant 0 : index
    %35 = vector.load %arg2[%c3, %c0_28] : memref<4x32xf32, #tpu.memory_space<vmem>>, vector<1x32xf32>
    %36 = vector.shape_cast %35 : vector<1x32xf32> to vector<1x1x32xf32>
    %37 = vector.broadcast %34 : vector<5x5x1xf32> to vector<5x5x32xf32>
    %38 = vector.broadcast %36 : vector<1x1x32xf32> to vector<5x5x32xf32>
    %39 = arith.mulf %37, %38 : vector<5x5x32xf32>
    %40 = arith.addf %33, %39 : vector<5x5x32xf32>
    %c0_29 = arith.constant 0 : index
    %c0_30 = arith.constant 0 : index
    %41 = vector.load %arg3[%c0_29, %c0_30] : memref<1x32xf32, #tpu.memory_space<vmem>>, vector<1x32xf32>
    %42 = vector.shape_cast %41 : vector<1x32xf32> to vector<1x1x32xf32>
    %43 = vector.broadcast %42 : vector<1x1x32xf32> to vector<5x5x32xf32>
    %44 = arith.addf %40, %43 : vector<5x5x32xf32>
    %cst_31 = arith.constant 0.000000e+00 : f32
    %45 = vector.broadcast %cst_31 : f32 to vector<5x5x32xf32>
    %46 = arith.maximumf %44, %45 : vector<5x5x32xf32>
    %cst_32 = arith.constant 0.000000e+00 : bf16
    %47 = vector.broadcast %cst_32 : bf16 to vector<1x7x32xbf16>
    %c0_33 = arith.constant 0 : index
    %c0_34 = arith.constant 0 : index
    %c0_35 = arith.constant 0 : index
    %48 = vector.load %arg18[%c0_33, %c0_34, %c0_35] : memref<7x7x32xbf16, #tpu.memory_space<vmem>>, vector<1x7x32xbf16>
    tpu.vector_store %arg18[%c0_33, %c0_34, %c0_35], %47 {strides = array<i32>} : memref<7x7x32xbf16, #tpu.memory_space<vmem>>, vector<1x7x32xbf16>,
    %cst_36 = arith.constant 0.000000e+00 : bf16
    %49 = vector.broadcast %cst_36 : bf16 to vector<1x7x32xbf16>
    %c6 = arith.constant 6 : index
    %c0_37 = arith.constant 0 : index
    %c0_38 = arith.constant 0 : index
    %50 = vector.load %arg18[%c6, %c0_37, %c0_38] : memref<7x7x32xbf16, #tpu.memory_space<vmem>>, vector<1x7x32xbf16>
    tpu.vector_store %arg18[%c6, %c0_37, %c0_38], %49 {strides = array<i32>} : memref<7x7x32xbf16, #tpu.memory_space<vmem>>, vector<1x7x32xbf16>,
    %cst_39 = arith.constant 0.000000e+00 : bf16
    %51 = vector.broadcast %cst_39 : bf16 to vector<7x1x32xbf16>
    %c0_40 = arith.constant 0 : index
    %c0_41 = arith.constant 0 : index
    %c0_42 = arith.constant 0 : index
    %52 = vector.load %arg18[%c0_40, %c0_41, %c0_42] : memref<7x7x32xbf16, #tpu.memory_space<vmem>>, vector<7x1x32xbf16>
    tpu.vector_store %arg18[%c0_40, %c0_41, %c0_42], %51 {strides = array<i32>} : memref<7x7x32xbf16, #tpu.memory_space<vmem>>, vector<7x1x32xbf16>,
    %cst_43 = arith.constant 0.000000e+00 : bf16
    %53 = vector.broadcast %cst_43 : bf16 to vector<7x1x32xbf16>
    %c0_44 = arith.constant 0 : index
    %c6_45 = arith.constant 6 : index
    %c0_46 = arith.constant 0 : index
    %54 = vector.load %arg18[%c0_44, %c6_45, %c0_46] : memref<7x7x32xbf16, #tpu.memory_space<vmem>>, vector<7x1x32xbf16>
    tpu.vector_store %arg18[%c0_44, %c6_45, %c0_46], %53 {strides = array<i32>} : memref<7x7x32xbf16, #tpu.memory_space<vmem>>, vector<7x1x32xbf16>,
    %55 = arith.truncf %46 : vector<5x5x32xf32> to vector<5x5x32xbf16>
    %c1_47 = arith.constant 1 : index
    %c1_48 = arith.constant 1 : index
    %c0_49 = arith.constant 0 : index
    %56 = vector.load %arg18[%c1_47, %c1_48, %c0_49] : memref<7x7x32xbf16, #tpu.memory_space<vmem>>, vector<5x5x32xbf16>
    tpu.vector_store %arg18[%c1_47, %c1_48, %c0_49], %55 {strides = array<i32>} : memref<7x7x32xbf16, #tpu.memory_space<vmem>>, vector<5x5x32xbf16>,
    %c0_50 = arith.constant 0 : index
    %c0_51 = arith.constant 0 : index
    %c0_52 = arith.constant 0 : index
    %57 = vector.load %arg18[%c0_50, %c0_51, %c0_52] : memref<7x7x32xbf16, #tpu.memory_space<vmem>>, vector<7x7x32xbf16>
    %58 = vector.extract_strided_slice %57 {offsets = [0, 0, 0], sizes = [6, 6, 32], strides = [1, 1, 1]} : vector<7x7x32xbf16> to vector<6x6x32xbf16>
    %59 = vector.extract_strided_slice %57 {offsets = [0, 1, 0], sizes = [6, 6, 32], strides = [1, 1, 1]} : vector<7x7x32xbf16> to vector<6x6x32xbf16>
    %60 = vector.extract_strided_slice %57 {offsets = [1, 0, 0], sizes = [6, 6, 32], strides = [1, 1, 1]} : vector<7x7x32xbf16> to vector<6x6x32xbf16>
    %61 = vector.extract_strided_slice %57 {offsets = [1, 1, 0], sizes = [6, 6, 32], strides = [1, 1, 1]} : vector<7x7x32xbf16> to vector<6x6x32xbf16>
    %62 = tpu.concatenate %58, %59, %60, %61 in 2 : vector<6x6x32xbf16>, vector<6x6x32xbf16>, vector<6x6x32xbf16>, vector<6x6x32xbf16> -> vector<6x6x128xbf16>
    %63 = vector.shape_cast %62 : vector<6x6x128xbf16> to vector<36x128xbf16>
    %c0_53 = arith.constant 0 : index
    %c0_54 = arith.constant 0 : index
    %64 = vector.load %arg4[%c0_53, %c0_54] : memref<128x64xbf16, #tpu.memory_space<vmem>>, vector<128x64xbf16>
    %cst_55 = arith.constant dense<0.000000e+00> : vector<36x64xf32>
    %65 = tpu.matmul %63, %64, %cst_55 {dimension_numbers = #tpu.dot_dimension_numbers<[1], [0], [0], [1], [0, 0, 1, 1], [], []>} : vector<36x128xbf16>, vector<128x64xbf16>, vector<36x64xf32> -> vector<36x64xf32>
    %c0_56 = arith.constant 0 : index
    %c0_57 = arith.constant 0 : index
    %66 = vector.load %arg5[%c0_56, %c0_57] : memref<1x64xf32, #tpu.memory_space<vmem>>, vector<1x64xf32>
    %67 = vector.broadcast %66 : vector<1x64xf32> to vector<36x64xf32>
    %68 = arith.addf %65, %67 : vector<36x64xf32>
    %cst_58 = arith.constant 0.000000e+00 : f32
    %69 = vector.broadcast %cst_58 : f32 to vector<36x64xf32>
    %70 = arith.maximumf %68, %69 : vector<36x64xf32>
    %71 = vector.shape_cast %70 : vector<36x64xf32> to vector<6x6x64xf32>
    %cst_59 = arith.constant 0.000000e+00 : bf16
    %72 = vector.broadcast %cst_59 : bf16 to vector<1x8x64xbf16>
    %c0_60 = arith.constant 0 : index
    %c0_61 = arith.constant 0 : index
    %c0_62 = arith.constant 0 : index
    %73 = vector.load %arg19[%c0_60, %c0_61, %c0_62] : memref<8x8x64xbf16, #tpu.memory_space<vmem>>, vector<1x8x64xbf16>
    tpu.vector_store %arg19[%c0_60, %c0_61, %c0_62], %72 {strides = array<i32>} : memref<8x8x64xbf16, #tpu.memory_space<vmem>>, vector<1x8x64xbf16>,
    %cst_63 = arith.constant 0.000000e+00 : bf16
    %74 = vector.broadcast %cst_63 : bf16 to vector<1x8x64xbf16>
    %c7 = arith.constant 7 : index
    %c0_64 = arith.constant 0 : index
    %c0_65 = arith.constant 0 : index
    %75 = vector.load %arg19[%c7, %c0_64, %c0_65] : memref<8x8x64xbf16, #tpu.memory_space<vmem>>, vector<1x8x64xbf16>
    tpu.vector_store %arg19[%c7, %c0_64, %c0_65], %74 {strides = array<i32>} : memref<8x8x64xbf16, #tpu.memory_space<vmem>>, vector<1x8x64xbf16>,
    %cst_66 = arith.constant 0.000000e+00 : bf16
    %76 = vector.broadcast %cst_66 : bf16 to vector<8x1x64xbf16>
    %c0_67 = arith.constant 0 : index
    %c0_68 = arith.constant 0 : index
    %c0_69 = arith.constant 0 : index
    %77 = vector.load %arg19[%c0_67, %c0_68, %c0_69] : memref<8x8x64xbf16, #tpu.memory_space<vmem>>, vector<8x1x64xbf16>
    tpu.vector_store %arg19[%c0_67, %c0_68, %c0_69], %76 {strides = array<i32>} : memref<8x8x64xbf16, #tpu.memory_space<vmem>>, vector<8x1x64xbf16>,
    %cst_70 = arith.constant 0.000000e+00 : bf16
    %78 = vector.broadcast %cst_70 : bf16 to vector<8x1x64xbf16>
    %c0_71 = arith.constant 0 : index
    %c7_72 = arith.constant 7 : index
    %c0_73 = arith.constant 0 : index
    %79 = vector.load %arg19[%c0_71, %c7_72, %c0_73] : memref<8x8x64xbf16, #tpu.memory_space<vmem>>, vector<8x1x64xbf16>
    tpu.vector_store %arg19[%c0_71, %c7_72, %c0_73], %78 {strides = array<i32>} : memref<8x8x64xbf16, #tpu.memory_space<vmem>>, vector<8x1x64xbf16>,
    %80 = arith.truncf %71 : vector<6x6x64xf32> to vector<6x6x64xbf16>
    %c1_74 = arith.constant 1 : index
    %c1_75 = arith.constant 1 : index
    %c0_76 = arith.constant 0 : index
    %81 = vector.load %arg19[%c1_74, %c1_75, %c0_76] : memref<8x8x64xbf16, #tpu.memory_space<vmem>>, vector<6x6x64xbf16>
    tpu.vector_store %arg19[%c1_74, %c1_75, %c0_76], %80 {strides = array<i32>} : memref<8x8x64xbf16, #tpu.memory_space<vmem>>, vector<6x6x64xbf16>,
    %c0_77 = arith.constant 0 : index
    %c0_78 = arith.constant 0 : index
    %c0_79 = arith.constant 0 : index
    %82 = vector.load %arg19[%c0_77, %c0_78, %c0_79] : memref<8x8x64xbf16, #tpu.memory_space<vmem>>, vector<8x8x64xbf16>
    %83 = vector.extract_strided_slice %82 {offsets = [0, 0, 0], sizes = [7, 7, 64], strides = [1, 1, 1]} : vector<8x8x64xbf16> to vector<7x7x64xbf16>
    %84 = vector.extract_strided_slice %82 {offsets = [0, 1, 0], sizes = [7, 7, 64], strides = [1, 1, 1]} : vector<8x8x64xbf16> to vector<7x7x64xbf16>
    %85 = vector.extract_strided_slice %82 {offsets = [1, 0, 0], sizes = [7, 7, 64], strides = [1, 1, 1]} : vector<8x8x64xbf16> to vector<7x7x64xbf16>
    %86 = vector.extract_strided_slice %82 {offsets = [1, 1, 0], sizes = [7, 7, 64], strides = [1, 1, 1]} : vector<8x8x64xbf16> to vector<7x7x64xbf16>
    %87 = tpu.concatenate %83, %84, %85, %86 in 2 : vector<7x7x64xbf16>, vector<7x7x64xbf16>, vector<7x7x64xbf16>, vector<7x7x64xbf16> -> vector<7x7x256xbf16>
    %88 = vector.shape_cast %87 : vector<7x7x256xbf16> to vector<49x256xbf16>
    %c0_80 = arith.constant 0 : index
    %c0_81 = arith.constant 0 : index
    %89 = vector.load %arg6[%c0_80, %c0_81] : memref<256x128xbf16, #tpu.memory_space<vmem>>, vector<256x128xbf16>
    %cst_82 = arith.constant dense<0.000000e+00> : vector<49x128xf32>
    %90 = tpu.matmul %88, %89, %cst_82 {dimension_numbers = #tpu.dot_dimension_numbers<[1], [0], [0], [1], [0, 0, 1, 1], [], []>} : vector<49x256xbf16>, vector<256x128xbf16>, vector<49x128xf32> -> vector<49x128xf32>
    %c0_83 = arith.constant 0 : index
    %c0_84 = arith.constant 0 : index
    %91 = vector.load %arg7[%c0_83, %c0_84] : memref<1x128xf32, #tpu.memory_space<vmem>>, vector<1x128xf32>
    %92 = vector.broadcast %91 : vector<1x128xf32> to vector<49x128xf32>
    %93 = arith.addf %90, %92 : vector<49x128xf32>
    %cst_85 = arith.constant 0.000000e+00 : f32
    %94 = vector.broadcast %cst_85 : f32 to vector<49x128xf32>
    %95 = arith.maximumf %93, %94 : vector<49x128xf32>
    %96 = vector.shape_cast %95 : vector<49x128xf32> to vector<7x7x128xf32>
    %cst_86 = arith.constant 0.000000e+00 : bf16
    %97 = vector.broadcast %cst_86 : bf16 to vector<1x9x128xbf16>
    %c0_87 = arith.constant 0 : index
    %c0_88 = arith.constant 0 : index
    %c0_89 = arith.constant 0 : index
    %98 = vector.load %arg20[%c0_87, %c0_88, %c0_89] : memref<9x9x128xbf16, #tpu.memory_space<vmem>>, vector<1x9x128xbf16>
    tpu.vector_store %arg20[%c0_87, %c0_88, %c0_89], %97 {strides = array<i32>} : memref<9x9x128xbf16, #tpu.memory_space<vmem>>, vector<1x9x128xbf16>,
    %cst_90 = arith.constant 0.000000e+00 : bf16
    %99 = vector.broadcast %cst_90 : bf16 to vector<1x9x128xbf16>
    %c8 = arith.constant 8 : index
    %c0_91 = arith.constant 0 : index
    %c0_92 = arith.constant 0 : index
    %100 = vector.load %arg20[%c8, %c0_91, %c0_92] : memref<9x9x128xbf16, #tpu.memory_space<vmem>>, vector<1x9x128xbf16>
    tpu.vector_store %arg20[%c8, %c0_91, %c0_92], %99 {strides = array<i32>} : memref<9x9x128xbf16, #tpu.memory_space<vmem>>, vector<1x9x128xbf16>,
    %cst_93 = arith.constant 0.000000e+00 : bf16
    %101 = vector.broadcast %cst_93 : bf16 to vector<9x1x128xbf16>
    %c0_94 = arith.constant 0 : index
    %c0_95 = arith.constant 0 : index
    %c0_96 = arith.constant 0 : index
    %102 = vector.load %arg20[%c0_94, %c0_95, %c0_96] : memref<9x9x128xbf16, #tpu.memory_space<vmem>>, vector<9x1x128xbf16>
    tpu.vector_store %arg20[%c0_94, %c0_95, %c0_96], %101 {strides = array<i32>} : memref<9x9x128xbf16, #tpu.memory_space<vmem>>, vector<9x1x128xbf16>,
    %cst_97 = arith.constant 0.000000e+00 : bf16
    %103 = vector.broadcast %cst_97 : bf16 to vector<9x1x128xbf16>
    %c0_98 = arith.constant 0 : index
    %c8_99 = arith.constant 8 : index
    %c0_100 = arith.constant 0 : index
    %104 = vector.load %arg20[%c0_98, %c8_99, %c0_100] : memref<9x9x128xbf16, #tpu.memory_space<vmem>>, vector<9x1x128xbf16>
    tpu.vector_store %arg20[%c0_98, %c8_99, %c0_100], %103 {strides = array<i32>} : memref<9x9x128xbf16, #tpu.memory_space<vmem>>, vector<9x1x128xbf16>,
    %105 = arith.truncf %96 : vector<7x7x128xf32> to vector<7x7x128xbf16>
    %c1_101 = arith.constant 1 : index
    %c1_102 = arith.constant 1 : index
    %c0_103 = arith.constant 0 : index
    %106 = vector.load %arg20[%c1_101, %c1_102, %c0_103] : memref<9x9x128xbf16, #tpu.memory_space<vmem>>, vector<7x7x128xbf16>
    tpu.vector_store %arg20[%c1_101, %c1_102, %c0_103], %105 {strides = array<i32>} : memref<9x9x128xbf16, #tpu.memory_space<vmem>>, vector<7x7x128xbf16>,
    %c0_104 = arith.constant 0 : index
    %c0_105 = arith.constant 0 : index
    %c0_106 = arith.constant 0 : index
    %107 = vector.load %arg20[%c0_104, %c0_105, %c0_106] : memref<9x9x128xbf16, #tpu.memory_space<vmem>>, vector<9x9x128xbf16>
    %108 = vector.extract_strided_slice %107 {offsets = [0, 0, 0], sizes = [8, 8, 128], strides = [1, 1, 1]} : vector<9x9x128xbf16> to vector<8x8x128xbf16>
    %109 = vector.extract_strided_slice %107 {offsets = [0, 1, 0], sizes = [8, 8, 128], strides = [1, 1, 1]} : vector<9x9x128xbf16> to vector<8x8x128xbf16>
    %110 = vector.extract_strided_slice %107 {offsets = [1, 0, 0], sizes = [8, 8, 128], strides = [1, 1, 1]} : vector<9x9x128xbf16> to vector<8x8x128xbf16>
    %111 = vector.extract_strided_slice %107 {offsets = [1, 1, 0], sizes = [8, 8, 128], strides = [1, 1, 1]} : vector<9x9x128xbf16> to vector<8x8x128xbf16>
    %112 = tpu.concatenate %108, %109, %110, %111 in 2 : vector<8x8x128xbf16>, vector<8x8x128xbf16>, vector<8x8x128xbf16>, vector<8x8x128xbf16> -> vector<8x8x512xbf16>
    %113 = vector.shape_cast %112 : vector<8x8x512xbf16> to vector<64x512xbf16>
    %c0_107 = arith.constant 0 : index
    %c0_108 = arith.constant 0 : index
    %114 = vector.load %arg8[%c0_107, %c0_108] : memref<512x64xbf16, #tpu.memory_space<vmem>>, vector<512x64xbf16>
    %cst_109 = arith.constant dense<0.000000e+00> : vector<64x64xf32>
    %115 = tpu.matmul %113, %114, %cst_109 {dimension_numbers = #tpu.dot_dimension_numbers<[1], [0], [0], [1], [0, 0, 1, 1], [], []>} : vector<64x512xbf16>, vector<512x64xbf16>, vector<64x64xf32> -> vector<64x64xf32>
    %c0_110 = arith.constant 0 : index
    %c0_111 = arith.constant 0 : index
    %116 = vector.load %arg9[%c0_110, %c0_111] : memref<1x64xf32, #tpu.memory_space<vmem>>, vector<1x64xf32>
    %117 = vector.broadcast %116 : vector<1x64xf32> to vector<64x64xf32>
    %118 = arith.addf %115, %117 : vector<64x64xf32>
    %cst_112 = arith.constant 0.000000e+00 : f32
    %119 = vector.broadcast %cst_112 : f32 to vector<64x64xf32>
    %120 = arith.maximumf %118, %119 : vector<64x64xf32>
    %121 = vector.shape_cast %120 : vector<64x64xf32> to vector<8x8x64xf32>
    %122 = arith.truncf %121 : vector<8x8x64xf32> to vector<8x8x64xbf16>
    %123 = vector.extract_strided_slice %122 {offsets = [0, 0, 0], sizes = [7, 7, 64], strides = [1, 1, 1]} : vector<8x8x64xbf16> to vector<7x7x64xbf16>
    %124 = vector.extract_strided_slice %122 {offsets = [0, 1, 0], sizes = [7, 7, 64], strides = [1, 1, 1]} : vector<8x8x64xbf16> to vector<7x7x64xbf16>
    %125 = vector.extract_strided_slice %122 {offsets = [1, 0, 0], sizes = [7, 7, 64], strides = [1, 1, 1]} : vector<8x8x64xbf16> to vector<7x7x64xbf16>
    %126 = vector.extract_strided_slice %122 {offsets = [1, 1, 0], sizes = [7, 7, 64], strides = [1, 1, 1]} : vector<8x8x64xbf16> to vector<7x7x64xbf16>
    %127 = tpu.concatenate %123, %124, %125, %126 in 2 : vector<7x7x64xbf16>, vector<7x7x64xbf16>, vector<7x7x64xbf16>, vector<7x7x64xbf16> -> vector<7x7x256xbf16>
    %128 = vector.shape_cast %127 : vector<7x7x256xbf16> to vector<49x256xbf16>
    %c0_113 = arith.constant 0 : index
    %c0_114 = arith.constant 0 : index
    %129 = vector.load %arg10[%c0_113, %c0_114] : memref<256x32xbf16, #tpu.memory_space<vmem>>, vector<256x32xbf16>
    %cst_115 = arith.constant dense<0.000000e+00> : vector<49x32xf32>
    %130 = tpu.matmul %128, %129, %cst_115 {dimension_numbers = #tpu.dot_dimension_numbers<[1], [0], [0], [1], [0, 0, 1, 1], [], []>} : vector<49x256xbf16>, vector<256x32xbf16>, vector<49x32xf32> -> vector<49x32xf32>
    %c0_116 = arith.constant 0 : index
    %c0_117 = arith.constant 0 : index
    %131 = vector.load %arg11[%c0_116, %c0_117] : memref<1x32xf32, #tpu.memory_space<vmem>>, vector<1x32xf32>
    %132 = vector.broadcast %131 : vector<1x32xf32> to vector<49x32xf32>
    %133 = arith.addf %130, %132 : vector<49x32xf32>
    %cst_118 = arith.constant 0.000000e+00 : f32
    %134 = vector.broadcast %cst_118 : f32 to vector<49x32xf32>
    %135 = arith.maximumf %133, %134 : vector<49x32xf32>
    %cst_119 = arith.constant 0.000000e+00 : f32
    %136 = vector.broadcast %cst_119 : f32 to vector<1x64xf32>
    %137 = vector.extract_strided_slice %135 {offsets = [0, 0], sizes = [1, 32], strides = [1, 1]} : vector<49x32xf32> to vector<1x32xf32>
    %138 = arith.truncf %137 : vector<1x32xf32> to vector<1x32xbf16>
    %c0_120 = arith.constant 0 : index
    %c0_121 = arith.constant 0 : index
    %c0_122 = arith.constant 0 : index
    %139 = vector.load %arg12[%c0_120, %c0_121, %c0_122] : memref<49x32x64xbf16, #tpu.memory_space<vmem>>, vector<1x32x64xbf16>
    %140 = vector.shape_cast %139 : vector<1x32x64xbf16> to vector<32x64xbf16>
    %cst_123 = arith.constant dense<0.000000e+00> : vector<1x64xf32>
    %141 = tpu.matmul %138, %140, %cst_123 {dimension_numbers = #tpu.dot_dimension_numbers<[1], [0], [0], [1], [0, 0, 1, 1], [], []>} : vector<1x32xbf16>, vector<32x64xbf16>, vector<1x64xf32> -> vector<1x64xf32>
    %142 = arith.addf %136, %141 : vector<1x64xf32>
    %143 = vector.extract_strided_slice %135 {offsets = [1, 0], sizes = [1, 32], strides = [1, 1]} : vector<49x32xf32> to vector<1x32xf32>
    %144 = arith.truncf %143 : vector<1x32xf32> to vector<1x32xbf16>
    %c1_124 = arith.constant 1 : index
    %c0_125 = arith.constant 0 : index
    %c0_126 = arith.constant 0 : index
    %145 = vector.load %arg12[%c1_124, %c0_125, %c0_126] : memref<49x32x64xbf16, #tpu.memory_space<vmem>>, vector<1x32x64xbf16>
    %146 = vector.shape_cast %145 : vector<1x32x64xbf16> to vector<32x64xbf16>
    %cst_127 = arith.constant dense<0.000000e+00> : vector<1x64xf32>
    %147 = tpu.matmul %144, %146, %cst_127 {dimension_numbers = #tpu.dot_dimension_numbers<[1], [0], [0], [1], [0, 0, 1, 1], [], []>} : vector<1x32xbf16>, vector<32x64xbf16>, vector<1x64xf32> -> vector<1x64xf32>
    %148 = arith.addf %142, %147 : vector<1x64xf32>
    %149 = vector.extract_strided_slice %135 {offsets = [2, 0], sizes = [1, 32], strides = [1, 1]} : vector<49x32xf32> to vector<1x32xf32>
    %150 = arith.truncf %149 : vector<1x32xf32> to vector<1x32xbf16>
    %c2_128 = arith.constant 2 : index
    %c0_129 = arith.constant 0 : index
    %c0_130 = arith.constant 0 : index
    %151 = vector.load %arg12[%c2_128, %c0_129, %c0_130] : memref<49x32x64xbf16, #tpu.memory_space<vmem>>, vector<1x32x64xbf16>
    %152 = vector.shape_cast %151 : vector<1x32x64xbf16> to vector<32x64xbf16>
    %cst_131 = arith.constant dense<0.000000e+00> : vector<1x64xf32>
    %153 = tpu.matmul %150, %152, %cst_131 {dimension_numbers = #tpu.dot_dimension_numbers<[1], [0], [0], [1], [0, 0, 1, 1], [], []>} : vector<1x32xbf16>, vector<32x64xbf16>, vector<1x64xf32> -> vector<1x64xf32>
    %154 = arith.addf %148, %153 : vector<1x64xf32>
    %155 = vector.extract_strided_slice %135 {offsets = [3, 0], sizes = [1, 32], strides = [1, 1]} : vector<49x32xf32> to vector<1x32xf32>
    %156 = arith.truncf %155 : vector<1x32xf32> to vector<1x32xbf16>
    %c3_132 = arith.constant 3 : index
    %c0_133 = arith.constant 0 : index
    %c0_134 = arith.constant 0 : index
    %157 = vector.load %arg12[%c3_132, %c0_133, %c0_134] : memref<49x32x64xbf16, #tpu.memory_space<vmem>>, vector<1x32x64xbf16>
    %158 = vector.shape_cast %157 : vector<1x32x64xbf16> to vector<32x64xbf16>
    %cst_135 = arith.constant dense<0.000000e+00> : vector<1x64xf32>
    %159 = tpu.matmul %156, %158, %cst_135 {dimension_numbers = #tpu.dot_dimension_numbers<[1], [0], [0], [1], [0, 0, 1, 1], [], []>} : vector<1x32xbf16>, vector<32x64xbf16>, vector<1x64xf32> -> vector<1x64xf32>
    %160 = arith.addf %154, %159 : vector<1x64xf32>
    %161 = vector.extract_strided_slice %135 {offsets = [4, 0], sizes = [1, 32], strides = [1, 1]} : vector<49x32xf32> to vector<1x32xf32>
    %162 = arith.truncf %161 : vector<1x32xf32> to vector<1x32xbf16>
    %c4 = arith.constant 4 : index
    %c0_136 = arith.constant 0 : index
    %c0_137 = arith.constant 0 : index
    %163 = vector.load %arg12[%c4, %c0_136, %c0_137] : memref<49x32x64xbf16, #tpu.memory_space<vmem>>, vector<1x32x64xbf16>
    %164 = vector.shape_cast %163 : vector<1x32x64xbf16> to vector<32x64xbf16>
    %cst_138 = arith.constant dense<0.000000e+00> : vector<1x64xf32>
    %165 = tpu.matmul %162, %164, %cst_138 {dimension_numbers = #tpu.dot_dimension_numbers<[1], [0], [0], [1], [0, 0, 1, 1], [], []>} : vector<1x32xbf16>, vector<32x64xbf16>, vector<1x64xf32> -> vector<1x64xf32>
    %166 = arith.addf %160, %165 : vector<1x64xf32>
    %167 = vector.extract_strided_slice %135 {offsets = [5, 0], sizes = [1, 32], strides = [1, 1]} : vector<49x32xf32> to vector<1x32xf32>
    %168 = arith.truncf %167 : vector<1x32xf32> to vector<1x32xbf16>
    %c5_139 = arith.constant 5 : index
    %c0_140 = arith.constant 0 : index
    %c0_141 = arith.constant 0 : index
    %169 = vector.load %arg12[%c5_139, %c0_140, %c0_141] : memref<49x32x64xbf16, #tpu.memory_space<vmem>>, vector<1x32x64xbf16>
    %170 = vector.shape_cast %169 : vector<1x32x64xbf16> to vector<32x64xbf16>
    %cst_142 = arith.constant dense<0.000000e+00> : vector<1x64xf32>
    %171 = tpu.matmul %168, %170, %cst_142 {dimension_numbers = #tpu.dot_dimension_numbers<[1], [0], [0], [1], [0, 0, 1, 1], [], []>} : vector<1x32xbf16>, vector<32x64xbf16>, vector<1x64xf32> -> vector<1x64xf32>
    %172 = arith.addf %166, %171 : vector<1x64xf32>
    %173 = vector.extract_strided_slice %135 {offsets = [6, 0], sizes = [1, 32], strides = [1, 1]} : vector<49x32xf32> to vector<1x32xf32>
    %174 = arith.truncf %173 : vector<1x32xf32> to vector<1x32xbf16>
    %c6_143 = arith.constant 6 : index
    %c0_144 = arith.constant 0 : index
    %c0_145 = arith.constant 0 : index
    %175 = vector.load %arg12[%c6_143, %c0_144, %c0_145] : memref<49x32x64xbf16, #tpu.memory_space<vmem>>, vector<1x32x64xbf16>
    %176 = vector.shape_cast %175 : vector<1x32x64xbf16> to vector<32x64xbf16>
    %cst_146 = arith.constant dense<0.000000e+00> : vector<1x64xf32>
    %177 = tpu.matmul %174, %176, %cst_146 {dimension_numbers = #tpu.dot_dimension_numbers<[1], [0], [0], [1], [0, 0, 1, 1], [], []>} : vector<1x32xbf16>, vector<32x64xbf16>, vector<1x64xf32> -> vector<1x64xf32>
    %178 = arith.addf %172, %177 : vector<1x64xf32>
    %179 = vector.extract_strided_slice %135 {offsets = [7, 0], sizes = [1, 32], strides = [1, 1]} : vector<49x32xf32> to vector<1x32xf32>
    %180 = arith.truncf %179 : vector<1x32xf32> to vector<1x32xbf16>
    %c7_147 = arith.constant 7 : index
    %c0_148 = arith.constant 0 : index
    %c0_149 = arith.constant 0 : index
    %181 = vector.load %arg12[%c7_147, %c0_148, %c0_149] : memref<49x32x64xbf16, #tpu.memory_space<vmem>>, vector<1x32x64xbf16>
    %182 = vector.shape_cast %181 : vector<1x32x64xbf16> to vector<32x64xbf16>
    %cst_150 = arith.constant dense<0.000000e+00> : vector<1x64xf32>
    %183 = tpu.matmul %180, %182, %cst_150 {dimension_numbers = #tpu.dot_dimension_numbers<[1], [0], [0], [1], [0, 0, 1, 1], [], []>} : vector<1x32xbf16>, vector<32x64xbf16>, vector<1x64xf32> -> vector<1x64xf32>
    %184 = arith.addf %178, %183 : vector<1x64xf32>
    %185 = vector.extract_strided_slice %135 {offsets = [8, 0], sizes = [1, 32], strides = [1, 1]} : vector<49x32xf32> to vector<1x32xf32>
    %186 = arith.truncf %185 : vector<1x32xf32> to vector<1x32xbf16>
    %c8_151 = arith.constant 8 : index
    %c0_152 = arith.constant 0 : index
    %c0_153 = arith.constant 0 : index
    %187 = vector.load %arg12[%c8_151, %c0_152, %c0_153] : memref<49x32x64xbf16, #tpu.memory_space<vmem>>, vector<1x32x64xbf16>
    %188 = vector.shape_cast %187 : vector<1x32x64xbf16> to vector<32x64xbf16>
    %cst_154 = arith.constant dense<0.000000e+00> : vector<1x64xf32>
    %189 = tpu.matmul %186, %188, %cst_154 {dimension_numbers = #tpu.dot_dimension_numbers<[1], [0], [0], [1], [0, 0, 1, 1], [], []>} : vector<1x32xbf16>, vector<32x64xbf16>, vector<1x64xf32> -> vector<1x64xf32>
    %190 = arith.addf %184, %189 : vector<1x64xf32>
    %191 = vector.extract_strided_slice %135 {offsets = [9, 0], sizes = [1, 32], strides = [1, 1]} : vector<49x32xf32> to vector<1x32xf32>
    %192 = arith.truncf %191 : vector<1x32xf32> to vector<1x32xbf16>
    %c9 = arith.constant 9 : index
    %c0_155 = arith.constant 0 : index
    %c0_156 = arith.constant 0 : index
    %193 = vector.load %arg12[%c9, %c0_155, %c0_156] : memref<49x32x64xbf16, #tpu.memory_space<vmem>>, vector<1x32x64xbf16>
    %194 = vector.shape_cast %193 : vector<1x32x64xbf16> to vector<32x64xbf16>
    %cst_157 = arith.constant dense<0.000000e+00> : vector<1x64xf32>
    %195 = tpu.matmul %192, %194, %cst_157 {dimension_numbers = #tpu.dot_dimension_numbers<[1], [0], [0], [1], [0, 0, 1, 1], [], []>} : vector<1x32xbf16>, vector<32x64xbf16>, vector<1x64xf32> -> vector<1x64xf32>
    %196 = arith.addf %190, %195 : vector<1x64xf32>
    %197 = vector.extract_strided_slice %135 {offsets = [10, 0], sizes = [1, 32], strides = [1, 1]} : vector<49x32xf32> to vector<1x32xf32>
    %198 = arith.truncf %197 : vector<1x32xf32> to vector<1x32xbf16>
    %c10 = arith.constant 10 : index
    %c0_158 = arith.constant 0 : index
    %c0_159 = arith.constant 0 : index
    %199 = vector.load %arg12[%c10, %c0_158, %c0_159] : memref<49x32x64xbf16, #tpu.memory_space<vmem>>, vector<1x32x64xbf16>
    %200 = vector.shape_cast %199 : vector<1x32x64xbf16> to vector<32x64xbf16>
    %cst_160 = arith.constant dense<0.000000e+00> : vector<1x64xf32>
    %201 = tpu.matmul %198, %200, %cst_160 {dimension_numbers = #tpu.dot_dimension_numbers<[1], [0], [0], [1], [0, 0, 1, 1], [], []>} : vector<1x32xbf16>, vector<32x64xbf16>, vector<1x64xf32> -> vector<1x64xf32>
    %202 = arith.addf %196, %201 : vector<1x64xf32>
    %203 = vector.extract_strided_slice %135 {offsets = [11, 0], sizes = [1, 32], strides = [1, 1]} : vector<49x32xf32> to vector<1x32xf32>
    %204 = arith.truncf %203 : vector<1x32xf32> to vector<1x32xbf16>
    %c11 = arith.constant 11 : index
    %c0_161 = arith.constant 0 : index
    %c0_162 = arith.constant 0 : index
    %205 = vector.load %arg12[%c11, %c0_161, %c0_162] : memref<49x32x64xbf16, #tpu.memory_space<vmem>>, vector<1x32x64xbf16>
    %206 = vector.shape_cast %205 : vector<1x32x64xbf16> to vector<32x64xbf16>
    %cst_163 = arith.constant dense<0.000000e+00> : vector<1x64xf32>
    %207 = tpu.matmul %204, %206, %cst_163 {dimension_numbers = #tpu.dot_dimension_numbers<[1], [0], [0], [1], [0, 0, 1, 1], [], []>} : vector<1x32xbf16>, vector<32x64xbf16>, vector<1x64xf32> -> vector<1x64xf32>
    %208 = arith.addf %202, %207 : vector<1x64xf32>
    %209 = vector.extract_strided_slice %135 {offsets = [12, 0], sizes = [1, 32], strides = [1, 1]} : vector<49x32xf32> to vector<1x32xf32>
    %210 = arith.truncf %209 : vector<1x32xf32> to vector<1x32xbf16>
    %c12 = arith.constant 12 : index
    %c0_164 = arith.constant 0 : index
    %c0_165 = arith.constant 0 : index
    %211 = vector.load %arg12[%c12, %c0_164, %c0_165] : memref<49x32x64xbf16, #tpu.memory_space<vmem>>, vector<1x32x64xbf16>
    %212 = vector.shape_cast %211 : vector<1x32x64xbf16> to vector<32x64xbf16>
    %cst_166 = arith.constant dense<0.000000e+00> : vector<1x64xf32>
    %213 = tpu.matmul %210, %212, %cst_166 {dimension_numbers = #tpu.dot_dimension_numbers<[1], [0], [0], [1], [0, 0, 1, 1], [], []>} : vector<1x32xbf16>, vector<32x64xbf16>, vector<1x64xf32> -> vector<1x64xf32>
    %214 = arith.addf %208, %213 : vector<1x64xf32>
    %215 = vector.extract_strided_slice %135 {offsets = [13, 0], sizes = [1, 32], strides = [1, 1]} : vector<49x32xf32> to vector<1x32xf32>
    %216 = arith.truncf %215 : vector<1x32xf32> to vector<1x32xbf16>
    %c13 = arith.constant 13 : index
    %c0_167 = arith.constant 0 : index
    %c0_168 = arith.constant 0 : index
    %217 = vector.load %arg12[%c13, %c0_167, %c0_168] : memref<49x32x64xbf16, #tpu.memory_space<vmem>>, vector<1x32x64xbf16>
    %218 = vector.shape_cast %217 : vector<1x32x64xbf16> to vector<32x64xbf16>
    %cst_169 = arith.constant dense<0.000000e+00> : vector<1x64xf32>
    %219 = tpu.matmul %216, %218, %cst_169 {dimension_numbers = #tpu.dot_dimension_numbers<[1], [0], [0], [1], [0, 0, 1, 1], [], []>} : vector<1x32xbf16>, vector<32x64xbf16>, vector<1x64xf32> -> vector<1x64xf32>
    %220 = arith.addf %214, %219 : vector<1x64xf32>
    %221 = vector.extract_strided_slice %135 {offsets = [14, 0], sizes = [1, 32], strides = [1, 1]} : vector<49x32xf32> to vector<1x32xf32>
    %222 = arith.truncf %221 : vector<1x32xf32> to vector<1x32xbf16>
    %c14 = arith.constant 14 : index
    %c0_170 = arith.constant 0 : index
    %c0_171 = arith.constant 0 : index
    %223 = vector.load %arg12[%c14, %c0_170, %c0_171] : memref<49x32x64xbf16, #tpu.memory_space<vmem>>, vector<1x32x64xbf16>
    %224 = vector.shape_cast %223 : vector<1x32x64xbf16> to vector<32x64xbf16>
    %cst_172 = arith.constant dense<0.000000e+00> : vector<1x64xf32>
    %225 = tpu.matmul %222, %224, %cst_172 {dimension_numbers = #tpu.dot_dimension_numbers<[1], [0], [0], [1], [0, 0, 1, 1], [], []>} : vector<1x32xbf16>, vector<32x64xbf16>, vector<1x64xf32> -> vector<1x64xf32>
    %226 = arith.addf %220, %225 : vector<1x64xf32>
    %227 = vector.extract_strided_slice %135 {offsets = [15, 0], sizes = [1, 32], strides = [1, 1]} : vector<49x32xf32> to vector<1x32xf32>
    %228 = arith.truncf %227 : vector<1x32xf32> to vector<1x32xbf16>
    %c15 = arith.constant 15 : index
    %c0_173 = arith.constant 0 : index
    %c0_174 = arith.constant 0 : index
    %229 = vector.load %arg12[%c15, %c0_173, %c0_174] : memref<49x32x64xbf16, #tpu.memory_space<vmem>>, vector<1x32x64xbf16>
    %230 = vector.shape_cast %229 : vector<1x32x64xbf16> to vector<32x64xbf16>
    %cst_175 = arith.constant dense<0.000000e+00> : vector<1x64xf32>
    %231 = tpu.matmul %228, %230, %cst_175 {dimension_numbers = #tpu.dot_dimension_numbers<[1], [0], [0], [1], [0, 0, 1, 1], [], []>} : vector<1x32xbf16>, vector<32x64xbf16>, vector<1x64xf32> -> vector<1x64xf32>
    %232 = arith.addf %226, %231 : vector<1x64xf32>
    %233 = vector.extract_strided_slice %135 {offsets = [16, 0], sizes = [1, 32], strides = [1, 1]} : vector<49x32xf32> to vector<1x32xf32>
    %234 = arith.truncf %233 : vector<1x32xf32> to vector<1x32xbf16>
    %c16 = arith.constant 16 : index
    %c0_176 = arith.constant 0 : index
    %c0_177 = arith.constant 0 : index
    %235 = vector.load %arg12[%c16, %c0_176, %c0_177] : memref<49x32x64xbf16, #tpu.memory_space<vmem>>, vector<1x32x64xbf16>
    %236 = vector.shape_cast %235 : vector<1x32x64xbf16> to vector<32x64xbf16>
    %cst_178 = arith.constant dense<0.000000e+00> : vector<1x64xf32>
    %237 = tpu.matmul %234, %236, %cst_178 {dimension_numbers = #tpu.dot_dimension_numbers<[1], [0], [0], [1], [0, 0, 1, 1], [], []>} : vector<1x32xbf16>, vector<32x64xbf16>, vector<1x64xf32> -> vector<1x64xf32>
    %238 = arith.addf %232, %237 : vector<1x64xf32>
    %239 = vector.extract_strided_slice %135 {offsets = [17, 0], sizes = [1, 32], strides = [1, 1]} : vector<49x32xf32> to vector<1x32xf32>
    %240 = arith.truncf %239 : vector<1x32xf32> to vector<1x32xbf16>
    %c17 = arith.constant 17 : index
    %c0_179 = arith.constant 0 : index
    %c0_180 = arith.constant 0 : index
    %241 = vector.load %arg12[%c17, %c0_179, %c0_180] : memref<49x32x64xbf16, #tpu.memory_space<vmem>>, vector<1x32x64xbf16>
    %242 = vector.shape_cast %241 : vector<1x32x64xbf16> to vector<32x64xbf16>
    %cst_181 = arith.constant dense<0.000000e+00> : vector<1x64xf32>
    %243 = tpu.matmul %240, %242, %cst_181 {dimension_numbers = #tpu.dot_dimension_numbers<[1], [0], [0], [1], [0, 0, 1, 1], [], []>} : vector<1x32xbf16>, vector<32x64xbf16>, vector<1x64xf32> -> vector<1x64xf32>
    %244 = arith.addf %238, %243 : vector<1x64xf32>
    %245 = vector.extract_strided_slice %135 {offsets = [18, 0], sizes = [1, 32], strides = [1, 1]} : vector<49x32xf32> to vector<1x32xf32>
    %246 = arith.truncf %245 : vector<1x32xf32> to vector<1x32xbf16>
    %c18 = arith.constant 18 : index
    %c0_182 = arith.constant 0 : index
    %c0_183 = arith.constant 0 : index
    %247 = vector.load %arg12[%c18, %c0_182, %c0_183] : memref<49x32x64xbf16, #tpu.memory_space<vmem>>, vector<1x32x64xbf16>
    %248 = vector.shape_cast %247 : vector<1x32x64xbf16> to vector<32x64xbf16>
    %cst_184 = arith.constant dense<0.000000e+00> : vector<1x64xf32>
    %249 = tpu.matmul %246, %248, %cst_184 {dimension_numbers = #tpu.dot_dimension_numbers<[1], [0], [0], [1], [0, 0, 1, 1], [], []>} : vector<1x32xbf16>, vector<32x64xbf16>, vector<1x64xf32> -> vector<1x64xf32>
    %250 = arith.addf %244, %249 : vector<1x64xf32>
    %251 = vector.extract_strided_slice %135 {offsets = [19, 0], sizes = [1, 32], strides = [1, 1]} : vector<49x32xf32> to vector<1x32xf32>
    %252 = arith.truncf %251 : vector<1x32xf32> to vector<1x32xbf16>
    %c19 = arith.constant 19 : index
    %c0_185 = arith.constant 0 : index
    %c0_186 = arith.constant 0 : index
    %253 = vector.load %arg12[%c19, %c0_185, %c0_186] : memref<49x32x64xbf16, #tpu.memory_space<vmem>>, vector<1x32x64xbf16>
    %254 = vector.shape_cast %253 : vector<1x32x64xbf16> to vector<32x64xbf16>
    %cst_187 = arith.constant dense<0.000000e+00> : vector<1x64xf32>
    %255 = tpu.matmul %252, %254, %cst_187 {dimension_numbers = #tpu.dot_dimension_numbers<[1], [0], [0], [1], [0, 0, 1, 1], [], []>} : vector<1x32xbf16>, vector<32x64xbf16>, vector<1x64xf32> -> vector<1x64xf32>
    %256 = arith.addf %250, %255 : vector<1x64xf32>
    %257 = vector.extract_strided_slice %135 {offsets = [20, 0], sizes = [1, 32], strides = [1, 1]} : vector<49x32xf32> to vector<1x32xf32>
    %258 = arith.truncf %257 : vector<1x32xf32> to vector<1x32xbf16>
    %c20 = arith.constant 20 : index
    %c0_188 = arith.constant 0 : index
    %c0_189 = arith.constant 0 : index
    %259 = vector.load %arg12[%c20, %c0_188, %c0_189] : memref<49x32x64xbf16, #tpu.memory_space<vmem>>, vector<1x32x64xbf16>
    %260 = vector.shape_cast %259 : vector<1x32x64xbf16> to vector<32x64xbf16>
    %cst_190 = arith.constant dense<0.000000e+00> : vector<1x64xf32>
    %261 = tpu.matmul %258, %260, %cst_190 {dimension_numbers = #tpu.dot_dimension_numbers<[1], [0], [0], [1], [0, 0, 1, 1], [], []>} : vector<1x32xbf16>, vector<32x64xbf16>, vector<1x64xf32> -> vector<1x64xf32>
    %262 = arith.addf %256, %261 : vector<1x64xf32>
    %263 = vector.extract_strided_slice %135 {offsets = [21, 0], sizes = [1, 32], strides = [1, 1]} : vector<49x32xf32> to vector<1x32xf32>
    %264 = arith.truncf %263 : vector<1x32xf32> to vector<1x32xbf16>
    %c21 = arith.constant 21 : index
    %c0_191 = arith.constant 0 : index
    %c0_192 = arith.constant 0 : index
    %265 = vector.load %arg12[%c21, %c0_191, %c0_192] : memref<49x32x64xbf16, #tpu.memory_space<vmem>>, vector<1x32x64xbf16>
    %266 = vector.shape_cast %265 : vector<1x32x64xbf16> to vector<32x64xbf16>
    %cst_193 = arith.constant dense<0.000000e+00> : vector<1x64xf32>
    %267 = tpu.matmul %264, %266, %cst_193 {dimension_numbers = #tpu.dot_dimension_numbers<[1], [0], [0], [1], [0, 0, 1, 1], [], []>} : vector<1x32xbf16>, vector<32x64xbf16>, vector<1x64xf32> -> vector<1x64xf32>
    %268 = arith.addf %262, %267 : vector<1x64xf32>
    %269 = vector.extract_strided_slice %135 {offsets = [22, 0], sizes = [1, 32], strides = [1, 1]} : vector<49x32xf32> to vector<1x32xf32>
    %270 = arith.truncf %269 : vector<1x32xf32> to vector<1x32xbf16>
    %c22 = arith.constant 22 : index
    %c0_194 = arith.constant 0 : index
    %c0_195 = arith.constant 0 : index
    %271 = vector.load %arg12[%c22, %c0_194, %c0_195] : memref<49x32x64xbf16, #tpu.memory_space<vmem>>, vector<1x32x64xbf16>
    %272 = vector.shape_cast %271 : vector<1x32x64xbf16> to vector<32x64xbf16>
    %cst_196 = arith.constant dense<0.000000e+00> : vector<1x64xf32>
    %273 = tpu.matmul %270, %272, %cst_196 {dimension_numbers = #tpu.dot_dimension_numbers<[1], [0], [0], [1], [0, 0, 1, 1], [], []>} : vector<1x32xbf16>, vector<32x64xbf16>, vector<1x64xf32> -> vector<1x64xf32>
    %274 = arith.addf %268, %273 : vector<1x64xf32>
    %275 = vector.extract_strided_slice %135 {offsets = [23, 0], sizes = [1, 32], strides = [1, 1]} : vector<49x32xf32> to vector<1x32xf32>
    %276 = arith.truncf %275 : vector<1x32xf32> to vector<1x32xbf16>
    %c23 = arith.constant 23 : index
    %c0_197 = arith.constant 0 : index
    %c0_198 = arith.constant 0 : index
    %277 = vector.load %arg12[%c23, %c0_197, %c0_198] : memref<49x32x64xbf16, #tpu.memory_space<vmem>>, vector<1x32x64xbf16>
    %278 = vector.shape_cast %277 : vector<1x32x64xbf16> to vector<32x64xbf16>
    %cst_199 = arith.constant dense<0.000000e+00> : vector<1x64xf32>
    %279 = tpu.matmul %276, %278, %cst_199 {dimension_numbers = #tpu.dot_dimension_numbers<[1], [0], [0], [1], [0, 0, 1, 1], [], []>} : vector<1x32xbf16>, vector<32x64xbf16>, vector<1x64xf32> -> vector<1x64xf32>
    %280 = arith.addf %274, %279 : vector<1x64xf32>
    %281 = vector.extract_strided_slice %135 {offsets = [24, 0], sizes = [1, 32], strides = [1, 1]} : vector<49x32xf32> to vector<1x32xf32>
    %282 = arith.truncf %281 : vector<1x32xf32> to vector<1x32xbf16>
    %c24 = arith.constant 24 : index
    %c0_200 = arith.constant 0 : index
    %c0_201 = arith.constant 0 : index
    %283 = vector.load %arg12[%c24, %c0_200, %c0_201] : memref<49x32x64xbf16, #tpu.memory_space<vmem>>, vector<1x32x64xbf16>
    %284 = vector.shape_cast %283 : vector<1x32x64xbf16> to vector<32x64xbf16>
    %cst_202 = arith.constant dense<0.000000e+00> : vector<1x64xf32>
    %285 = tpu.matmul %282, %284, %cst_202 {dimension_numbers = #tpu.dot_dimension_numbers<[1], [0], [0], [1], [0, 0, 1, 1], [], []>} : vector<1x32xbf16>, vector<32x64xbf16>, vector<1x64xf32> -> vector<1x64xf32>
    %286 = arith.addf %280, %285 : vector<1x64xf32>
    %287 = vector.extract_strided_slice %135 {offsets = [25, 0], sizes = [1, 32], strides = [1, 1]} : vector<49x32xf32> to vector<1x32xf32>
    %288 = arith.truncf %287 : vector<1x32xf32> to vector<1x32xbf16>
    %c25 = arith.constant 25 : index
    %c0_203 = arith.constant 0 : index
    %c0_204 = arith.constant 0 : index
    %289 = vector.load %arg12[%c25, %c0_203, %c0_204] : memref<49x32x64xbf16, #tpu.memory_space<vmem>>, vector<1x32x64xbf16>
    %290 = vector.shape_cast %289 : vector<1x32x64xbf16> to vector<32x64xbf16>
    %cst_205 = arith.constant dense<0.000000e+00> : vector<1x64xf32>
    %291 = tpu.matmul %288, %290, %cst_205 {dimension_numbers = #tpu.dot_dimension_numbers<[1], [0], [0], [1], [0, 0, 1, 1], [], []>} : vector<1x32xbf16>, vector<32x64xbf16>, vector<1x64xf32> -> vector<1x64xf32>
    %292 = arith.addf %286, %291 : vector<1x64xf32>
    %293 = vector.extract_strided_slice %135 {offsets = [26, 0], sizes = [1, 32], strides = [1, 1]} : vector<49x32xf32> to vector<1x32xf32>
    %294 = arith.truncf %293 : vector<1x32xf32> to vector<1x32xbf16>
    %c26 = arith.constant 26 : index
    %c0_206 = arith.constant 0 : index
    %c0_207 = arith.constant 0 : index
    %295 = vector.load %arg12[%c26, %c0_206, %c0_207] : memref<49x32x64xbf16, #tpu.memory_space<vmem>>, vector<1x32x64xbf16>
    %296 = vector.shape_cast %295 : vector<1x32x64xbf16> to vector<32x64xbf16>
    %cst_208 = arith.constant dense<0.000000e+00> : vector<1x64xf32>
    %297 = tpu.matmul %294, %296, %cst_208 {dimension_numbers = #tpu.dot_dimension_numbers<[1], [0], [0], [1], [0, 0, 1, 1], [], []>} : vector<1x32xbf16>, vector<32x64xbf16>, vector<1x64xf32> -> vector<1x64xf32>
    %298 = arith.addf %292, %297 : vector<1x64xf32>
    %299 = vector.extract_strided_slice %135 {offsets = [27, 0], sizes = [1, 32], strides = [1, 1]} : vector<49x32xf32> to vector<1x32xf32>
    %300 = arith.truncf %299 : vector<1x32xf32> to vector<1x32xbf16>
    %c27 = arith.constant 27 : index
    %c0_209 = arith.constant 0 : index
    %c0_210 = arith.constant 0 : index
    %301 = vector.load %arg12[%c27, %c0_209, %c0_210] : memref<49x32x64xbf16, #tpu.memory_space<vmem>>, vector<1x32x64xbf16>
    %302 = vector.shape_cast %301 : vector<1x32x64xbf16> to vector<32x64xbf16>
    %cst_211 = arith.constant dense<0.000000e+00> : vector<1x64xf32>
    %303 = tpu.matmul %300, %302, %cst_211 {dimension_numbers = #tpu.dot_dimension_numbers<[1], [0], [0], [1], [0, 0, 1, 1], [], []>} : vector<1x32xbf16>, vector<32x64xbf16>, vector<1x64xf32> -> vector<1x64xf32>
    %304 = arith.addf %298, %303 : vector<1x64xf32>
    %305 = vector.extract_strided_slice %135 {offsets = [28, 0], sizes = [1, 32], strides = [1, 1]} : vector<49x32xf32> to vector<1x32xf32>
    %306 = arith.truncf %305 : vector<1x32xf32> to vector<1x32xbf16>
    %c28 = arith.constant 28 : index
    %c0_212 = arith.constant 0 : index
    %c0_213 = arith.constant 0 : index
    %307 = vector.load %arg12[%c28, %c0_212, %c0_213] : memref<49x32x64xbf16, #tpu.memory_space<vmem>>, vector<1x32x64xbf16>
    %308 = vector.shape_cast %307 : vector<1x32x64xbf16> to vector<32x64xbf16>
    %cst_214 = arith.constant dense<0.000000e+00> : vector<1x64xf32>
    %309 = tpu.matmul %306, %308, %cst_214 {dimension_numbers = #tpu.dot_dimension_numbers<[1], [0], [0], [1], [0, 0, 1, 1], [], []>} : vector<1x32xbf16>, vector<32x64xbf16>, vector<1x64xf32> -> vector<1x64xf32>
    %310 = arith.addf %304, %309 : vector<1x64xf32>
    %311 = vector.extract_strided_slice %135 {offsets = [29, 0], sizes = [1, 32], strides = [1, 1]} : vector<49x32xf32> to vector<1x32xf32>
    %312 = arith.truncf %311 : vector<1x32xf32> to vector<1x32xbf16>
    %c29 = arith.constant 29 : index
    %c0_215 = arith.constant 0 : index
    %c0_216 = arith.constant 0 : index
    %313 = vector.load %arg12[%c29, %c0_215, %c0_216] : memref<49x32x64xbf16, #tpu.memory_space<vmem>>, vector<1x32x64xbf16>
    %314 = vector.shape_cast %313 : vector<1x32x64xbf16> to vector<32x64xbf16>
    %cst_217 = arith.constant dense<0.000000e+00> : vector<1x64xf32>
    %315 = tpu.matmul %312, %314, %cst_217 {dimension_numbers = #tpu.dot_dimension_numbers<[1], [0], [0], [1], [0, 0, 1, 1], [], []>} : vector<1x32xbf16>, vector<32x64xbf16>, vector<1x64xf32> -> vector<1x64xf32>
    %316 = arith.addf %310, %315 : vector<1x64xf32>
    %317 = vector.extract_strided_slice %135 {offsets = [30, 0], sizes = [1, 32], strides = [1, 1]} : vector<49x32xf32> to vector<1x32xf32>
    %318 = arith.truncf %317 : vector<1x32xf32> to vector<1x32xbf16>
    %c30 = arith.constant 30 : index
    %c0_218 = arith.constant 0 : index
    %c0_219 = arith.constant 0 : index
    %319 = vector.load %arg12[%c30, %c0_218, %c0_219] : memref<49x32x64xbf16, #tpu.memory_space<vmem>>, vector<1x32x64xbf16>
    %320 = vector.shape_cast %319 : vector<1x32x64xbf16> to vector<32x64xbf16>
    %cst_220 = arith.constant dense<0.000000e+00> : vector<1x64xf32>
    %321 = tpu.matmul %318, %320, %cst_220 {dimension_numbers = #tpu.dot_dimension_numbers<[1], [0], [0], [1], [0, 0, 1, 1], [], []>} : vector<1x32xbf16>, vector<32x64xbf16>, vector<1x64xf32> -> vector<1x64xf32>
    %322 = arith.addf %316, %321 : vector<1x64xf32>
    %323 = vector.extract_strided_slice %135 {offsets = [31, 0], sizes = [1, 32], strides = [1, 1]} : vector<49x32xf32> to vector<1x32xf32>
    %324 = arith.truncf %323 : vector<1x32xf32> to vector<1x32xbf16>
    %c31 = arith.constant 31 : index
    %c0_221 = arith.constant 0 : index
    %c0_222 = arith.constant 0 : index
    %325 = vector.load %arg12[%c31, %c0_221, %c0_222] : memref<49x32x64xbf16, #tpu.memory_space<vmem>>, vector<1x32x64xbf16>
    %326 = vector.shape_cast %325 : vector<1x32x64xbf16> to vector<32x64xbf16>
    %cst_223 = arith.constant dense<0.000000e+00> : vector<1x64xf32>
    %327 = tpu.matmul %324, %326, %cst_223 {dimension_numbers = #tpu.dot_dimension_numbers<[1], [0], [0], [1], [0, 0, 1, 1], [], []>} : vector<1x32xbf16>, vector<32x64xbf16>, vector<1x64xf32> -> vector<1x64xf32>
    %328 = arith.addf %322, %327 : vector<1x64xf32>
    %329 = vector.extract_strided_slice %135 {offsets = [32, 0], sizes = [1, 32], strides = [1, 1]} : vector<49x32xf32> to vector<1x32xf32>
    %330 = arith.truncf %329 : vector<1x32xf32> to vector<1x32xbf16>
    %c32 = arith.constant 32 : index
    %c0_224 = arith.constant 0 : index
    %c0_225 = arith.constant 0 : index
    %331 = vector.load %arg12[%c32, %c0_224, %c0_225] : memref<49x32x64xbf16, #tpu.memory_space<vmem>>, vector<1x32x64xbf16>
    %332 = vector.shape_cast %331 : vector<1x32x64xbf16> to vector<32x64xbf16>
    %cst_226 = arith.constant dense<0.000000e+00> : vector<1x64xf32>
    %333 = tpu.matmul %330, %332, %cst_226 {dimension_numbers = #tpu.dot_dimension_numbers<[1], [0], [0], [1], [0, 0, 1, 1], [], []>} : vector<1x32xbf16>, vector<32x64xbf16>, vector<1x64xf32> -> vector<1x64xf32>
    %334 = arith.addf %328, %333 : vector<1x64xf32>
    %335 = vector.extract_strided_slice %135 {offsets = [33, 0], sizes = [1, 32], strides = [1, 1]} : vector<49x32xf32> to vector<1x32xf32>
    %336 = arith.truncf %335 : vector<1x32xf32> to vector<1x32xbf16>
    %c33 = arith.constant 33 : index
    %c0_227 = arith.constant 0 : index
    %c0_228 = arith.constant 0 : index
    %337 = vector.load %arg12[%c33, %c0_227, %c0_228] : memref<49x32x64xbf16, #tpu.memory_space<vmem>>, vector<1x32x64xbf16>
    %338 = vector.shape_cast %337 : vector<1x32x64xbf16> to vector<32x64xbf16>
    %cst_229 = arith.constant dense<0.000000e+00> : vector<1x64xf32>
    %339 = tpu.matmul %336, %338, %cst_229 {dimension_numbers = #tpu.dot_dimension_numbers<[1], [0], [0], [1], [0, 0, 1, 1], [], []>} : vector<1x32xbf16>, vector<32x64xbf16>, vector<1x64xf32> -> vector<1x64xf32>
    %340 = arith.addf %334, %339 : vector<1x64xf32>
    %341 = vector.extract_strided_slice %135 {offsets = [34, 0], sizes = [1, 32], strides = [1, 1]} : vector<49x32xf32> to vector<1x32xf32>
    %342 = arith.truncf %341 : vector<1x32xf32> to vector<1x32xbf16>
    %c34 = arith.constant 34 : index
    %c0_230 = arith.constant 0 : index
    %c0_231 = arith.constant 0 : index
    %343 = vector.load %arg12[%c34, %c0_230, %c0_231] : memref<49x32x64xbf16, #tpu.memory_space<vmem>>, vector<1x32x64xbf16>
    %344 = vector.shape_cast %343 : vector<1x32x64xbf16> to vector<32x64xbf16>
    %cst_232 = arith.constant dense<0.000000e+00> : vector<1x64xf32>
    %345 = tpu.matmul %342, %344, %cst_232 {dimension_numbers = #tpu.dot_dimension_numbers<[1], [0], [0], [1], [0, 0, 1, 1], [], []>} : vector<1x32xbf16>, vector<32x64xbf16>, vector<1x64xf32> -> vector<1x64xf32>
    %346 = arith.addf %340, %345 : vector<1x64xf32>
    %347 = vector.extract_strided_slice %135 {offsets = [35, 0], sizes = [1, 32], strides = [1, 1]} : vector<49x32xf32> to vector<1x32xf32>
    %348 = arith.truncf %347 : vector<1x32xf32> to vector<1x32xbf16>
    %c35 = arith.constant 35 : index
    %c0_233 = arith.constant 0 : index
    %c0_234 = arith.constant 0 : index
    %349 = vector.load %arg12[%c35, %c0_233, %c0_234] : memref<49x32x64xbf16, #tpu.memory_space<vmem>>, vector<1x32x64xbf16>
    %350 = vector.shape_cast %349 : vector<1x32x64xbf16> to vector<32x64xbf16>
    %cst_235 = arith.constant dense<0.000000e+00> : vector<1x64xf32>
    %351 = tpu.matmul %348, %350, %cst_235 {dimension_numbers = #tpu.dot_dimension_numbers<[1], [0], [0], [1], [0, 0, 1, 1], [], []>} : vector<1x32xbf16>, vector<32x64xbf16>, vector<1x64xf32> -> vector<1x64xf32>
    %352 = arith.addf %346, %351 : vector<1x64xf32>
    %353 = vector.extract_strided_slice %135 {offsets = [36, 0], sizes = [1, 32], strides = [1, 1]} : vector<49x32xf32> to vector<1x32xf32>
    %354 = arith.truncf %353 : vector<1x32xf32> to vector<1x32xbf16>
    %c36 = arith.constant 36 : index
    %c0_236 = arith.constant 0 : index
    %c0_237 = arith.constant 0 : index
    %355 = vector.load %arg12[%c36, %c0_236, %c0_237] : memref<49x32x64xbf16, #tpu.memory_space<vmem>>, vector<1x32x64xbf16>
    %356 = vector.shape_cast %355 : vector<1x32x64xbf16> to vector<32x64xbf16>
    %cst_238 = arith.constant dense<0.000000e+00> : vector<1x64xf32>
    %357 = tpu.matmul %354, %356, %cst_238 {dimension_numbers = #tpu.dot_dimension_numbers<[1], [0], [0], [1], [0, 0, 1, 1], [], []>} : vector<1x32xbf16>, vector<32x64xbf16>, vector<1x64xf32> -> vector<1x64xf32>
    %358 = arith.addf %352, %357 : vector<1x64xf32>
    %359 = vector.extract_strided_slice %135 {offsets = [37, 0], sizes = [1, 32], strides = [1, 1]} : vector<49x32xf32> to vector<1x32xf32>
    %360 = arith.truncf %359 : vector<1x32xf32> to vector<1x32xbf16>
    %c37 = arith.constant 37 : index
    %c0_239 = arith.constant 0 : index
    %c0_240 = arith.constant 0 : index
    %361 = vector.load %arg12[%c37, %c0_239, %c0_240] : memref<49x32x64xbf16, #tpu.memory_space<vmem>>, vector<1x32x64xbf16>
    %362 = vector.shape_cast %361 : vector<1x32x64xbf16> to vector<32x64xbf16>
    %cst_241 = arith.constant dense<0.000000e+00> : vector<1x64xf32>
    %363 = tpu.matmul %360, %362, %cst_241 {dimension_numbers = #tpu.dot_dimension_numbers<[1], [0], [0], [1], [0, 0, 1, 1], [], []>} : vector<1x32xbf16>, vector<32x64xbf16>, vector<1x64xf32> -> vector<1x64xf32>
    %364 = arith.addf %358, %363 : vector<1x64xf32>
    %365 = vector.extract_strided_slice %135 {offsets = [38, 0], sizes = [1, 32], strides = [1, 1]} : vector<49x32xf32> to vector<1x32xf32>
    %366 = arith.truncf %365 : vector<1x32xf32> to vector<1x32xbf16>
    %c38 = arith.constant 38 : index
    %c0_242 = arith.constant 0 : index
    %c0_243 = arith.constant 0 : index
    %367 = vector.load %arg12[%c38, %c0_242, %c0_243] : memref<49x32x64xbf16, #tpu.memory_space<vmem>>, vector<1x32x64xbf16>
    %368 = vector.shape_cast %367 : vector<1x32x64xbf16> to vector<32x64xbf16>
    %cst_244 = arith.constant dense<0.000000e+00> : vector<1x64xf32>
    %369 = tpu.matmul %366, %368, %cst_244 {dimension_numbers = #tpu.dot_dimension_numbers<[1], [0], [0], [1], [0, 0, 1, 1], [], []>} : vector<1x32xbf16>, vector<32x64xbf16>, vector<1x64xf32> -> vector<1x64xf32>
    %370 = arith.addf %364, %369 : vector<1x64xf32>
    %371 = vector.extract_strided_slice %135 {offsets = [39, 0], sizes = [1, 32], strides = [1, 1]} : vector<49x32xf32> to vector<1x32xf32>
    %372 = arith.truncf %371 : vector<1x32xf32> to vector<1x32xbf16>
    %c39 = arith.constant 39 : index
    %c0_245 = arith.constant 0 : index
    %c0_246 = arith.constant 0 : index
    %373 = vector.load %arg12[%c39, %c0_245, %c0_246] : memref<49x32x64xbf16, #tpu.memory_space<vmem>>, vector<1x32x64xbf16>
    %374 = vector.shape_cast %373 : vector<1x32x64xbf16> to vector<32x64xbf16>
    %cst_247 = arith.constant dense<0.000000e+00> : vector<1x64xf32>
    %375 = tpu.matmul %372, %374, %cst_247 {dimension_numbers = #tpu.dot_dimension_numbers<[1], [0], [0], [1], [0, 0, 1, 1], [], []>} : vector<1x32xbf16>, vector<32x64xbf16>, vector<1x64xf32> -> vector<1x64xf32>
    %376 = arith.addf %370, %375 : vector<1x64xf32>
    %377 = vector.extract_strided_slice %135 {offsets = [40, 0], sizes = [1, 32], strides = [1, 1]} : vector<49x32xf32> to vector<1x32xf32>
    %378 = arith.truncf %377 : vector<1x32xf32> to vector<1x32xbf16>
    %c40 = arith.constant 40 : index
    %c0_248 = arith.constant 0 : index
    %c0_249 = arith.constant 0 : index
    %379 = vector.load %arg12[%c40, %c0_248, %c0_249] : memref<49x32x64xbf16, #tpu.memory_space<vmem>>, vector<1x32x64xbf16>
    %380 = vector.shape_cast %379 : vector<1x32x64xbf16> to vector<32x64xbf16>
    %cst_250 = arith.constant dense<0.000000e+00> : vector<1x64xf32>
    %381 = tpu.matmul %378, %380, %cst_250 {dimension_numbers = #tpu.dot_dimension_numbers<[1], [0], [0], [1], [0, 0, 1, 1], [], []>} : vector<1x32xbf16>, vector<32x64xbf16>, vector<1x64xf32> -> vector<1x64xf32>
    %382 = arith.addf %376, %381 : vector<1x64xf32>
    %383 = vector.extract_strided_slice %135 {offsets = [41, 0], sizes = [1, 32], strides = [1, 1]} : vector<49x32xf32> to vector<1x32xf32>
    %384 = arith.truncf %383 : vector<1x32xf32> to vector<1x32xbf16>
    %c41 = arith.constant 41 : index
    %c0_251 = arith.constant 0 : index
    %c0_252 = arith.constant 0 : index
    %385 = vector.load %arg12[%c41, %c0_251, %c0_252] : memref<49x32x64xbf16, #tpu.memory_space<vmem>>, vector<1x32x64xbf16>
    %386 = vector.shape_cast %385 : vector<1x32x64xbf16> to vector<32x64xbf16>
    %cst_253 = arith.constant dense<0.000000e+00> : vector<1x64xf32>
    %387 = tpu.matmul %384, %386, %cst_253 {dimension_numbers = #tpu.dot_dimension_numbers<[1], [0], [0], [1], [0, 0, 1, 1], [], []>} : vector<1x32xbf16>, vector<32x64xbf16>, vector<1x64xf32> -> vector<1x64xf32>
    %388 = arith.addf %382, %387 : vector<1x64xf32>
    %389 = vector.extract_strided_slice %135 {offsets = [42, 0], sizes = [1, 32], strides = [1, 1]} : vector<49x32xf32> to vector<1x32xf32>
    %390 = arith.truncf %389 : vector<1x32xf32> to vector<1x32xbf16>
    %c42 = arith.constant 42 : index
    %c0_254 = arith.constant 0 : index
    %c0_255 = arith.constant 0 : index
    %391 = vector.load %arg12[%c42, %c0_254, %c0_255] : memref<49x32x64xbf16, #tpu.memory_space<vmem>>, vector<1x32x64xbf16>
    %392 = vector.shape_cast %391 : vector<1x32x64xbf16> to vector<32x64xbf16>
    %cst_256 = arith.constant dense<0.000000e+00> : vector<1x64xf32>
    %393 = tpu.matmul %390, %392, %cst_256 {dimension_numbers = #tpu.dot_dimension_numbers<[1], [0], [0], [1], [0, 0, 1, 1], [], []>} : vector<1x32xbf16>, vector<32x64xbf16>, vector<1x64xf32> -> vector<1x64xf32>
    %394 = arith.addf %388, %393 : vector<1x64xf32>
    %395 = vector.extract_strided_slice %135 {offsets = [43, 0], sizes = [1, 32], strides = [1, 1]} : vector<49x32xf32> to vector<1x32xf32>
    %396 = arith.truncf %395 : vector<1x32xf32> to vector<1x32xbf16>
    %c43 = arith.constant 43 : index
    %c0_257 = arith.constant 0 : index
    %c0_258 = arith.constant 0 : index
    %397 = vector.load %arg12[%c43, %c0_257, %c0_258] : memref<49x32x64xbf16, #tpu.memory_space<vmem>>, vector<1x32x64xbf16>
    %398 = vector.shape_cast %397 : vector<1x32x64xbf16> to vector<32x64xbf16>
    %cst_259 = arith.constant dense<0.000000e+00> : vector<1x64xf32>
    %399 = tpu.matmul %396, %398, %cst_259 {dimension_numbers = #tpu.dot_dimension_numbers<[1], [0], [0], [1], [0, 0, 1, 1], [], []>} : vector<1x32xbf16>, vector<32x64xbf16>, vector<1x64xf32> -> vector<1x64xf32>
    %400 = arith.addf %394, %399 : vector<1x64xf32>
    %401 = vector.extract_strided_slice %135 {offsets = [44, 0], sizes = [1, 32], strides = [1, 1]} : vector<49x32xf32> to vector<1x32xf32>
    %402 = arith.truncf %401 : vector<1x32xf32> to vector<1x32xbf16>
    %c44 = arith.constant 44 : index
    %c0_260 = arith.constant 0 : index
    %c0_261 = arith.constant 0 : index
    %403 = vector.load %arg12[%c44, %c0_260, %c0_261] : memref<49x32x64xbf16, #tpu.memory_space<vmem>>, vector<1x32x64xbf16>
    %404 = vector.shape_cast %403 : vector<1x32x64xbf16> to vector<32x64xbf16>
    %cst_262 = arith.constant dense<0.000000e+00> : vector<1x64xf32>
    %405 = tpu.matmul %402, %404, %cst_262 {dimension_numbers = #tpu.dot_dimension_numbers<[1], [0], [0], [1], [0, 0, 1, 1], [], []>} : vector<1x32xbf16>, vector<32x64xbf16>, vector<1x64xf32> -> vector<1x64xf32>
    %406 = arith.addf %400, %405 : vector<1x64xf32>
    %407 = vector.extract_strided_slice %135 {offsets = [45, 0], sizes = [1, 32], strides = [1, 1]} : vector<49x32xf32> to vector<1x32xf32>
    %408 = arith.truncf %407 : vector<1x32xf32> to vector<1x32xbf16>
    %c45 = arith.constant 45 : index
    %c0_263 = arith.constant 0 : index
    %c0_264 = arith.constant 0 : index
    %409 = vector.load %arg12[%c45, %c0_263, %c0_264] : memref<49x32x64xbf16, #tpu.memory_space<vmem>>, vector<1x32x64xbf16>
    %410 = vector.shape_cast %409 : vector<1x32x64xbf16> to vector<32x64xbf16>
    %cst_265 = arith.constant dense<0.000000e+00> : vector<1x64xf32>
    %411 = tpu.matmul %408, %410, %cst_265 {dimension_numbers = #tpu.dot_dimension_numbers<[1], [0], [0], [1], [0, 0, 1, 1], [], []>} : vector<1x32xbf16>, vector<32x64xbf16>, vector<1x64xf32> -> vector<1x64xf32>
    %412 = arith.addf %406, %411 : vector<1x64xf32>
    %413 = vector.extract_strided_slice %135 {offsets = [46, 0], sizes = [1, 32], strides = [1, 1]} : vector<49x32xf32> to vector<1x32xf32>
    %414 = arith.truncf %413 : vector<1x32xf32> to vector<1x32xbf16>
    %c46 = arith.constant 46 : index
    %c0_266 = arith.constant 0 : index
    %c0_267 = arith.constant 0 : index
    %415 = vector.load %arg12[%c46, %c0_266, %c0_267] : memref<49x32x64xbf16, #tpu.memory_space<vmem>>, vector<1x32x64xbf16>
    %416 = vector.shape_cast %415 : vector<1x32x64xbf16> to vector<32x64xbf16>
    %cst_268 = arith.constant dense<0.000000e+00> : vector<1x64xf32>
    %417 = tpu.matmul %414, %416, %cst_268 {dimension_numbers = #tpu.dot_dimension_numbers<[1], [0], [0], [1], [0, 0, 1, 1], [], []>} : vector<1x32xbf16>, vector<32x64xbf16>, vector<1x64xf32> -> vector<1x64xf32>
    %418 = arith.addf %412, %417 : vector<1x64xf32>
    %419 = vector.extract_strided_slice %135 {offsets = [47, 0], sizes = [1, 32], strides = [1, 1]} : vector<49x32xf32> to vector<1x32xf32>
    %420 = arith.truncf %419 : vector<1x32xf32> to vector<1x32xbf16>
    %c47 = arith.constant 47 : index
    %c0_269 = arith.constant 0 : index
    %c0_270 = arith.constant 0 : index
    %421 = vector.load %arg12[%c47, %c0_269, %c0_270] : memref<49x32x64xbf16, #tpu.memory_space<vmem>>, vector<1x32x64xbf16>
    %422 = vector.shape_cast %421 : vector<1x32x64xbf16> to vector<32x64xbf16>
    %cst_271 = arith.constant dense<0.000000e+00> : vector<1x64xf32>
    %423 = tpu.matmul %420, %422, %cst_271 {dimension_numbers = #tpu.dot_dimension_numbers<[1], [0], [0], [1], [0, 0, 1, 1], [], []>} : vector<1x32xbf16>, vector<32x64xbf16>, vector<1x64xf32> -> vector<1x64xf32>
    %424 = arith.addf %418, %423 : vector<1x64xf32>
    %425 = vector.extract_strided_slice %135 {offsets = [48, 0], sizes = [1, 32], strides = [1, 1]} : vector<49x32xf32> to vector<1x32xf32>
    %426 = arith.truncf %425 : vector<1x32xf32> to vector<1x32xbf16>
    %c48 = arith.constant 48 : index
    %c0_272 = arith.constant 0 : index
    %c0_273 = arith.constant 0 : index
    %427 = vector.load %arg12[%c48, %c0_272, %c0_273] : memref<49x32x64xbf16, #tpu.memory_space<vmem>>, vector<1x32x64xbf16>
    %428 = vector.shape_cast %427 : vector<1x32x64xbf16> to vector<32x64xbf16>
    %cst_274 = arith.constant dense<0.000000e+00> : vector<1x64xf32>
    %429 = tpu.matmul %426, %428, %cst_274 {dimension_numbers = #tpu.dot_dimension_numbers<[1], [0], [0], [1], [0, 0, 1, 1], [], []>} : vector<1x32xbf16>, vector<32x64xbf16>, vector<1x64xf32> -> vector<1x64xf32>
    %430 = arith.addf %424, %429 : vector<1x64xf32>
    %c0_275 = arith.constant 0 : index
    %c0_276 = arith.constant 0 : index
    %431 = vector.load %arg13[%c0_275, %c0_276] : memref<1x64xf32, #tpu.memory_space<vmem>>, vector<1x64xf32>
    %432 = arith.addf %430, %431 : vector<1x64xf32>
    %cst_277 = arith.constant 0.000000e+00 : f32
    %433 = vector.broadcast %cst_277 : f32 to vector<1x64xf32>
    %434 = arith.maximumf %432, %433 : vector<1x64xf32>
    %435 = arith.truncf %434 : vector<1x64xf32> to vector<1x64xbf16>
    %c0_278 = arith.constant 0 : index
    %c0_279 = arith.constant 0 : index
    %436 = vector.load %arg14[%c0_278, %c0_279] : memref<64x10xbf16, #tpu.memory_space<vmem>>, vector<64x10xbf16>
    %cst_280 = arith.constant dense<0.000000e+00> : vector<1x10xf32>
    %437 = tpu.matmul %435, %436, %cst_280 {dimension_numbers = #tpu.dot_dimension_numbers<[1], [0], [0], [1], [0, 0, 1, 1], [], []>} : vector<1x64xbf16>, vector<64x10xbf16>, vector<1x10xf32> -> vector<1x10xf32>
    %c0_281 = arith.constant 0 : index
    %c0_282 = arith.constant 0 : index
    %438 = vector.load %arg15[%c0_281, %c0_282] : memref<1x10xf32, #tpu.memory_space<vmem>>, vector<1x10xf32>
    %439 = arith.addf %437, %438 : vector<1x10xf32>
    %c0_283 = arith.constant 0 : index
    %c0_284 = arith.constant 0 : index
    %c0_285 = arith.constant 0 : index
    %440 = vector.load %arg16[%c0_283, %c0_284, %c0_285] : memref<1x1x10xf32, #tpu.memory_space<vmem>>, vector<1x1x10xf32>
    %441 = vector.shape_cast %440 : vector<1x1x10xf32> to vector<1x10xf32>
    %442 = vector.shape_cast %439 : vector<1x10xf32> to vector<1x1x10xf32>
    tpu.vector_store %arg16[%c0_283, %c0_284, %c0_285], %442 {strides = array<i32>} : memref<1x1x10xf32, #tpu.memory_space<vmem>>, vector<1x1x10xf32>,
    return
  }
  func.func @transform_0(%arg0: i32) -> (i32, i32, i32, i32) {
    %c0_i32 = arith.constant 0 : i32
    %c0_i32_0 = arith.constant 0 : i32
    %c0_i32_1 = arith.constant 0 : i32
    %c0_i32_2 = arith.constant 0 : i32
    return %arg0, %c0_i32, %c0_i32_0, %c0_i32_1 : i32, i32, i32, i32
  }
  func.func @transform_1(%arg0: i32) -> (i32, i32) {
    %c0_i32 = arith.constant 0 : i32
    %c0_i32_0 = arith.constant 0 : i32
    %c0_i32_1 = arith.constant 0 : i32
    return %c0_i32, %c0_i32_0 : i32, i32
  }
  func.func @transform_2(%arg0: i32) -> (i32, i32) {
    %c0_i32 = arith.constant 0 : i32
    %c0_i32_0 = arith.constant 0 : i32
    %c0_i32_1 = arith.constant 0 : i32
    return %c0_i32, %c0_i32_0 : i32, i32
  }
  func.func @transform_3(%arg0: i32) -> (i32, i32) {
    %c0_i32 = arith.constant 0 : i32
    %c0_i32_0 = arith.constant 0 : i32
    %c0_i32_1 = arith.constant 0 : i32
    return %c0_i32, %c0_i32_0 : i32, i32
  }
  func.func @transform_4(%arg0: i32) -> (i32, i32) {
    %c0_i32 = arith.constant 0 : i32
    %c0_i32_0 = arith.constant 0 : i32
    %c0_i32_1 = arith.constant 0 : i32
    return %c0_i32, %c0_i32_0 : i32, i32
  }
  func.func @transform_5(%arg0: i32) -> (i32, i32) {
    %c0_i32 = arith.constant 0 : i32
    %c0_i32_0 = arith.constant 0 : i32
    %c0_i32_1 = arith.constant 0 : i32
    return %c0_i32, %c0_i32_0 : i32, i32
  }
  func.func @transform_6(%arg0: i32) -> (i32, i32) {
    %c0_i32 = arith.constant 0 : i32
    %c0_i32_0 = arith.constant 0 : i32
    %c0_i32_1 = arith.constant 0 : i32
    return %c0_i32, %c0_i32_0 : i32, i32
  }
  func.func @transform_7(%arg0: i32) -> (i32, i32) {
    %c0_i32 = arith.constant 0 : i32
    %c0_i32_0 = arith.constant 0 : i32
    %c0_i32_1 = arith.constant 0 : i32
    return %c0_i32, %c0_i32_0 : i32, i32
  }
  func.func @transform_8(%arg0: i32) -> (i32, i32) {
    %c0_i32 = arith.constant 0 : i32
    %c0_i32_0 = arith.constant 0 : i32
    %c0_i32_1 = arith.constant 0 : i32
    return %c0_i32, %c0_i32_0 : i32, i32
  }
  func.func @transform_9(%arg0: i32) -> (i32, i32) {
    %c0_i32 = arith.constant 0 : i32
    %c0_i32_0 = arith.constant 0 : i32
    %c0_i32_1 = arith.constant 0 : i32
    return %c0_i32, %c0_i32_0 : i32, i32
  }
  func.func @transform_10(%arg0: i32) -> (i32, i32) {
    %c0_i32 = arith.constant 0 : i32
    %c0_i32_0 = arith.constant 0 : i32
    %c0_i32_1 = arith.constant 0 : i32
    return %c0_i32, %c0_i32_0 : i32, i32
  }
  func.func @transform_11(%arg0: i32) -> (i32, i32, i32) {
    %c0_i32 = arith.constant 0 : i32
    %c0_i32_0 = arith.constant 0 : i32
    %c0_i32_1 = arith.constant 0 : i32
    %c0_i32_2 = arith.constant 0 : i32
    return %c0_i32, %c0_i32_0, %c0_i32_1 : i32, i32, i32
  }
  func.func @transform_12(%arg0: i32) -> (i32, i32) {
    %c0_i32 = arith.constant 0 : i32
    %c0_i32_0 = arith.constant 0 : i32
    %c0_i32_1 = arith.constant 0 : i32
    return %c0_i32, %c0_i32_0 : i32, i32
  }
  func.func @transform_13(%arg0: i32) -> (i32, i32) {
    %c0_i32 = arith.constant 0 : i32
    %c0_i32_0 = arith.constant 0 : i32
    %c0_i32_1 = arith.constant 0 : i32
    return %c0_i32, %c0_i32_0 : i32, i32
  }
  func.func @transform_14(%arg0: i32) -> (i32, i32) {
    %c0_i32 = arith.constant 0 : i32
    %c0_i32_0 = arith.constant 0 : i32
    %c0_i32_1 = arith.constant 0 : i32
    return %c0_i32, %c0_i32_0 : i32, i32
  }
  func.func @transform_15(%arg0: i32) -> (i32, i32, i32) {
    %c0_i32 = arith.constant 0 : i32
    %c0_i32_0 = arith.constant 0 : i32
    %c0_i32_1 = arith.constant 0 : i32
    return %arg0, %c0_i32, %c0_i32_0 : i32, i32, i32
  }
}

</mosaic_0001>

<llo_original>
// kernel: net_forward.1
$region0: #{net_forward.1}
  #allocation0 [shape = 'u32[]', space=smem, size = 0x4, offset = 0x4, fixed_abs, tag = 'smem constant byte address 0x4 - core index']
  #allocation1 [shape = 'u32[72,128]{1,0:T(1,128)}', space=vmem, size = 0x9000, scoped, tag = 'internal scratch']
  #allocation2 [shape = 'f32[6,6,1]{2,1,0:T(8,128)}', space=vmem, size = 0x6000, scoped, tag = 'scratch operand']
  #allocation3 [shape = 'bf16[7,7,32]{2,1,0:T(8,128)(2,1)}', space=vmem, size = 0x3800, scoped, tag = 'scratch operand']
  #allocation4 [shape = 'bf16[8,8,64]{2,1,0:T(8,128)(2,1)}', space=vmem, size = 0x4000, scoped, tag = 'scratch operand']
  #allocation5 [shape = 'bf16[9,9,128]{2,1,0:T(8,128)(2,1)}', space=vmem, size = 0x9000, scoped, tag = 'scratch operand']
  %s0 = inlined_call_operand.vmem [shape: f32[2,4,4,1], index: 0, kind: input, shape index: {}]
  %s1 = inlined_call_operand.vmem [shape: f32[4,32], index: 1, kind: input, shape index: {}]
  %s2 = inlined_call_operand.vmem [shape: f32[1,32], index: 2, kind: input, shape index: {}]
  %s3 = inlined_call_operand.vmem [shape: bf16[128,64], index: 3, kind: input, shape index: {}]
  %s4 = inlined_call_operand.vmem [shape: f32[1,64], index: 4, kind: input, shape index: {}]
  %s5 = inlined_call_operand.vmem [shape: bf16[256,128], index: 5, kind: input, shape index: {}]
  %s6 = inlined_call_operand.vmem [shape: f32[1,128], index: 6, kind: input, shape index: {}]
  %s7 = inlined_call_operand.vmem [shape: bf16[512,64], index: 7, kind: input, shape index: {}]
  %s8 = inlined_call_operand.vmem [shape: f32[1,64], index: 8, kind: input, shape index: {}]
  %s9 = inlined_call_operand.vmem [shape: bf16[256,32], index: 9, kind: input, shape index: {}]
  %s10 = inlined_call_operand.vmem [shape: f32[1,32], index: 10, kind: input, shape index: {}]
  %s11 = inlined_call_operand.vmem [shape: bf16[49,32,64], index: 11, kind: input, shape index: {}]
  %s12 = inlined_call_operand.vmem [shape: f32[1,64], index: 12, kind: input, shape index: {}]
  %s13 = inlined_call_operand.vmem [shape: bf16[64,10], index: 13, kind: input, shape index: {}]
  %s14 = inlined_call_operand.vmem [shape: f32[1,10], index: 14, kind: input, shape index: {}]
  %s15 = inlined_call_operand.hbm [shape: f32[2,1,10], index: 15, kind: output, shape index: {}]
  %s16 = sld [smem:[#allocation0]]
  $region93: #{net_forward.1} parent=0
    _
  %s18 = ssub.s32 1, %s16
  %s19 = scalar_select 0, %s18, %s16
  $region1: #{net_forward.1} parent=0
    #allocation6 [shape = 'u8[1024]{0}', space=vmem, size = 0x400, scoped, tag = 'output window, operand 0']
    #allocation7 [shape = 's32[2]{0}', space=sflag, size = 0x8, scoped, tag = 'scoped memory for net_forward.1']
    %20 = vsyncpa [#allocation7], 0
    %s21 = scalar_lea.sflag [#allocation7], 1
    %22 = vsyncpa %s21, 0
    loop: start=0, step=1, limit=4
    $region2: #{net_forward.1} parent=1 // loop_pre_header
      _
    $region3: #{net_forward.1} parent=1 // loop_header
      %s24 = sphi 0, %s28
      %p25 = scmp.ge.s32.totalorder %s24, 4
      %s34 = sphi 0, %s36
      %s37 = sphi 0, %s34
      %s38 = sphi 0, %s37
      %s54 = sphi 0, %s38
      %s58 = sphi 0, %s58
      %s60 = sphi 0, %s58
      %s61 = sphi 0, %s60
      %s75 = sphi 0, %s61
      %s79 = sphi 0, %s79
      %s81 = sphi 0, %s79
      %s82 = sphi 0, %s81
      %s96 = sphi 0, %s82
      %s100 = sphi 0, %s100
      %s102 = sphi 0, %s100
      %s103 = sphi 0, %s102
      %s117 = sphi 0, %s103
      %s121 = sphi 0, %s121
      %s123 = sphi 0, %s121
      %s124 = sphi 0, %s123
      %s138 = sphi 0, %s124
      %s142 = sphi 0, %s142
      %s144 = sphi 0, %s142
      %s145 = sphi 0, %s144
      %s159 = sphi 0, %s145
      %s163 = sphi 0, %s163
      %s165 = sphi 0, %s163
      %s166 = sphi 0, %s165
      %s180 = sphi 0, %s166
      %s184 = sphi 0, %s184
      %s186 = sphi 0, %s184
      %s187 = sphi 0, %s186
      %s201 = sphi 0, %s187
      %s205 = sphi 0, %s205
      %s207 = sphi 0, %s205
      %s208 = sphi 0, %s207
      %s222 = sphi 0, %s208
      %s226 = sphi 0, %s226
      %s228 = sphi 0, %s226
      %s229 = sphi 0, %s228
      %s243 = sphi 0, %s229
      %s247 = sphi 0, %s247
      %s249 = sphi 0, %s247
      %s250 = sphi 0, %s249
      %s264 = sphi 0, %s250
      %s268 = sphi 0, %s268
      %s270 = sphi 0, %s268
      %s271 = sphi 0, %s270
      %s285 = sphi 0, %s271
      %s289 = sphi 0, %s289
      %s291 = sphi 0, %s289
      %s292 = sphi 0, %s291
      %s306 = sphi 0, %s292
      %s310 = sphi 0, %s310
      %s312 = sphi 0, %s310
      %s313 = sphi 0, %s312
      %s327 = sphi 0, %s313
      %s331 = sphi 0, %s331
      %s333 = sphi 0, %s331
      %s334 = sphi 0, %s333
      %s348 = sphi 0, %s334
      %s354 = sphi 0, %s356
      %s357 = sphi 0, %s354
      %s358 = sphi 0, %s357
      %s374 = sphi 0, %s358
    $region4: #{net_forward.1} parent=1 // loop_header_branch
      %27 = sbr.rel (%p25) target = $region8
    $region5: #{net_forward.1} parent=1 // loop_body
      %s29 = ssub.s32 %s24, 1
      %s30 = ssub.s32 %s24, 2
      %s31 = sadd.s32 %s24, 1
      %s32 = ssub.s32 %s24, %s31
      %p33 = scmp.eq.s32.totalorder %s32, 0
      %s35 = sadd.s32 %s34, 1
      %s36 = scalar_select %p33, %s34, %s35
      %p39 = pneg %p33
      %p40 = scmp.eq.s32.totalorder %s24, 1
      %p41 = por %p39, %p40
      %p42 = scmp.ne.s32.totalorder %s34, %s37
      %p43 = scmp.eq.s32.totalorder %s24, 0
      %p44 = por %p42, %p43
      %p45 = scmp.ne.s32.totalorder %s34, %s37
      %p46 = scmp.eq.s32.totalorder %s29, 1
      %p47 = por %p45, %p46
      %p48 = scmp.ne.s32.totalorder %s37, %s38
      %p49 = scmp.eq.s32.totalorder %s29, 0
      %p50 = por %p48, %p49
      %p51 = scmp.ne.s32.totalorder %s37, %s38
      %p52 = scmp.eq.s32.totalorder %s30, 1
      %p53 = por %p51, %p52
      %p55 = scmp.ne.s32.totalorder %s38, %s54
      %p56 = scmp.eq.s32.totalorder %s30, 0
      %p57 = por %p55, %p56
      %s59 = sadd.s32 %s58, 1
      %p62 = scmp.eq.s32.totalorder %s24, 1
      %p63 = scmp.ne.s32.totalorder %s58, %s60
      %p64 = scmp.eq.s32.totalorder %s24, 0
      %p65 = por %p63, %p64
      %p66 = scmp.ne.s32.totalorder %s58, %s60
      %p67 = scmp.eq.s32.totalorder %s29, 1
      %p68 = por %p66, %p67
      %p69 = scmp.ne.s32.totalorder %s60, %s61
      %p70 = scmp.eq.s32.totalorder %s29, 0
      %p71 = por %p69, %p70
      %p72 = scmp.ne.s32.totalorder %s60, %s61
      %p73 = scmp.eq.s32.totalorder %s30, 1
      %p74 = por %p72, %p73
      %p76 = scmp.ne.s32.totalorder %s61, %s75
      %p77 = scmp.eq.s32.totalorder %s30, 0
      %p78 = por %p76, %p77
      %s80 = sadd.s32 %s79, 1
      %p83 = scmp.eq.s32.totalorder %s24, 1
      %p84 = scmp.ne.s32.totalorder %s79, %s81
      %p85 = scmp.eq.s32.totalorder %s24, 0
      %p86 = por %p84, %p85
      %p87 = scmp.ne.s32.totalorder %s79, %s81
      %p88 = scmp.eq.s32.totalorder %s29, 1
      %p89 = por %p87, %p88
      %p90 = scmp.ne.s32.totalorder %s81, %s82
      %p91 = scmp.eq.s32.totalorder %s29, 0
      %p92 = por %p90, %p91
      %p93 = scmp.ne.s32.totalorder %s81, %s82
      %p94 = scmp.eq.s32.totalorder %s30, 1
      %p95 = por %p93, %p94
      %p97 = scmp.ne.s32.totalorder %s82, %s96
      %p98 = scmp.eq.s32.totalorder %s30, 0
      %p99 = por %p97, %p98
      %s101 = sadd.s32 %s100, 1
      %p104 = scmp.eq.s32.totalorder %s24, 1
      %p105 = scmp.ne.s32.totalorder %s100, %s102
      %p106 = scmp.eq.s32.totalorder %s24, 0
      %p107 = por %p105, %p106
      %p108 = scmp.ne.s32.totalorder %s100, %s102
      %p109 = scmp.eq.s32.totalorder %s29, 1
      %p110 = por %p108, %p109
      %p111 = scmp.ne.s32.totalorder %s102, %s103
      %p112 = scmp.eq.s32.totalorder %s29, 0
      %p113 = por %p111, %p112
      %p114 = scmp.ne.s32.totalorder %s102, %s103
      %p115 = scmp.eq.s32.totalorder %s30, 1
      %p116 = por %p114, %p115
      %p118 = scmp.ne.s32.totalorder %s103, %s117
      %p119 = scmp.eq.s32.totalorder %s30, 0
      %p120 = por %p118, %p119
      %s122 = sadd.s32 %s121, 1
      %p125 = scmp.eq.s32.totalorder %s24, 1
      %p126 = scmp.ne.s32.totalorder %s121, %s123
      %p127 = scmp.eq.s32.totalorder %s24, 0
      %p128 = por %p126, %p127
      %p129 = scmp.ne.s32.totalorder %s121, %s123
      %p130 = scmp.eq.s32.totalorder %s29, 1
      %p131 = por %p129, %p130
      %p132 = scmp.ne.s32.totalorder %s123, %s124
      %p133 = scmp.eq.s32.totalorder %s29, 0
      %p134 = por %p132, %p133
      %p135 = scmp.ne.s32.totalorder %s123, %s124
      %p136 = scmp.eq.s32.totalorder %s30, 1
      %p137 = por %p135, %p136
      %p139 = scmp.ne.s32.totalorder %s124, %s138
      %p140 = scmp.eq.s32.totalorder %s30, 0
      %p141 = por %p139, %p140
      %s143 = sadd.s32 %s142, 1
      %p146 = scmp.eq.s32.totalorder %s24, 1
      %p147 = scmp.ne.s32.totalorder %s142, %s144
      %p148 = scmp.eq.s32.totalorder %s24, 0
      %p149 = por %p147, %p148
      %p150 = scmp.ne.s32.totalorder %s142, %s144
      %p151 = scmp.eq.s32.totalorder %s29, 1
      %p152 = por %p150, %p151
      %p153 = scmp.ne.s32.totalorder %s144, %s145
      %p154 = scmp.eq.s32.totalorder %s29, 0
      %p155 = por %p153, %p154
      %p156 = scmp.ne.s32.totalorder %s144, %s145
      %p157 = scmp.eq.s32.totalorder %s30, 1
      %p158 = por %p156, %p157
      %p160 = scmp.ne.s32.totalorder %s145, %s159
      %p161 = scmp.eq.s32.totalorder %s30, 0
      %p162 = por %p160, %p161
      %s164 = sadd.s32 %s163, 1
      %p167 = scmp.eq.s32.totalorder %s24, 1
      %p168 = scmp.ne.s32.totalorder %s163, %s165
      %p169 = scmp.eq.s32.totalorder %s24, 0
      %p170 = por %p168, %p169
      %p171 = scmp.ne.s32.totalorder %s163, %s165
      %p172 = scmp.eq.s32.totalorder %s29, 1
      %p173 = por %p171, %p172
      %p174 = scmp.ne.s32.totalorder %s165, %s166
      %p175 = scmp.eq.s32.totalorder %s29, 0
      %p176 = por %p174, %p175
      %p177 = scmp.ne.s32.totalorder %s165, %s166
      %p178 = scmp.eq.s32.totalorder %s30, 1
      %p179 = por %p177, %p178
      %p181 = scmp.ne.s32.totalorder %s166, %s180
      %p182 = scmp.eq.s32.totalorder %s30, 0
      %p183 = por %p181, %p182
      %s185 = sadd.s32 %s184, 1
      %p188 = scmp.eq.s32.totalorder %s24, 1
      %p189 = scmp.ne.s32.totalorder %s184, %s186
      %p190 = scmp.eq.s32.totalorder %s24, 0
      %p191 = por %p189, %p190
      %p192 = scmp.ne.s32.totalorder %s184, %s186
      %p193 = scmp.eq.s32.totalorder %s29, 1
      %p194 = por %p192, %p193
      %p195 = scmp.ne.s32.totalorder %s186, %s187
      %p196 = scmp.eq.s32.totalorder %s29, 0
      %p197 = por %p195, %p196
      %p198 = scmp.ne.s32.totalorder %s186, %s187
      %p199 = scmp.eq.s32.totalorder %s30, 1
      %p200 = por %p198, %p199
      %p202 = scmp.ne.s32.totalorder %s187, %s201
      %p203 = scmp.eq.s32.totalorder %s30, 0
      %p204 = por %p202, %p203
      %s206 = sadd.s32 %s205, 1
      %p209 = scmp.eq.s32.totalorder %s24, 1
      %p210 = scmp.ne.s32.totalorder %s205, %s207
      %p211 = scmp.eq.s32.totalorder %s24, 0
      %p212 = por %p210, %p211
      %p213 = scmp.ne.s32.totalorder %s205, %s207
      %p214 = scmp.eq.s32.totalorder %s29, 1
      %p215 = por %p213, %p214
      %p216 = scmp.ne.s32.totalorder %s207, %s208
      %p217 = scmp.eq.s32.totalorder %s29, 0
      %p218 = por %p216, %p217
      %p219 = scmp.ne.s32.totalorder %s207, %s208
      %p220 = scmp.eq.s32.totalorder %s30, 1
      %p221 = por %p219, %p220
      %p223 = scmp.ne.s32.totalorder %s208, %s222
      %p224 = scmp.eq.s32.totalorder %s30, 0
      %p225 = por %p223, %p224
      %s227 = sadd.s32 %s226, 1
      %p230 = scmp.eq.s32.totalorder %s24, 1
      %p231 = scmp.ne.s32.totalorder %s226, %s228
      %p232 = scmp.eq.s32.totalorder %s24, 0
      %p233 = por %p231, %p232
      %p234 = scmp.ne.s32.totalorder %s226, %s228
      %p235 = scmp.eq.s32.totalorder %s29, 1
      %p236 = por %p234, %p235
      %p237 = scmp.ne.s32.totalorder %s228, %s229
      %p238 = scmp.eq.s32.totalorder %s29, 0
      %p239 = por %p237, %p238
      %p240 = scmp.ne.s32.totalorder %s228, %s229
      %p241 = scmp.eq.s32.totalorder %s30, 1
      %p242 = por %p240, %p241
      %p244 = scmp.ne.s32.totalorder %s229, %s243
      %p245 = scmp.eq.s32.totalorder %s30, 0
      %p246 = por %p244, %p245
      %s248 = sadd.s32 %s247, 1
      %p251 = scmp.eq.s32.totalorder %s24, 1
      %p252 = scmp.ne.s32.totalorder %s247, %s249
      %p253 = scmp.eq.s32.totalorder %s24, 0
      %p254 = por %p252, %p253
      %p255 = scmp.ne.s32.totalorder %s247, %s249
      %p256 = scmp.eq.s32.totalorder %s29, 1
      %p257 = por %p255, %p256
      %p258 = scmp.ne.s32.totalorder %s249, %s250
      %p259 = scmp.eq.s32.totalorder %s29, 0
      %p260 = por %p258, %p259
      %p261 = scmp.ne.s32.totalorder %s249, %s250
      %p262 = scmp.eq.s32.totalorder %s30, 1
      %p263 = por %p261, %p262
      %p265 = scmp.ne.s32.totalorder %s250, %s264
      %p266 = scmp.eq.s32.totalorder %s30, 0
      %p267 = por %p265, %p266
      %s269 = sadd.s32 %s268, 1
      %p272 = scmp.eq.s32.totalorder %s24, 1
      %p273 = scmp.ne.s32.totalorder %s268, %s270
      %p274 = scmp.eq.s32.totalorder %s24, 0
      %p275 = por %p273, %p274
      %p276 = scmp.ne.s32.totalorder %s268, %s270
      %p277 = scmp.eq.s32.totalorder %s29, 1
      %p278 = por %p276, %p277
      %p279 = scmp.ne.s32.totalorder %s270, %s271
      %p280 = scmp.eq.s32.totalorder %s29, 0
      %p281 = por %p279, %p280
      %p282 = scmp.ne.s32.totalorder %s270, %s271
      %p283 = scmp.eq.s32.totalorder %s30, 1
      %p284 = por %p282, %p283
      %p286 = scmp.ne.s32.totalorder %s271, %s285
      %p287 = scmp.eq.s32.totalorder %s30, 0
      %p288 = por %p286, %p287
      %s290 = sadd.s32 %s289, 1
      %p293 = scmp.eq.s32.totalorder %s24, 1
      %p294 = scmp.ne.s32.totalorder %s289, %s291
      %p295 = scmp.eq.s32.totalorder %s24, 0
      %p296 = por %p294, %p295
      %p297 = scmp.ne.s32.totalorder %s289, %s291
      %p298 = scmp.eq.s32.totalorder %s29, 1
      %p299 = por %p297, %p298
      %p300 = scmp.ne.s32.totalorder %s291, %s292
      %p301 = scmp.eq.s32.totalorder %s29, 0
      %p302 = por %p300, %p301
      %p303 = scmp.ne.s32.totalorder %s291, %s292
      %p304 = scmp.eq.s32.totalorder %s30, 1
      %p305 = por %p303, %p304
      %p307 = scmp.ne.s32.totalorder %s292, %s306
      %p308 = scmp.eq.s32.totalorder %s30, 0
      %p309 = por %p307, %p308
      %s311 = sadd.s32 %s310, 1
      %p314 = scmp.eq.s32.totalorder %s24, 1
      %p315 = scmp.ne.s32.totalorder %s310, %s312
      %p316 = scmp.eq.s32.totalorder %s24, 0
      %p317 = por %p315, %p316
      %p318 = scmp.ne.s32.totalorder %s310, %s312
      %p319 = scmp.eq.s32.totalorder %s29, 1
      %p320 = por %p318, %p319
      %p321 = scmp.ne.s32.totalorder %s312, %s313
      %p322 = scmp.eq.s32.totalorder %s29, 0
      %p323 = por %p321, %p322
      %p324 = scmp.ne.s32.totalorder %s312, %s313
      %p325 = scmp.eq.s32.totalorder %s30, 1
      %p326 = por %p324, %p325
      %p328 = scmp.ne.s32.totalorder %s313, %s327
      %p329 = scmp.eq.s32.totalorder %s30, 0
      %p330 = por %p328, %p329
      %s332 = sadd.s32 %s331, 1
      %p335 = scmp.eq.s32.totalorder %s24, 1
      %p336 = scmp.ne.s32.totalorder %s331, %s333
      %p337 = scmp.eq.s32.totalorder %s24, 0
      %p338 = por %p336, %p337
      %p339 = scmp.ne.s32.totalorder %s331, %s333
      %p340 = scmp.eq.s32.totalorder %s29, 1
      %p341 = por %p339, %p340
      %p342 = scmp.ne.s32.totalorder %s333, %s334
      %p343 = scmp.eq.s32.totalorder %s29, 0
      %p344 = por %p342, %p343
      %p345 = scmp.ne.s32.totalorder %s333, %s334
      %p346 = scmp.eq.s32.totalorder %s30, 1
      %p347 = por %p345, %p346
      %p349 = scmp.ne.s32.totalorder %s334, %s348
      %p350 = scmp.eq.s32.totalorder %s30, 0
      %p351 = por %p349, %p350
      %s352 = ssub.s32 %s24, %s31
      %p353 = scmp.eq.s32.totalorder %s352, 0
      %s355 = sadd.s32 %s354, 1
      %s356 = scalar_select %p353, %s354, %s355
      %p359 = pneg %p353
      %p360 = scmp.eq.s32.totalorder %s24, 1
      %p361 = por %p359, %p360
      %p362 = scmp.ne.s32.totalorder %s354, %s357
      %p363 = scmp.eq.s32.totalorder %s24, 0
      %p364 = por %p362, %p363
      %p365 = scmp.ne.s32.totalorder %s354, %s357
      %p366 = scmp.eq.s32.totalorder %s29, 1
      %p367 = por %p365, %p366
      %p368 = scmp.ne.s32.totalorder %s357, %s358
      %p369 = scmp.eq.s32.totalorder %s29, 0
      %p370 = por %p368, %p369
      %p371 = scmp.ne.s32.totalorder %s357, %s358
      %p372 = scmp.eq.s32.totalorder %s30, 1
      %p373 = por %p371, %p372
      %p375 = scmp.ne.s32.totalorder %s358, %s374
      %p376 = scmp.eq.s32.totalorder %s30, 0
      %p377 = por %p375, %p376
      %p378 = scmp.le.s32.totalorder 1, %s24
      %p379 = scmp.lt.s32.totalorder %s24, 3
      %p380 = pnand %p378, %p379
      %p381 = pneg %p380
      // Predicated region
      $region9: #{net_forward.1} parent=5 // pred_check
        _
      $region10: #{net_forward.1} parent=5 // pred_check_branch
        %383 = sbr.rel (%p380) target = $region12
      $region11: #{net_forward.1} parent=5 // pred_region
        %s384 = ssub.s32 %s24, 1
        // Predicated region
        $region13: #{net_forward.1} parent=11 // pred_check
          %p385 = pneg %p71
        $region14: #{net_forward.1} parent=11 // pred_check_branch
          %387 = sbr.rel (%p385) target = $region16
        $region15: #{net_forward.1} parent=11 // pred_region
          _
        $region16: #{net_forward.1} parent=11 // pred_fallthru
          _
        // Predicated region
        $region17: #{net_forward.1} parent=11 // pred_check
          %p388 = pneg %p92
        $region18: #{net_forward.1} parent=11 // pred_check_branch
          %390 = sbr.rel (%p388) target = $region20
        $region19: #{net_forward.1} parent=11 // pred_region
          _
        $region20: #{net_forward.1} parent=11 // pred_fallthru
          _
        // Predicated region
        $region21: #{net_forward.1} parent=11 // pred_check
          %p391 = pneg %p113
        $region22: #{net_forward.1} parent=11 // pred_check_branch
          %393 = sbr.rel (%p391) target = $region24
        $region23: #{net_forward.1} parent=11 // pred_region
          _
        $region24: #{net_forward.1} parent=11 // pred_fallthru
          _
        // Predicated region
        $region25: #{net_forward.1} parent=11 // pred_check
          %p394 = pneg %p134
        $region26: #{net_forward.1} parent=11 // pred_check_branch
          %396 = sbr.rel (%p394) target = $region28
        $region27: #{net_forward.1} parent=11 // pred_region
          _
        $region28: #{net_forward.1} parent=11 // pred_fallthru
          _
        // Predicated region
        $region29: #{net_forward.1} parent=11 // pred_check
          %p397 = pneg %p155
        $region30: #{net_forward.1} parent=11 // pred_check_branch
          %399 = sbr.rel (%p397) target = $region32
        $region31: #{net_forward.1} parent=11 // pred_region
          _
        $region32: #{net_forward.1} parent=11 // pred_fallthru
          _
        // Predicated region
        $region33: #{net_forward.1} parent=11 // pred_check
          %p400 = pneg %p176
        $region34: #{net_forward.1} parent=11 // pred_check_branch
          %402 = sbr.rel (%p400) target = $region36
        $region35: #{net_forward.1} parent=11 // pred_region
          _
        $region36: #{net_forward.1} parent=11 // pred_fallthru
          _
        // Predicated region
        $region37: #{net_forward.1} parent=11 // pred_check
          %p403 = pneg %p197
        $region38: #{net_forward.1} parent=11 // pred_check_branch
          %405 = sbr.rel (%p403) target = $region40
        $region39: #{net_forward.1} parent=11 // pred_region
          _
        $region40: #{net_forward.1} parent=11 // pred_fallthru
          _
        // Predicated region
        $region41: #{net_forward.1} parent=11 // pred_check
          %p406 = pneg %p218
        $region42: #{net_forward.1} parent=11 // pred_check_branch
          %408 = sbr.rel (%p406) target = $region44
        $region43: #{net_forward.1} parent=11 // pred_region
          _
        $region44: #{net_forward.1} parent=11 // pred_fallthru
          _
        // Predicated region
        $region45: #{net_forward.1} parent=11 // pred_check
          %p409 = pneg %p239
        $region46: #{net_forward.1} parent=11 // pred_check_branch
          %411 = sbr.rel (%p409) target = $region48
        $region47: #{net_forward.1} parent=11 // pred_region
          _
        $region48: #{net_forward.1} parent=11 // pred_fallthru
          _
        // Predicated region
        $region49: #{net_forward.1} parent=11 // pred_check
          %p412 = pneg %p260
        $region50: #{net_forward.1} parent=11 // pred_check_branch
          %414 = sbr.rel (%p412) target = $region52
        $region51: #{net_forward.1} parent=11 // pred_region
          _
        $region52: #{net_forward.1} parent=11 // pred_fallthru
          _
        // Predicated region
        $region53: #{net_forward.1} parent=11 // pred_check
          %p415 = pneg %p281
        $region54: #{net_forward.1} parent=11 // pred_check_branch
          %417 = sbr.rel (%p415) target = $region56
        $region55: #{net_forward.1} parent=11 // pred_region
          _
        $region56: #{net_forward.1} parent=11 // pred_fallthru
          _
        // Predicated region
        $region57: #{net_forward.1} parent=11 // pred_check
          %p418 = pneg %p302
        $region58: #{net_forward.1} parent=11 // pred_check_branch
          %420 = sbr.rel (%p418) target = $region60
        $region59: #{net_forward.1} parent=11 // pred_region
          _
        $region60: #{net_forward.1} parent=11 // pred_fallthru
          _
        // Predicated region
        $region61: #{net_forward.1} parent=11 // pred_check
          %p421 = pneg %p323
        $region62: #{net_forward.1} parent=11 // pred_check_branch
          %423 = sbr.rel (%p421) target = $region64
        $region63: #{net_forward.1} parent=11 // pred_region
          _
        $region64: #{net_forward.1} parent=11 // pred_fallthru
          _
        // Predicated region
        $region65: #{net_forward.1} parent=11 // pred_check
          %p424 = pneg %p344
        $region66: #{net_forward.1} parent=11 // pred_check_branch
          %426 = sbr.rel (%p424) target = $region68
        $region67: #{net_forward.1} parent=11 // pred_region
          _
        $region68: #{net_forward.1} parent=11 // pred_fallthru
          _
      $region12: #{net_forward.1} parent=5 // pred_fallthru
        _
      %p427 = scmp.lt.s32.totalorder %s24, 2
      // Predicated region
      $region69: #{net_forward.1} parent=5 // pred_check
        %p428 = pneg %p427
      $region70: #{net_forward.1} parent=5 // pred_check_branch
        %430 = sbr.rel (%p428) target = $region72
      $region71: #{net_forward.1} parent=5 // pred_region
        // Predicated region
        $region73: #{net_forward.1} parent=71 // pred_check
          %p431 = pneg %p44
        $region74: #{net_forward.1} parent=71 // pred_check_branch
          %433 = sbr.rel (%p431) target = $region76
        $region75: #{net_forward.1} parent=71 // pred_region
          %p434 = scmp.lt.s32.totalorder %s24, 1
          %s435 = scalar_select %p434, %s24, 1
          %s436 = smul.addr %s435, 4
          %s437 = smul.addr %s436, 4
          %s438 = scalar_lea.vmem %s0, %s437
        $region76: #{net_forward.1} parent=71 // pred_fallthru
          _
      $region72: #{net_forward.1} parent=5 // pred_fallthru
        _
      %p439 = scmp.le.s32.totalorder 1, %s24
      %p440 = scmp.lt.s32.totalorder %s24, 3
      %p441 = pnand %p439, %p440
      %p442 = pneg %p441
      // Predicated region
      $region77: #{net_forward.1} parent=5 // pred_check
        _
      $region78: #{net_forward.1} parent=5 // pred_check_branch
        %444 = sbr.rel (%p441) target = $region80
      $region79: #{net_forward.1} parent=5 // pred_region
        %s445 = ssub.s32 %s24, 1
        %p446 = scmp.lt.s32.totalorder %s29, 1
        %s447 = scalar_select %p446, %s29, 1
        %s448 = smul.addr %s447, 4
        %s449 = smul.addr %s448, 4
        %s450 = scalar_lea.vmem %s0, %s449
        %p451 = pneg %p50
        %p452 = pneg %p47
        %p453 = pneg %p71
        %p454 = pneg %p68
        %p455 = pneg %p92
        %p456 = pneg %p89
        %p457 = pneg %p113
        %p458 = pneg %p110
        %p459 = pneg %p134
        %p460 = pneg %p131
        %p461 = pneg %p155
        %p462 = pneg %p152
        %p463 = pneg %p176
        %p464 = pneg %p173
        %p465 = pneg %p197
        %p466 = pneg %p194
        %p467 = pneg %p218
        %p468 = pneg %p215
        %p469 = pneg %p239
        %p470 = pneg %p236
        %p471 = pneg %p260
        %p472 = pneg %p257
        %p473 = pneg %p281
        %p474 = pneg %p278
        %p475 = pneg %p302
        %p476 = pneg %p299
        %p477 = pneg %p323
        %p478 = pneg %p320
        %p479 = pneg %p344
        %p480 = pneg %p341
        %p481 = pneg %p370
        %p482 = pneg %p367
        %s483 = sand.u32 %s357, 1
        %s484 = scalar_lea.sflag [#allocation7], %s483
        %s485 = sand.u32 %s357, 1
        %s486 = scalar_lea.vmem [#allocation6], %s485
        %p487 = scmp.lt.s32.totalorder %s29, 1
        %s488 = scalar_select %p487, %s29, 1
        %s489 = smul.addr %s488, 4
        %s490 = smul.addr %s489, 4
        %s491 = scalar_lea.vmem %s0, %s490
        %v493 = vld [vmem:[%s491] sm:$0xf]
        %v494 = vld [vmem:[%s491 + $0x4] sm:$0xf]
        %v495 = vld [vmem:[%s491 + $0x8] sm:$0xf]
        %v496 = vld [vmem:[%s491 + $0xc] sm:$0xf]
        %vm497 = vcmask 5120
        %498 = vst.msk [vmem:[#allocation2] sm:$0x3f] %vm497, 0.0
        %s499 = scalar_lea.vmem [#allocation2], 40
        %500 = vst.msk [vmem:[%s499] sm:$0x3f] %vm497, 0.0
        %vm501 = vcmask 0
        %502 = vst.msk [vmem:[#allocation2] sm:$0x1] %vm501, 0.0
        %503 = vst.msk [vmem:[#allocation2 + $0x8] sm:$0x1] %vm501, 0.0
        %504 = vst.msk [vmem:[#allocation2 + $0x10] sm:$0x1] %vm501, 0.0
        %505 = vst.msk [vmem:[#allocation2 + $0x18] sm:$0x1] %vm501, 0.0
        %506 = vst.msk [vmem:[#allocation2 + $0x20] sm:$0x1] %vm501, 0.0
        %507 = vst.msk [vmem:[#allocation2 + $0x28] sm:$0x1] %vm501, 0.0
        %508 = vst.msk [vmem:[#allocation2 + $0x5] sm:$0x1] %vm501, 0.0
        %509 = vst.msk [vmem:[#allocation2 + $0xd] sm:$0x1] %vm501, 0.0
        %510 = vst.msk [vmem:[#allocation2 + $0x15] sm:$0x1] %vm501, 0.0
        %511 = vst.msk [vmem:[#allocation2 + $0x1d] sm:$0x1] %vm501, 0.0
        %512 = vst.msk [vmem:[#allocation2 + $0x25] sm:$0x1] %vm501, 0.0
        %513 = vst.msk [vmem:[#allocation2 + $0x2d] sm:$0x1] %vm501, 0.0
        %s514 = scalar_lea.vmem [#allocation2], 8
        %vm515 = vcmask 3072
        %516 = vst.msk [vmem:[%s514 + $0x1] sm:$0xf] %vm515, %v493
        %517 = vst.msk [vmem:[%s514 + $0x9] sm:$0xf] %vm515, %v494
        %518 = vst.msk [vmem:[%s514 + $0x11] sm:$0xf] %vm515, %v495
        %519 = vst.msk [vmem:[%s514 + $0x19] sm:$0xf] %vm515, %v496
        %v520 = vld [vmem:[#allocation2] sm:$0x3f]
        %v521 = vld [vmem:[#allocation2 + $0x8] sm:$0x3f]
        %v522 = vld [vmem:[#allocation2 + $0x10] sm:$0x3f]
        %v523 = vld [vmem:[#allocation2 + $0x18] sm:$0x3f]
        %v524 = vld [vmem:[#allocation2 + $0x20] sm:$0x3f]
        %v525 = vld [vmem:[#allocation2 + $0x28] sm:$0x3f]
        %v526 = vld [vmem:[%s1] sm:$0x1]
        %528 = vset.pattern.permute.xlu0 0
        %529 = vperm.xlu0 %528, %v520
        %v530 = vpop.permute.xlu0 %529
        %533 = vset.pattern.permute.xlu0 0
        %534 = vperm.xlu0 %533, %v521
        %v535 = vpop.permute.xlu0 %534
        %538 = vset.pattern.permute.xlu0 0
        %539 = vperm.xlu0 %538, %v522
        %v540 = vpop.permute.xlu0 %539
        %543 = vset.pattern.permute.xlu0 0
        %544 = vperm.xlu0 %543, %v523
        %v545 = vpop.permute.xlu0 %544
        %548 = vset.pattern.permute.xlu0 0
        %549 = vperm.xlu0 %548, %v524
        %v550 = vpop.permute.xlu0 %549
        %v552 = vperm.slane %v526, 0
        %v553 = vmul.f32 %v530, %v552
        %v554 = vmul.f32 %v535, %v552
        %v555 = vmul.f32 %v540, %v552
        %v556 = vmul.f32 %v545, %v552
        %v557 = vmul.f32 %v550, %v552
        %v558 = vadd.f32 %v553, 0.0
        %v559 = vadd.f32 %v554, 0.0
        %v560 = vadd.f32 %v555, 0.0
        %v561 = vadd.f32 %v556, 0.0
        %v562 = vadd.f32 %v557, 0.0
        %v563 = vld [vmem:[%s1 + $0x1] sm:$0x1]
        %v564 = vperm.slane %v563, 0
        %v565 = vmul.f32 %v530, %v564
        %v566 = vmul.f32 %v535, %v564
        %v567 = vmul.f32 %v540, %v564
        %v568 = vmul.f32 %v545, %v564
        %v569 = vmul.f32 %v550, %v564
        %v575 = vrot.slane %v565, 1
        %v576 = vrot.slane %v566, 1
        %v577 = vrot.slane %v567, 1
        %v578 = vrot.slane %v568, 1
        %v579 = vrot.slane %v569, 1
        %v585 = vadd.f32 %v558, %v575
        %v586 = vadd.f32 %v559, %v576
        %v587 = vadd.f32 %v560, %v577
        %v588 = vadd.f32 %v561, %v578
        %v589 = vadd.f32 %v562, %v579
        %v590 = vld [vmem:[%s1 + $0x2] sm:$0x1]
        %592 = vset.pattern.permute.xlu0 0
        %593 = vperm.xlu0 %592, %v525
        %v594 = vpop.permute.xlu0 %593
        %v596 = vperm.slane %v590, 0
        %v597 = vmul.f32 %v535, %v596
        %v598 = vmul.f32 %v540, %v596
        %v599 = vmul.f32 %v545, %v596
        %v600 = vmul.f32 %v550, %v596
        %v601 = vmul.f32 %v594, %v596
        %v602 = vadd.f32 %v585, %v597
        %v603 = vadd.f32 %v586, %v598
        %v604 = vadd.f32 %v587, %v599
        %v605 = vadd.f32 %v588, %v600
        %v606 = vadd.f32 %v589, %v601
        %v607 = vld [vmem:[%s1 + $0x3] sm:$0x1]
        %v608 = vperm.slane %v607, 0
        %v609 = vmul.f32 %v535, %v608
        %v610 = vmul.f32 %v540, %v608
        %v611 = vmul.f32 %v545, %v608
        %v612 = vmul.f32 %v550, %v608
        %v613 = vmul.f32 %v594, %v608
        %v619 = vrot.slane %v609, 1
        %v620 = vrot.slane %v610, 1
        %v621 = vrot.slane %v611, 1
        %v622 = vrot.slane %v612, 1
        %v623 = vrot.slane %v613, 1
        %v629 = vadd.f32 %v602, %v619
        %v630 = vadd.f32 %v603, %v620
        %v631 = vadd.f32 %v604, %v621
        %v632 = vadd.f32 %v605, %v622
        %v633 = vadd.f32 %v606, %v623
        %v634 = vld [vmem:[%s2] sm:$0x1]
        %v636 = vperm.slane %v634, 0
        %v638 = vadd.f32 %v629, %v636
        %v639 = vadd.f32 %v630, %v636
        %v640 = vadd.f32 %v631, %v636
        %v641 = vadd.f32 %v632, %v636
        %v642 = vadd.f32 %v633, %v636
        %v643 = vmax.f32 %v638, 0.0
        %v644 = vmax.f32 %v639, 0.0
        %v645 = vmax.f32 %v640, 0.0
        %v646 = vmax.f32 %v641, 0.0
        %v647 = vmax.f32 %v642, 0.0
        %vm648 = vcmask 257024
        %vm649 = vsmask.f32 3328
        %vm650 = vmand %vm648, %vm649
        %v651 = vld [vmem:[#allocation3] sm:$0xf]
        %v652 = vsel %vm650, 0, %v651
        %653 = vst [vmem:[#allocation3] sm:$0xf] %v652
        %s654 = scalar_lea.vmem [#allocation3], 24
        %v655 = vld [vmem:[%s654] sm:$0xf]
        %v656 = vsel %vm650, 0, %v655
        %657 = vst [vmem:[%s654] sm:$0xf] %v656
        %vm658 = vcmask 253952
        %vm659 = vsmask.f32 256
        %vm660 = vmand %vm658, %vm659
        %v661 = vld [vmem:[#allocation3] sm:$0x1]
        %v662 = vsel %vm660, 0, %v661
        %663 = vst [vmem:[#allocation3] sm:$0x1] %v662
        %v664 = vld [vmem:[#allocation3 + $0x4] sm:$0x1]
        %v665 = vsel %vm660, 0, %v664
        %666 = vst [vmem:[#allocation3 + $0x4] sm:$0x1] %v665
        %v667 = vld [vmem:[#allocation3 + $0x8] sm:$0x1]
        %v668 = vsel %vm660, 0, %v667
        %669 = vst [vmem:[#allocation3 + $0x8] sm:$0x1] %v668
        %v670 = vld [vmem:[#allocation3 + $0xc] sm:$0x1]
        %v671 = vsel %vm660, 0, %v670
        %672 = vst [vmem:[#allocation3 + $0xc] sm:$0x1] %v671
        %v673 = vld [vmem:[#allocation3 + $0x10] sm:$0x1]
        %v674 = vsel %vm660, 0, %v673
        %675 = vst [vmem:[#allocation3 + $0x10] sm:$0x1] %v674
        %v676 = vld [vmem:[#allocation3 + $0x14] sm:$0x1]
        %v677 = vsel %vm660, 0, %v676
        %678 = vst [vmem:[#allocation3 + $0x14] sm:$0x1] %v677
        %v679 = vld [vmem:[#allocation3 + $0x18] sm:$0x1]
        %v680 = vsel %vm660, 0, %v679
        %681 = vst [vmem:[#allocation3 + $0x18] sm:$0x1] %v680
        %vm682 = vcmask 257027
        %vm683 = vmand %vm682, %vm649
        %v684 = vld [vmem:[#allocation3] sm:$0x8]
        %v685 = vsel %vm683, 0, %v684
        %686 = vst [vmem:[#allocation3] sm:$0x8] %v685
        %v687 = vld [vmem:[#allocation3 + $0x4] sm:$0x8]
        %v688 = vsel %vm683, 0, %v687
        %689 = vst [vmem:[#allocation3 + $0x4] sm:$0x8] %v688
        %v690 = vld [vmem:[#allocation3 + $0x8] sm:$0x8]
        %v691 = vsel %vm683, 0, %v690
        %692 = vst [vmem:[#allocation3 + $0x8] sm:$0x8] %v691
        %v693 = vld [vmem:[#allocation3 + $0xc] sm:$0x8]
        %v694 = vsel %vm683, 0, %v693
        %695 = vst [vmem:[#allocation3 + $0xc] sm:$0x8] %v694
        %v696 = vld [vmem:[#allocation3 + $0x10] sm:$0x8]
        %v697 = vsel %vm683, 0, %v696
        %698 = vst [vmem:[#allocation3 + $0x10] sm:$0x8] %v697
        %v699 = vld [vmem:[#allocation3 + $0x14] sm:$0x8]
        %v700 = vsel %vm683, 0, %v699
        %701 = vst [vmem:[#allocation3 + $0x14] sm:$0x8] %v700
        %v702 = vld [vmem:[#allocation3 + $0x18] sm:$0x8]
        %v703 = vsel %vm683, 0, %v702
        %704 = vst [vmem:[#allocation3 + $0x18] sm:$0x8] %v703
        %v705 = vpack.c.bf16 %v643, %v643
        %v706 = vpack.c.bf16 %v644, %v644
        %v707 = vpack.c.bf16 %v645, %v645
        %v708 = vpack.c.bf16 %v646, %v646
        %v709 = vpack.c.bf16 %v647, %v647
        %v711 = vshrl.u32 %v705, 16
        %v713 = vrot.slane %v711, 7
        %v714 = vshll.u32 %v705, 16
        %v716 = vor.u32 %v713, %v714
        %v718 = vshrl.u32 %v706, 16
        %v720 = vrot.slane %v718, 7
        %v721 = vshll.u32 %v706, 16
        %v723 = vor.u32 %v720, %v721
        %v725 = vshrl.u32 %v707, 16
        %v727 = vrot.slane %v725, 7
        %v728 = vshll.u32 %v707, 16
        %v730 = vor.u32 %v727, %v728
        %v732 = vshrl.u32 %v708, 16
        %v734 = vrot.slane %v732, 7
        %v735 = vshll.u32 %v708, 16
        %v737 = vor.u32 %v734, %v735
        %v739 = vshrl.u32 %v709, 16
        %v741 = vrot.slane %v739, 7
        %v742 = vshll.u32 %v709, 16
        %v744 = vor.u32 %v741, %v742
        %s750 = scalar_lea.vmem [#allocation3], 4
        %vm751 = vcmask 256000
        %vm752 = vsmask.f32 7938
        %vm753 = vmand %vm751, %vm752
        %v754 = vld [vmem:[%s750] sm:$0x7]
        %v755 = vsel %vm753, %v716, %v754
        %756 = vst [vmem:[%s750] sm:$0x7] %v755
        %v757 = vld [vmem:[%s750 + $0x4] sm:$0x7]
        %v758 = vsel %vm753, %v723, %v757
        %759 = vst [vmem:[%s750 + $0x4] sm:$0x7] %v758
        %v760 = vld [vmem:[%s750 + $0x8] sm:$0x7]
        %v761 = vsel %vm753, %v730, %v760
        %762 = vst [vmem:[%s750 + $0x8] sm:$0x7] %v761
        %v763 = vld [vmem:[%s750 + $0xc] sm:$0x7]
        %v764 = vsel %vm753, %v737, %v763
        %765 = vst [vmem:[%s750 + $0xc] sm:$0x7] %v764
        %v766 = vld [vmem:[%s750 + $0x10] sm:$0x7]
        %v767 = vsel %vm753, %v744, %v766
        %768 = vst [vmem:[%s750 + $0x10] sm:$0x7] %v767
        %v769 = vld [vmem:[#allocation3] sm:$0xf]
        %v770 = vld [vmem:[#allocation3 + $0x4] sm:$0xf]
        %v771 = vld [vmem:[#allocation3 + $0x8] sm:$0xf]
        %v772 = vld [vmem:[#allocation3 + $0xc] sm:$0xf]
        %v773 = vld [vmem:[#allocation3 + $0x10] sm:$0xf]
        %v774 = vld [vmem:[#allocation3 + $0x14] sm:$0xf]
        %v775 = vld [vmem:[#allocation3 + $0x18] sm:$0xf]
        %v782 = vunpack.c.l.b16 %v769
        %v783 = vunpack.c.l.b16 %v770
        %v784 = vunpack.c.l.b16 %v771
        %v785 = vunpack.c.l.b16 %v772
        %v786 = vunpack.c.l.b16 %v773
        %v787 = vunpack.c.l.b16 %v774
        %v788 = vpack.c.b16 %v782, %v782
        %v789 = vpack.c.b16 %v783, %v783
        %v790 = vpack.c.b16 %v784, %v784
        %v791 = vpack.c.b16 %v785, %v785
        %v792 = vpack.c.b16 %v786, %v786
        %v793 = vpack.c.b16 %v787, %v787
        %v795 = vshrl.u32 %v788, 16
        %v797 = vshll.u32 %v788, 16
        %v799 = vrot.slane %v797, 1
        %v800 = vor.u32 %v795, %v799
        %v802 = vshrl.u32 %v789, 16
        %v804 = vshll.u32 %v789, 16
        %v806 = vrot.slane %v804, 1
        %v807 = vor.u32 %v802, %v806
        %v809 = vshrl.u32 %v790, 16
        %v811 = vshll.u32 %v790, 16
        %v813 = vrot.slane %v811, 1
        %v814 = vor.u32 %v809, %v813
        %v816 = vshrl.u32 %v791, 16
        %v818 = vshll.u32 %v791, 16
        %v820 = vrot.slane %v818, 1
        %v821 = vor.u32 %v816, %v820
        %v823 = vshrl.u32 %v792, 16
        %v825 = vshll.u32 %v792, 16
        %v827 = vrot.slane %v825, 1
        %v828 = vor.u32 %v823, %v827
        %v830 = vshrl.u32 %v793, 16
        %v832 = vshll.u32 %v793, 16
        %v834 = vrot.slane %v832, 1
        %v835 = vor.u32 %v830, %v834
        %836 = vrot.lane.b32.xlu0 %v800, 32
        %v837 = vpop.permute.xlu0 %836
        %838 = vrot.lane.b32.xlu0 %v807, 32
        %v839 = vpop.permute.xlu0 %838
        %840 = vrot.lane.b32.xlu0 %v814, 32
        %v841 = vpop.permute.xlu0 %840
        %842 = vrot.lane.b32.xlu0 %v821, 32
        %v843 = vpop.permute.xlu0 %842
        %844 = vrot.lane.b32.xlu0 %v828, 32
        %v845 = vpop.permute.xlu0 %844
        %846 = vrot.lane.b32.xlu0 %v835, 32
        %v847 = vpop.permute.xlu0 %846
        %v849 = vunpack.c.l.b16 %v775
        %v850 = vpack.c.b16 %v849, %v849
        %851 = vrot.lane.b32.xlu0 %v789, 64
        %v852 = vpop.permute.xlu0 %851
        %853 = vrot.lane.b32.xlu0 %v790, 64
        %v854 = vpop.permute.xlu0 %853
        %855 = vrot.lane.b32.xlu0 %v791, 64
        %v856 = vpop.permute.xlu0 %855
        %857 = vrot.lane.b32.xlu0 %v792, 64
        %v858 = vpop.permute.xlu0 %857
        %859 = vrot.lane.b32.xlu0 %v793, 64
        %v860 = vpop.permute.xlu0 %859
        %861 = vrot.lane.b32.xlu0 %v850, 64
        %v862 = vpop.permute.xlu0 %861
        %v864 = vshrl.u32 %v850, 16
        %v866 = vshll.u32 %v850, 16
        %v868 = vrot.slane %v866, 1
        %v869 = vor.u32 %v864, %v868
        %870 = vrot.lane.b32.xlu0 %v807, 96
        %v871 = vpop.permute.xlu0 %870
        %872 = vrot.lane.b32.xlu0 %v814, 96
        %v873 = vpop.permute.xlu0 %872
        %874 = vrot.lane.b32.xlu0 %v821, 96
        %v875 = vpop.permute.xlu0 %874
        %876 = vrot.lane.b32.xlu0 %v828, 96
        %v877 = vpop.permute.xlu0 %876
        %878 = vrot.lane.b32.xlu0 %v835, 96
        %v879 = vpop.permute.xlu0 %878
        %880 = vrot.lane.b32.xlu0 %v869, 96
        %v881 = vpop.permute.xlu0 %880
        %vm882 = vcmask 261120
        %v885 = vsel %vm882, %v769, %v837
        %v888 = vsel %vm882, %v770, %v839
        %v891 = vsel %vm882, %v771, %v841
        %v894 = vsel %vm882, %v772, %v843
        %v897 = vsel %vm882, %v773, %v845
        %v900 = vsel %vm882, %v774, %v847
        %vm901 = vcmask 523264
        %v903 = vsel %vm901, %v885, %v852
        %v905 = vsel %vm901, %v888, %v854
        %v907 = vsel %vm901, %v891, %v856
        %v909 = vsel %vm901, %v894, %v858
        %v911 = vsel %vm901, %v897, %v860
        %v913 = vsel %vm901, %v900, %v862
        %vm914 = vcmask 785408
        %v916 = vsel %vm914, %v903, %v871
        %v918 = vsel %vm914, %v905, %v873
        %v920 = vsel %vm914, %v907, %v875
        %v922 = vsel %vm914, %v909, %v877
        %v924 = vsel %vm914, %v911, %v879
        %v926 = vsel %vm914, %v913, %v881
        %v933 = vrot.slane %v916, 1
        %v934 = vrot.slane %v916, 2
        %v935 = vrot.slane %v918, 1
        %v936 = vrot.slane %v918, 2
        %v937 = vrot.slane %v920, 1
        %v938 = vrot.slane %v920, 2
        %v939 = vrot.slane %v922, 1
        %v940 = vrot.slane %v922, 2
        %v941 = vrot.slane %v924, 1
        %v942 = vrot.slane %v924, 2
        %v943 = vrot.slane %v926, 1
        %v944 = vrot.slane %v926, 2
        %v945 = vld [vmem:[%s3] sm:$0xf]
        %v946 = vld [vmem:[%s3 + $0x4] sm:$0xf]
        %v947 = vld [vmem:[%s3 + $0x8] sm:$0xf]
        %v948 = vld [vmem:[%s3 + $0xc] sm:$0xf]
        %v949 = vld [vmem:[%s3 + $0x10] sm:$0xf]
        %v950 = vld [vmem:[%s3 + $0x14] sm:$0xf]
        %v951 = vld [vmem:[%s3 + $0x18] sm:$0xf]
        %v952 = vld [vmem:[%s3 + $0x1c] sm:$0xf]
        %v953 = vld [vmem:[%s3 + $0x20] sm:$0xf]
        %v954 = vld [vmem:[%s3 + $0x24] sm:$0xf]
        %v955 = vld [vmem:[%s3 + $0x28] sm:$0xf]
        %v956 = vld [vmem:[%s3 + $0x2c] sm:$0xf]
        %v957 = vld [vmem:[%s3 + $0x30] sm:$0xf]
        %v958 = vld [vmem:[%s3 + $0x34] sm:$0xf]
        %v959 = vld [vmem:[%s3 + $0x38] sm:$0xf]
        %v960 = vld [vmem:[%s3 + $0x3c] sm:$0xf]
        %v961 = vld [vmem:[%s4] sm:$0x1]
        %v963 = vperm.slane %v961, 0
        %965 = vst [vmem:[#allocation1] ss:$9 sm:$0xff] %v916
        %s967 = scalar_lea.vmem [#allocation1], 1
        %968 = vst [vmem:[%s967] ss:$9 sm:$0xff] %v933
        %s970 = scalar_lea.vmem [#allocation1], 2
        %971 = vst [vmem:[%s970] ss:$9 sm:$0xff] %v934
        %s972 = scalar_lea.vmem [#allocation1], 3
        %973 = vst [vmem:[%s972] ss:$9 sm:$0xff] %v918
        %s975 = scalar_lea.vmem [#allocation1], 4
        %976 = vst [vmem:[%s975] ss:$9 sm:$0xff] %v935
        %s978 = scalar_lea.vmem [#allocation1], 5
        %979 = vst [vmem:[%s978] ss:$9 sm:$0xff] %v936
        %s980 = scalar_lea.vmem [#allocation1], 6
        %981 = vst [vmem:[%s980] ss:$9 sm:$0xff] %v920
        %s983 = scalar_lea.vmem [#allocation1], 7
        %984 = vst [vmem:[%s983] ss:$9 sm:$0xff] %v937
        %v985 = vld [vmem:[#allocation1] sm:$0xff]
        %987 = vst [vmem:[#allocation1] ss:$9 sm:$0xff] %v938
        %988 = vst [vmem:[%s967] ss:$9 sm:$0xff] %v922
        %990 = vst [vmem:[%s970] ss:$9 sm:$0xff] %v939
        %992 = vst [vmem:[%s972] ss:$9 sm:$0xff] %v940
        %993 = vst [vmem:[%s975] ss:$9 sm:$0xff] %v924
        %995 = vst [vmem:[%s978] ss:$9 sm:$0xff] %v941
        %997 = vst [vmem:[%s980] ss:$9 sm:$0xff] %v942
        %998 = vst [vmem:[%s983] ss:$9 sm:$0xff] %v926
        %v999 = vld [vmem:[#allocation1] sm:$0xff]
        %1001 = vst [vmem:[#allocation1] ss:$9 sm:$0xff] %v943
        %1003 = vst [vmem:[%s967] ss:$9 sm:$0xff] %v944
        %v1004 = vld [vmem:[#allocation1] sm:$0xff]
        %v1024 = vunpack.c.l.b16 %v945
        %v1025 = vunpack.c.l.b16 %v946
        %v1026 = vunpack.c.l.b16 %v947
        %v1027 = vunpack.c.l.b16 %v948
        %v1028 = vunpack.c.l.b16 %v949
        %v1029 = vunpack.c.l.b16 %v950
        %v1030 = vunpack.c.l.b16 %v951
        %v1031 = vunpack.c.l.b16 %v952
        %v1032 = vunpack.c.l.b16 %v953
        %v1033 = vunpack.c.l.b16 %v954
        %v1034 = vunpack.c.l.b16 %v955
        %v1035 = vunpack.c.l.b16 %v956
        %v1036 = vunpack.c.l.b16 %v957
        %v1037 = vunpack.c.l.b16 %v958
        %v1038 = vunpack.c.l.b16 %v959
        %v1039 = vunpack.c.l.b16 %v960
        %v1040 = vpack.c.b16 %v1025, %v1024
        %v1041 = vpack.c.b16 %v1027, %v1026
        %v1042 = vpack.c.b16 %v1029, %v1028
        %v1043 = vpack.c.b16 %v1031, %v1030
        %v1044 = vpack.c.b16 %v1033, %v1032
        %v1045 = vpack.c.b16 %v1035, %v1034
        %v1046 = vpack.c.b16 %v1037, %v1036
        %v1047 = vpack.c.b16 %v1039, %v1038
        %1056 = vmatpush.bf16.msra.mxu0 %v1047
        %1057 = vmatpush.bf16.msra.mxu0 %v1046
        %1058 = vmatpush.bf16.msra.mxu0 %v1045
        %1059 = vmatpush.bf16.msra.mxu0 %v1044
        %1060 = vmatpush.bf16.msra.mxu0 %v1043
        %1061 = vmatpush.bf16.msra.mxu0 %v1042
        %1062 = vmatpush.bf16.msra.mxu0 %v1041
        %1063 = vmatpush.bf16.msra.mxu0 %v1040
        %1064 = vmatmul.bf16.gmra.mxu0 %v985
        %v1065 = vpop.f32.mrf.mxu0
        %v1066 = vadd.f32 %v963, %v1065
        %v1067 = vpop.f32.mrf.mxu0
        %v1068 = vadd.f32 %v963, %v1067
        %1069 = vmatmul.bf16.gmra.mxu0 %v999
        %v1070 = vpop.f32.mrf.mxu0
        %v1071 = vadd.f32 %v963, %v1070
        %v1072 = vpop.f32.mrf.mxu0
        %v1073 = vadd.f32 %v963, %v1072
        %1074 = vmatmul.bf16.gmra.mxu0 %v1004
        %v1075 = vpop.f32.mrf.mxu0
        %v1076 = vadd.f32 %v963, %v1075
        %v1077 = vpop.f32.mrf.mxu0
        %1078 = vdwg.mxu0
        %v1079 = vmax.f32 %v1066, 0.0
        %v1080 = vmax.f32 %v1068, 0.0
        %v1081 = vmax.f32 %v1071, 0.0
        %v1082 = vmax.f32 %v1073, 0.0
        %v1083 = vmax.f32 %v1076, 0.0
        %v1089 = vrot.slane %v1079, 2
        %v1090 = vrot.slane %v1079, 4
        %v1091 = vrot.slane %v1079, 6
        %v1092 = vrot.slane %v1080, 2
        %v1093 = vrot.slane %v1080, 4
        %v1094 = vrot.slane %v1080, 6
        %v1095 = vrot.slane %v1081, 2
        %v1096 = vrot.slane %v1081, 4
        %v1097 = vrot.slane %v1081, 6
        %v1098 = vrot.slane %v1082, 2
        %v1099 = vrot.slane %v1082, 4
        %v1100 = vrot.slane %v1082, 6
        %v1101 = vrot.slane %v1083, 2
        %vm1102 = vcmask 519168
        %1103 = vst.msk [vmem:[#allocation4] sm:$0xf] %vm1102, 0
        %s1104 = scalar_lea.vmem [#allocation4], 28
        %1105 = vst.msk [vmem:[%s1104] sm:$0xf] %vm1102, 0
        %vm1106 = vcmask 516096
        %vm1107 = vmand %vm1106, %vm659
        %v1108 = vld [vmem:[#allocation4] sm:$0x1]
        %v1109 = vsel %vm1107, 0, %v1108
        %1110 = vst [vmem:[#allocation4] sm:$0x1] %v1109
        %v1111 = vld [vmem:[#allocation4 + $0x4] sm:$0x1]
        %v1112 = vsel %vm1107, 0, %v1111
        %1113 = vst [vmem:[#allocation4 + $0x4] sm:$0x1] %v1112
        %v1114 = vld [vmem:[#allocation4 + $0x8] sm:$0x1]
        %v1115 = vsel %vm1107, 0, %v1114
        %1116 = vst [vmem:[#allocation4 + $0x8] sm:$0x1] %v1115
        %v1117 = vld [vmem:[#allocation4 + $0xc] sm:$0x1]
        %v1118 = vsel %vm1107, 0, %v1117
        %1119 = vst [vmem:[#allocation4 + $0xc] sm:$0x1] %v1118
        %v1120 = vld [vmem:[#allocation4 + $0x10] sm:$0x1]
        %v1121 = vsel %vm1107, 0, %v1120
        %1122 = vst [vmem:[#allocation4 + $0x10] sm:$0x1] %v1121
        %v1123 = vld [vmem:[#allocation4 + $0x14] sm:$0x1]
        %v1124 = vsel %vm1107, 0, %v1123
        %1125 = vst [vmem:[#allocation4 + $0x14] sm:$0x1] %v1124
        %v1126 = vld [vmem:[#allocation4 + $0x18] sm:$0x1]
        %v1127 = vsel %vm1107, 0, %v1126
        %1128 = vst [vmem:[#allocation4 + $0x18] sm:$0x1] %v1127
        %v1129 = vld [vmem:[#allocation4 + $0x1c] sm:$0x1]
        %v1130 = vsel %vm1107, 0, %v1129
        %1131 = vst [vmem:[#allocation4 + $0x1c] sm:$0x1] %v1130
        %vm1132 = vcmask 519171
        %vm1133 = vsmask.f32 7950
        %vm1134 = vmand %vm1132, %vm1133
        %v1135 = vld [vmem:[#allocation4] sm:$0x8]
        %v1136 = vsel %vm1134, 0, %v1135
        %1137 = vst [vmem:[#allocation4] sm:$0x8] %v1136
        %v1138 = vld [vmem:[#allocation4 + $0x4] sm:$0x8]
        %v1139 = vsel %vm1134, 0, %v1138
        %1140 = vst [vmem:[#allocation4 + $0x4] sm:$0x8] %v1139
        %v1141 = vld [vmem:[#allocation4 + $0x8] sm:$0x8]
        %v1142 = vsel %vm1134, 0, %v1141
        %1143 = vst [vmem:[#allocation4 + $0x8] sm:$0x8] %v1142
        %v1144 = vld [vmem:[#allocation4 + $0xc] sm:$0x8]
        %v1145 = vsel %vm1134, 0, %v1144
        %1146 = vst [vmem:[#allocation4 + $0xc] sm:$0x8] %v1145
        %v1147 = vld [vmem:[#allocation4 + $0x10] sm:$0x8]
        %v1148 = vsel %vm1134, 0, %v1147
        %1149 = vst [vmem:[#allocation4 + $0x10] sm:$0x8] %v1148
        %v1150 = vld [vmem:[#allocation4 + $0x14] sm:$0x8]
        %v1151 = vsel %vm1134, 0, %v1150
        %1152 = vst [vmem:[#allocation4 + $0x14] sm:$0x8] %v1151
        %v1153 = vld [vmem:[#allocation4 + $0x18] sm:$0x8]
        %v1154 = vsel %vm1134, 0, %v1153
        %1155 = vst [vmem:[#allocation4 + $0x18] sm:$0x8] %v1154
        %v1156 = vld [vmem:[#allocation4 + $0x1c] sm:$0x8]
        %v1157 = vsel %vm1134, 0, %v1156
        %1158 = vst [vmem:[#allocation4 + $0x1c] sm:$0x8] %v1157
        %1159 = vst [vmem:[#allocation1] ss:$4 sm:$0xff] %v1079
        %s1160 = scalar_lea.vmem [#allocation1], 1
        %1161 = vst [vmem:[%s1160] ss:$4 sm:$0xff] %v1089
        %s1162 = scalar_lea.vmem [#allocation1], 2
        %1163 = vst [vmem:[%s1162] ss:$4 sm:$0xff] %v1090
        %v1164 = vld.sshfl [vmem:[#allocation1] sm:$0xff pattern:$0x73625140]
        %s1165 = scalar_lea.vmem [#allocation1], 32
        %1166 = vst [vmem:[%s1165] ss:$4 sm:$0xff] %v1091
        %s1167 = scalar_lea.vmem [#allocation1], 33
        %1168 = vst [vmem:[%s1167] ss:$4 sm:$0xff] %v1080
        %s1169 = scalar_lea.vmem [#allocation1], 34
        %1170 = vst [vmem:[%s1169] ss:$4 sm:$0xff] %v1092
        %v1171 = vld.sshfl [vmem:[#allocation1 + $0x20] sm:$0xff pattern:$0x73625140]
        %1172 = vst [vmem:[#allocation1] ss:$4 sm:$0xff] %v1093
        %1173 = vst [vmem:[%s1160] ss:$4 sm:$0xff] %v1094
        %1174 = vst [vmem:[%s1162] ss:$4 sm:$0xff] %v1081
        %v1175 = vld.sshfl [vmem:[#allocation1] sm:$0xff pattern:$0x73625140]
        %1176 = vst [vmem:[%s1165] ss:$4 sm:$0xff] %v1095
        %1177 = vst [vmem:[%s1167] ss:$4 sm:$0xff] %v1096
        %1178 = vst [vmem:[%s1169] ss:$4 sm:$0xff] %v1097
        %v1179 = vld.sshfl [vmem:[#allocation1 + $0x20] sm:$0xff pattern:$0x73625140]
        %1180 = vst [vmem:[#allocation1] ss:$4 sm:$0xff] %v1082
        %1181 = vst [vmem:[%s1160] ss:$4 sm:$0xff] %v1098
        %1182 = vst [vmem:[%s1162] ss:$4 sm:$0xff] %v1099
        %v1183 = vld.sshfl [vmem:[#allocation1] sm:$0xff pattern:$0x73625140]
        %1184 = vst [vmem:[%s1165] ss:$4 sm:$0xff] %v1100
        %1185 = vst [vmem:[%s1167] ss:$4 sm:$0xff] %v1083
        %1186 = vst [vmem:[%s1169] ss:$4 sm:$0xff] %v1101
        %v1187 = vld.sshfl [vmem:[#allocation1 + $0x20] sm:$0xff pattern:$0x73625140]
        %v1194 = vpack.c.bf16 %v1164, %v1164
        %v1195 = vpack.c.bf16 %v1171, %v1171
        %v1196 = vpack.c.bf16 %v1175, %v1175
        %v1197 = vpack.c.bf16 %v1179, %v1179
        %v1198 = vpack.c.bf16 %v1183, %v1183
        %v1199 = vpack.c.bf16 %v1187, %v1187
        %v1201 = vshrl.u32 %v1194, 16
        %v1203 = vrot.slane %v1201, 7
        %v1204 = vshll.u32 %v1194, 16
        %v1206 = vor.u32 %v1203, %v1204
        %v1208 = vshrl.u32 %v1195, 16
        %v1210 = vrot.slane %v1208, 7
        %v1211 = vshll.u32 %v1195, 16
        %v1213 = vor.u32 %v1210, %v1211
        %v1215 = vshrl.u32 %v1196, 16
        %v1217 = vrot.slane %v1215, 7
        %v1218 = vshll.u32 %v1196, 16
        %v1220 = vor.u32 %v1217, %v1218
        %v1222 = vshrl.u32 %v1197, 16
        %v1224 = vrot.slane %v1222, 7
        %v1225 = vshll.u32 %v1197, 16
        %v1227 = vor.u32 %v1224, %v1225
        %v1229 = vshrl.u32 %v1198, 16
        %v1231 = vrot.slane %v1229, 7
        %v1232 = vshll.u32 %v1198, 16
        %v1234 = vor.u32 %v1231, %v1232
        %v1236 = vshrl.u32 %v1199, 16
        %v1238 = vrot.slane %v1236, 7
        %v1239 = vshll.u32 %v1199, 16
        %v1241 = vor.u32 %v1238, %v1239
        %s1248 = scalar_lea.vmem [#allocation4], 4
        %vm1249 = vcmask 519168
        %vm1250 = vsmask.f32 3330
        %vm1251 = vmand %vm1249, %vm1250
        %v1252 = vld [vmem:[%s1248] sm:$0xf]
        %v1253 = vsel %vm1251, %v1206, %v1252
        %1254 = vst [vmem:[%s1248] sm:$0xf] %v1253
        %v1255 = vld [vmem:[%s1248 + $0x4] sm:$0xf]
        %v1256 = vsel %vm1251, %v1213, %v1255
        %1257 = vst [vmem:[%s1248 + $0x4] sm:$0xf] %v1256
        %v1258 = vld [vmem:[%s1248 + $0x8] sm:$0xf]
        %v1259 = vsel %vm1251, %v1220, %v1258
        %1260 = vst [vmem:[%s1248 + $0x8] sm:$0xf] %v1259
        %v1261 = vld [vmem:[%s1248 + $0xc] sm:$0xf]
        %v1262 = vsel %vm1251, %v1227, %v1261
        %1263 = vst [vmem:[%s1248 + $0xc] sm:$0xf] %v1262
        %v1264 = vld [vmem:[%s1248 + $0x10] sm:$0xf]
        %v1265 = vsel %vm1251, %v1234, %v1264
        %1266 = vst [vmem:[%s1248 + $0x10] sm:$0xf] %v1265
        %v1267 = vld [vmem:[%s1248 + $0x14] sm:$0xf]
        %v1268 = vsel %vm1251, %v1241, %v1267
        %1269 = vst [vmem:[%s1248 + $0x14] sm:$0xf] %v1268
        %v1270 = vld [vmem:[#allocation4] sm:$0xf]
        %v1271 = vld [vmem:[#allocation4 + $0x4] sm:$0xf]
        %v1272 = vld [vmem:[#allocation4 + $0x8] sm:$0xf]
        %v1273 = vld [vmem:[#allocation4 + $0xc] sm:$0xf]
        %v1274 = vld [vmem:[#allocation4 + $0x10] sm:$0xf]
        %v1275 = vld [vmem:[#allocation4 + $0x14] sm:$0xf]
        %v1276 = vld [vmem:[#allocation4 + $0x18] sm:$0xf]
        %v1277 = vld [vmem:[#allocation4 + $0x1c] sm:$0xf]
        %v1285 = vunpack.c.l.b16 %v1270
        %v1286 = vunpack.c.l.b16 %v1271
        %v1287 = vunpack.c.l.b16 %v1272
        %v1288 = vunpack.c.l.b16 %v1273
        %v1289 = vunpack.c.l.b16 %v1274
        %v1290 = vunpack.c.l.b16 %v1275
        %v1291 = vunpack.c.l.b16 %v1276
        %v1292 = vpack.c.b16 %v1285, %v1285
        %v1293 = vpack.c.b16 %v1286, %v1286
        %v1294 = vpack.c.b16 %v1287, %v1287
        %v1295 = vpack.c.b16 %v1288, %v1288
        %v1296 = vpack.c.b16 %v1289, %v1289
        %v1297 = vpack.c.b16 %v1290, %v1290
        %v1298 = vpack.c.b16 %v1291, %v1291
        %v1300 = vshrl.u32 %v1292, 16
        %v1302 = vshll.u32 %v1292, 16
        %v1304 = vrot.slane %v1302, 1
        %v1305 = vor.u32 %v1300, %v1304
        %v1307 = vshrl.u32 %v1293, 16
        %v1309 = vshll.u32 %v1293, 16
        %v1311 = vrot.slane %v1309, 1
        %v1312 = vor.u32 %v1307, %v1311
        %v1314 = vshrl.u32 %v1294, 16
        %v1316 = vshll.u32 %v1294, 16
        %v1318 = vrot.slane %v1316, 1
        %v1319 = vor.u32 %v1314, %v1318
        %v1321 = vshrl.u32 %v1295, 16
        %v1323 = vshll.u32 %v1295, 16
        %v1325 = vrot.slane %v1323, 1
        %v1326 = vor.u32 %v1321, %v1325
        %v1328 = vshrl.u32 %v1296, 16
        %v1330 = vshll.u32 %v1296, 16
        %v1332 = vrot.slane %v1330, 1
        %v1333 = vor.u32 %v1328, %v1332
        %v1335 = vshrl.u32 %v1297, 16
        %v1337 = vshll.u32 %v1297, 16
        %v1339 = vrot.slane %v1337, 1
        %v1340 = vor.u32 %v1335, %v1339
        %v1342 = vshrl.u32 %v1298, 16
        %v1344 = vshll.u32 %v1298, 16
        %v1346 = vrot.slane %v1344, 1
        %v1347 = vor.u32 %v1342, %v1346
        %1348 = vrot.lane.b32.xlu0 %v1305, 64
        %v1349 = vpop.permute.xlu0 %1348
        %1350 = vrot.lane.b32.xlu0 %v1312, 64
        %v1351 = vpop.permute.xlu0 %1350
        %1352 = vrot.lane.b32.xlu0 %v1319, 64
        %v1353 = vpop.permute.xlu0 %1352
        %1354 = vrot.lane.b32.xlu0 %v1326, 64
        %v1355 = vpop.permute.xlu0 %1354
        %1356 = vrot.lane.b32.xlu0 %v1333, 64
        %v1357 = vpop.permute.xlu0 %1356
        %1358 = vrot.lane.b32.xlu0 %v1340, 64
        %v1359 = vpop.permute.xlu0 %1358
        %1360 = vrot.lane.b32.xlu0 %v1347, 64
        %v1361 = vpop.permute.xlu0 %1360
        %v1363 = vunpack.c.l.b16 %v1277
        %v1364 = vpack.c.b16 %v1363, %v1363
        %v1366 = vshrl.u32 %v1364, 16
        %v1368 = vshll.u32 %v1364, 16
        %v1370 = vrot.slane %v1368, 1
        %v1371 = vor.u32 %v1366, %v1370
        %1372 = vrot.lane.b32.xlu0 %v1371, 64
        %v1373 = vpop.permute.xlu0 %1372
        %v1376 = vsel %vm901, %v1270, %v1349
        %v1379 = vsel %vm901, %v1271, %v1351
        %v1382 = vsel %vm901, %v1272, %v1353
        %v1385 = vsel %vm901, %v1273, %v1355
        %v1388 = vsel %vm901, %v1274, %v1357
        %v1391 = vsel %vm901, %v1275, %v1359
        %v1394 = vsel %vm901, %v1276, %v1361
        %v1397 = vsel %vm901, %v1277, %v1373
        %v1405 = vrot.slane %v1379, 7
        %v1406 = vrot.slane %v1382, 7
        %v1407 = vrot.slane %v1385, 7
        %v1408 = vrot.slane %v1388, 7
        %v1409 = vrot.slane %v1391, 7
        %v1410 = vrot.slane %v1394, 7
        %v1411 = vrot.slane %v1397, 7
        %vm1412 = vcmask 1040384
        %v1414 = vsel %vm1412, %v1376, %v1405
        %vm1416 = vcmask 1041409
        %v1417 = vsel %vm1416, %v1376, %v1405
        %v1419 = vrot.slane %v1417, 1
        %vm1420 = vcmask 1042434
        %v1421 = vsel %vm1420, %v1376, %v1405
        %v1423 = vrot.slane %v1421, 2
        %vm1424 = vcmask 1043459
        %v1425 = vsel %vm1424, %v1376, %v1405
        %v1427 = vrot.slane %v1425, 3
        %v1429 = vsel %vm1412, %v1379, %v1406
        %v1431 = vsel %vm1416, %v1379, %v1406
        %v1433 = vrot.slane %v1431, 1
        %v1434 = vsel %vm1420, %v1379, %v1406
        %v1436 = vrot.slane %v1434, 2
        %v1437 = vsel %vm1424, %v1379, %v1406
        %v1439 = vrot.slane %v1437, 3
        %v1441 = vsel %vm1412, %v1382, %v1407
        %v1443 = vsel %vm1416, %v1382, %v1407
        %v1445 = vrot.slane %v1443, 1
        %v1446 = vsel %vm1420, %v1382, %v1407
        %v1448 = vrot.slane %v1446, 2
        %v1449 = vsel %vm1424, %v1382, %v1407
        %v1451 = vrot.slane %v1449, 3
        %v1453 = vsel %vm1412, %v1385, %v1408
        %v1455 = vsel %vm1416, %v1385, %v1408
        %v1457 = vrot.slane %v1455, 1
        %v1458 = vsel %vm1420, %v1385, %v1408
        %v1460 = vrot.slane %v1458, 2
        %v1461 = vsel %vm1424, %v1385, %v1408
        %v1463 = vrot.slane %v1461, 3
        %v1465 = vsel %vm1412, %v1388, %v1409
        %v1467 = vsel %vm1416, %v1388, %v1409
        %v1469 = vrot.slane %v1467, 1
        %v1470 = vsel %vm1420, %v1388, %v1409
        %v1472 = vrot.slane %v1470, 2
        %v1473 = vsel %vm1424, %v1388, %v1409
        %v1475 = vrot.slane %v1473, 3
        %v1477 = vsel %vm1412, %v1391, %v1410
        %v1479 = vsel %vm1416, %v1391, %v1410
        %v1481 = vrot.slane %v1479, 1
        %v1482 = vsel %vm1420, %v1391, %v1410
        %v1484 = vrot.slane %v1482, 2
        %v1485 = vsel %vm1424, %v1391, %v1410
        %v1487 = vrot.slane %v1485, 3
        %v1489 = vsel %vm1412, %v1394, %v1411
        %v1491 = vsel %vm1416, %v1394, %v1411
        %v1493 = vrot.slane %v1491, 1
        %v1494 = vsel %vm1420, %v1394, %v1411
        %v1496 = vrot.slane %v1494, 2
        %v1497 = vsel %vm1424, %v1394, %v1411
        %v1499 = vrot.slane %v1497, 3
        %v1500 = vunpack.i.l.s16 %v1414
        %v1501 = vunpack.i.h.s16 %v1414
        %v1502 = vunpack.i.l.s16 %v1419
        %v1503 = vunpack.i.h.s16 %v1419
        %v1504 = vunpack.i.l.s16 %v1423
        %v1505 = vunpack.i.h.s16 %v1423
        %v1506 = vunpack.i.l.s16 %v1427
        %v1507 = vunpack.i.l.s16 %v1429
        %v1508 = vunpack.i.h.s16 %v1429
        %v1509 = vunpack.i.l.s16 %v1433
        %v1510 = vunpack.i.h.s16 %v1433
        %v1511 = vunpack.i.l.s16 %v1436
        %v1512 = vunpack.i.h.s16 %v1436
        %v1513 = vunpack.i.l.s16 %v1439
        %v1514 = vunpack.i.l.s16 %v1441
        %v1515 = vunpack.i.h.s16 %v1441
        %v1516 = vunpack.i.l.s16 %v1445
        %v1517 = vunpack.i.h.s16 %v1445
        %v1518 = vunpack.i.l.s16 %v1448
        %v1519 = vunpack.i.h.s16 %v1448
        %v1520 = vunpack.i.l.s16 %v1451
        %v1521 = vunpack.i.l.s16 %v1453
        %v1522 = vunpack.i.h.s16 %v1453
        %v1523 = vunpack.i.l.s16 %v1457
        %v1524 = vunpack.i.h.s16 %v1457
        %v1525 = vunpack.i.l.s16 %v1460
        %v1526 = vunpack.i.h.s16 %v1460
        %v1527 = vunpack.i.l.s16 %v1463
        %v1528 = vunpack.i.l.s16 %v1465
        %v1529 = vunpack.i.h.s16 %v1465
        %v1530 = vunpack.i.l.s16 %v1469
        %v1531 = vunpack.i.h.s16 %v1469
        %v1532 = vunpack.i.l.s16 %v1472
        %v1533 = vunpack.i.h.s16 %v1472
        %v1534 = vunpack.i.l.s16 %v1475
        %v1535 = vunpack.i.l.s16 %v1477
        %v1536 = vunpack.i.h.s16 %v1477
        %v1537 = vunpack.i.l.s16 %v1481
        %v1538 = vunpack.i.h.s16 %v1481
        %v1539 = vunpack.i.l.s16 %v1484
        %v1540 = vunpack.i.h.s16 %v1484
        %v1541 = vunpack.i.l.s16 %v1487
        %v1542 = vunpack.i.l.s16 %v1489
        %v1543 = vunpack.i.h.s16 %v1489
        %v1544 = vunpack.i.l.s16 %v1493
        %v1545 = vunpack.i.h.s16 %v1493
        %v1546 = vunpack.i.l.s16 %v1496
        %v1547 = vunpack.i.h.s16 %v1496
        %v1548 = vunpack.i.l.s16 %v1499
        %v1549 = vld [vmem:[%s5] sm:$0xf]
        %v1550 = vld [vmem:[%s5 + $0x4] sm:$0xf]
        %v1551 = vld [vmem:[%s5 + $0x8] sm:$0xf]
        %v1552 = vld [vmem:[%s5 + $0xc] sm:$0xf]
        %v1553 = vld [vmem:[%s5 + $0x10] sm:$0xf]
        %v1554 = vld [vmem:[%s5 + $0x14] sm:$0xf]
        %v1555 = vld [vmem:[%s5 + $0x18] sm:$0xf]
        %v1556 = vld [vmem:[%s5 + $0x1c] sm:$0xf]
        %v1557 = vld [vmem:[%s5 + $0x20] sm:$0xf]
        %v1558 = vld [vmem:[%s5 + $0x24] sm:$0xf]
        %v1559 = vld [vmem:[%s5 + $0x28] sm:$0xf]
        %v1560 = vld [vmem:[%s5 + $0x2c] sm:$0xf]
        %v1561 = vld [vmem:[%s5 + $0x30] sm:$0xf]
        %v1562 = vld [vmem:[%s5 + $0x34] sm:$0xf]
        %v1563 = vld [vmem:[%s5 + $0x38] sm:$0xf]
        %v1564 = vld [vmem:[%s5 + $0x3c] sm:$0xf]
        %v1565 = vld [vmem:[%s5 + $0x40] sm:$0xf]
        %v1566 = vld [vmem:[%s5 + $0x44] sm:$0xf]
        %v1567 = vld [vmem:[%s5 + $0x48] sm:$0xf]
        %v1568 = vld [vmem:[%s5 + $0x4c] sm:$0xf]
        %v1569 = vld [vmem:[%s5 + $0x50] sm:$0xf]
        %v1570 = vld [vmem:[%s5 + $0x54] sm:$0xf]
        %v1571 = vld [vmem:[%s5 + $0x58] sm:$0xf]
        %v1572 = vld [vmem:[%s5 + $0x5c] sm:$0xf]
        %v1573 = vld [vmem:[%s5 + $0x60] sm:$0xf]
        %v1574 = vld [vmem:[%s5 + $0x64] sm:$0xf]
        %v1575 = vld [vmem:[%s5 + $0x68] sm:$0xf]
        %v1576 = vld [vmem:[%s5 + $0x6c] sm:$0xf]
        %v1577 = vld [vmem:[%s5 + $0x70] sm:$0xf]
        %v1578 = vld [vmem:[%s5 + $0x74] sm:$0xf]
        %v1579 = vld [vmem:[%s5 + $0x78] sm:$0xf]
        %v1580 = vld [vmem:[%s5 + $0x7c] sm:$0xf]
        %v1581 = vld [vmem:[%s6] sm:$0x1]
        %v1583 = vperm.slane %v1581, 0
        %v1585 = vpack.i.b16 %v1501, %v1500
        %v1586 = vpack.i.b16 %v1503, %v1502
        %v1587 = vpack.i.b16 %v1505, %v1504
        %v1588 = vpack.i.b16 %v1507, %v1506
        %v1589 = vpack.i.b16 %v1509, %v1508
        %v1590 = vpack.i.b16 %v1511, %v1510
        %v1591 = vpack.i.b16 %v1513, %v1512
        %v1592 = vpack.i.b16 %v1515, %v1514
        %v1593 = vpack.i.b16 %v1517, %v1516
        %v1594 = vpack.i.b16 %v1519, %v1518
        %v1595 = vpack.i.b16 %v1521, %v1520
        %v1596 = vpack.i.b16 %v1523, %v1522
        %v1597 = vpack.i.b16 %v1525, %v1524
        %v1598 = vpack.i.b16 %v1527, %v1526
        %v1599 = vpack.i.b16 %v1529, %v1528
        %v1600 = vpack.i.b16 %v1531, %v1530
        %v1601 = vpack.i.b16 %v1533, %v1532
        %v1602 = vpack.i.b16 %v1535, %v1534
        %v1603 = vpack.i.b16 %v1537, %v1536
        %v1604 = vpack.i.b16 %v1539, %v1538
        %v1605 = vpack.i.b16 %v1541, %v1540
        %v1606 = vpack.i.b16 %v1543, %v1542
        %v1607 = vpack.i.b16 %v1545, %v1544
        %v1608 = vpack.i.b16 %v1547, %v1546
        %1611 = vst [vmem:[#allocation1] ss:$9 sm:$0xff] %v1585
        %s1613 = scalar_lea.vmem [#allocation1], 1
        %1614 = vst [vmem:[%s1613] ss:$9 sm:$0xff] %v1586
        %s1616 = scalar_lea.vmem [#allocation1], 2
        %1617 = vst [vmem:[%s1616] ss:$9 sm:$0xff] %v1587
        %s1619 = scalar_lea.vmem [#allocation1], 3
        %1620 = vst [vmem:[%s1619] ss:$9 sm:$0xff] %v1588
        %s1622 = scalar_lea.vmem [#allocation1], 4
        %1623 = vst [vmem:[%s1622] ss:$9 sm:$0xff] %v1589
        %s1625 = scalar_lea.vmem [#allocation1], 5
        %1626 = vst [vmem:[%s1625] ss:$9 sm:$0xff] %v1590
        %s1628 = scalar_lea.vmem [#allocation1], 6
        %1629 = vst [vmem:[%s1628] ss:$9 sm:$0xff] %v1591
        %s1631 = scalar_lea.vmem [#allocation1], 7
        %1632 = vst [vmem:[%s1631] ss:$9 sm:$0xff] %v1592
        %v1633 = vld [vmem:[#allocation1] sm:$0xff]
        %v1634 = vld [vmem:[#allocation1 + $0x9] sm:$0xff]
        %1636 = vst [vmem:[#allocation1] ss:$9 sm:$0xff] %v1593
        %1638 = vst [vmem:[%s1613] ss:$9 sm:$0xff] %v1594
        %1640 = vst [vmem:[%s1616] ss:$9 sm:$0xff] %v1595
        %1642 = vst [vmem:[%s1619] ss:$9 sm:$0xff] %v1596
        %1644 = vst [vmem:[%s1622] ss:$9 sm:$0xff] %v1597
        %1646 = vst [vmem:[%s1625] ss:$9 sm:$0xff] %v1598
        %1648 = vst [vmem:[%s1628] ss:$9 sm:$0xff] %v1599
        %1650 = vst [vmem:[%s1631] ss:$9 sm:$0xff] %v1600
        %v1651 = vld [vmem:[#allocation1] sm:$0xff]
        %v1652 = vld [vmem:[#allocation1 + $0x9] sm:$0xff]
        %1654 = vst [vmem:[#allocation1] ss:$9 sm:$0xff] %v1601
        %1656 = vst [vmem:[%s1613] ss:$9 sm:$0xff] %v1602
        %1658 = vst [vmem:[%s1616] ss:$9 sm:$0xff] %v1603
        %1660 = vst [vmem:[%s1619] ss:$9 sm:$0xff] %v1604
        %1662 = vst [vmem:[%s1622] ss:$9 sm:$0xff] %v1605
        %1664 = vst [vmem:[%s1625] ss:$9 sm:$0xff] %v1606
        %1666 = vst [vmem:[%s1628] ss:$9 sm:$0xff] %v1607
        %1668 = vst [vmem:[%s1631] ss:$9 sm:$0xff] %v1608
        %v1669 = vld [vmem:[#allocation1] sm:$0xff]
        %v1670 = vld [vmem:[#allocation1 + $0x9] sm:$0xff]
        %1672 = vst [vmem:[#allocation1] ss:$9 sm:$0xff] %v1548
        %v1673 = vld [vmem:[#allocation1] sm:$0xff]
        %v1674 = vld [vmem:[#allocation1 + $0x9] sm:$0xff]
        %v1715 = vunpack.c.l.b16 %v1549
        %v1716 = vunpack.c.l.b16 %v1550
        %v1717 = vunpack.c.l.b16 %v1551
        %v1718 = vunpack.c.l.b16 %v1552
        %v1719 = vunpack.c.l.b16 %v1553
        %v1720 = vunpack.c.l.b16 %v1554
        %v1721 = vunpack.c.l.b16 %v1555
        %v1722 = vunpack.c.l.b16 %v1556
        %v1723 = vunpack.c.l.b16 %v1557
        %v1724 = vunpack.c.l.b16 %v1558
        %v1725 = vunpack.c.l.b16 %v1559
        %v1726 = vunpack.c.l.b16 %v1560
        %v1727 = vunpack.c.l.b16 %v1561
        %v1728 = vunpack.c.l.b16 %v1562
        %v1729 = vunpack.c.l.b16 %v1563
        %v1730 = vunpack.c.l.b16 %v1564
        %v1731 = vunpack.c.l.b16 %v1565
        %v1732 = vunpack.c.l.b16 %v1566
        %v1733 = vunpack.c.l.b16 %v1567
        %v1734 = vunpack.c.l.b16 %v1568
        %v1735 = vunpack.c.l.b16 %v1569
        %v1736 = vunpack.c.l.b16 %v1570
        %v1737 = vunpack.c.l.b16 %v1571
        %v1738 = vunpack.c.l.b16 %v1572
        %v1739 = vunpack.c.l.b16 %v1573
        %v1740 = vunpack.c.l.b16 %v1574
        %v1741 = vunpack.c.l.b16 %v1575
        %v1742 = vunpack.c.l.b16 %v1576
        %v1743 = vunpack.c.l.b16 %v1577
        %v1744 = vunpack.c.l.b16 %v1578
        %v1745 = vunpack.c.l.b16 %v1579
        %v1746 = vunpack.c.l.b16 %v1580
        %v1747 = vpack.c.b16 %v1716, %v1715
        %v1748 = vpack.c.b16 %v1718, %v1717
        %v1749 = vpack.c.b16 %v1720, %v1719
        %v1750 = vpack.c.b16 %v1722, %v1721
        %v1751 = vpack.c.b16 %v1724, %v1723
        %v1752 = vpack.c.b16 %v1726, %v1725
        %v1753 = vpack.c.b16 %v1728, %v1727
        %v1754 = vpack.c.b16 %v1730, %v1729
        %v1755 = vpack.c.b16 %v1732, %v1731
        %v1756 = vpack.c.b16 %v1734, %v1733
        %v1757 = vpack.c.b16 %v1736, %v1735
        %v1758 = vpack.c.b16 %v1738, %v1737
        %v1759 = vpack.c.b16 %v1740, %v1739
        %v1760 = vpack.c.b16 %v1742, %v1741
        %v1761 = vpack.c.b16 %v1744, %v1743
        %v1762 = vpack.c.b16 %v1746, %v1745
        %1779 = vmatpush.bf16.msra.mxu0 %v1754
        %1780 = vmatpush.bf16.msra.mxu0 %v1753
        %1781 = vmatpush.bf16.msra.mxu0 %v1752
        %1782 = vmatpush.bf16.msra.mxu0 %v1751
        %1783 = vmatpush.bf16.msra.mxu0 %v1750
        %1784 = vmatpush.bf16.msra.mxu0 %v1749
        %1785 = vmatpush.bf16.msra.mxu0 %v1748
        %1786 = vmatpush.bf16.msra.mxu0 %v1747
        %1787 = vmatmul.bf16.gmra.mxu0 %v1633
        %v1788 = vpop.f32.mrf.mxu0
        %v1789 = vadd.f32 %v1583, %v1788
        %v1790 = vpop.f32.mrf.mxu0
        %v1791 = vadd.f32 %v1583, %v1790
        %1792 = vmatmul.bf16.gmra.mxu0 %v1651
        %v1793 = vpop.f32.mrf.mxu0
        %v1794 = vadd.f32 %v1583, %v1793
        %v1795 = vpop.f32.mrf.mxu0
        %v1796 = vadd.f32 %v1583, %v1795
        %1797 = vmatmul.bf16.gmra.mxu0 %v1669
        %v1798 = vpop.f32.mrf.mxu0
        %v1799 = vadd.f32 %v1583, %v1798
        %v1800 = vpop.f32.mrf.mxu0
        %v1801 = vadd.f32 %v1583, %v1800
        %1802 = vmatmul.bf16.gmra.mxu0 %v1673
        %v1803 = vpop.f32.mrf.mxu0
        %v1804 = vadd.f32 %v1583, %v1803
        %v1805 = vpop.f32.mrf.mxu0
        %1806 = vdwg.mxu0
        %1807 = vmatpush.bf16.msra.mxu0 %v1762
        %1808 = vmatpush.bf16.msra.mxu0 %v1761
        %1809 = vmatpush.bf16.msra.mxu0 %v1760
        %1810 = vmatpush.bf16.msra.mxu0 %v1759
        %1811 = vmatpush.bf16.msra.mxu0 %v1758
        %1812 = vmatpush.bf16.msra.mxu0 %v1757
        %1813 = vmatpush.bf16.msra.mxu0 %v1756
        %1814 = vmatpush.bf16.msra.mxu0 %v1755
        %1815 = vmatmul.bf16.gmra.mxu0 %v1634
        %v1816 = vpop.f32.mrf.mxu0
        %v1817 = vadd.f32 %v1789, %v1816
        %v1818 = vpop.f32.mrf.mxu0
        %v1819 = vadd.f32 %v1791, %v1818
        %1820 = vmatmul.bf16.gmra.mxu0 %v1652
        %v1821 = vpop.f32.mrf.mxu0
        %v1822 = vadd.f32 %v1794, %v1821
        %v1823 = vpop.f32.mrf.mxu0
        %v1824 = vadd.f32 %v1796, %v1823
        %1825 = vmatmul.bf16.gmra.mxu0 %v1670
        %v1826 = vpop.f32.mrf.mxu0
        %v1827 = vadd.f32 %v1799, %v1826
        %v1828 = vpop.f32.mrf.mxu0
        %v1829 = vadd.f32 %v1801, %v1828
        %1830 = vmatmul.bf16.gmra.mxu0 %v1674
        %v1831 = vpop.f32.mrf.mxu0
        %v1832 = vadd.f32 %v1804, %v1831
        %v1833 = vpop.f32.mrf.mxu0
        %1834 = vdwg.mxu0
        %v1835 = vmax.f32 %v1817, 0.0
        %v1836 = vmax.f32 %v1819, 0.0
        %v1837 = vmax.f32 %v1822, 0.0
        %v1838 = vmax.f32 %v1824, 0.0
        %v1839 = vmax.f32 %v1827, 0.0
        %v1840 = vmax.f32 %v1829, 0.0
        %v1841 = vmax.f32 %v1832, 0.0
        %v1849 = vrot.slane %v1835, 1
        %v1850 = vrot.slane %v1835, 2
        %v1851 = vrot.slane %v1835, 3
        %v1852 = vrot.slane %v1835, 4
        %v1853 = vrot.slane %v1835, 5
        %v1854 = vrot.slane %v1835, 6
        %v1855 = vrot.slane %v1835, 7
        %v1856 = vrot.slane %v1836, 1
        %v1857 = vrot.slane %v1836, 2
        %v1858 = vrot.slane %v1836, 3
        %v1859 = vrot.slane %v1836, 4
        %v1860 = vrot.slane %v1836, 5
        %v1861 = vrot.slane %v1836, 6
        %v1862 = vrot.slane %v1836, 7
        %v1863 = vrot.slane %v1837, 1
        %v1864 = vrot.slane %v1837, 2
        %v1865 = vrot.slane %v1837, 3
        %v1866 = vrot.slane %v1837, 4
        %v1867 = vrot.slane %v1837, 5
        %v1868 = vrot.slane %v1837, 6
        %v1869 = vrot.slane %v1837, 7
        %v1870 = vrot.slane %v1838, 1
        %v1871 = vrot.slane %v1838, 2
        %v1872 = vrot.slane %v1838, 3
        %v1873 = vrot.slane %v1838, 4
        %v1874 = vrot.slane %v1838, 5
        %v1875 = vrot.slane %v1838, 6
        %v1876 = vrot.slane %v1838, 7
        %v1877 = vrot.slane %v1839, 1
        %v1878 = vrot.slane %v1839, 2
        %v1879 = vrot.slane %v1839, 3
        %v1880 = vrot.slane %v1839, 4
        %v1881 = vrot.slane %v1839, 5
        %v1882 = vrot.slane %v1839, 6
        %v1883 = vrot.slane %v1839, 7
        %v1884 = vrot.slane %v1840, 1
        %v1885 = vrot.slane %v1840, 2
        %v1886 = vrot.slane %v1840, 3
        %v1887 = vrot.slane %v1840, 4
        %v1888 = vrot.slane %v1840, 5
        %v1889 = vrot.slane %v1840, 6
        %v1890 = vrot.slane %v1840, 7
        %1891 = vst [vmem:[#allocation5] sm:$0xf] 0
        %vm1892 = vcmask 1040384
        %vm1893 = vmand %vm1892, %vm659
        %v1894 = vld [vmem:[#allocation5 + $0x4] sm:$0x1]
        %v1895 = vsel %vm1893, 0, %v1894
        %1896 = vst [vmem:[#allocation5 + $0x4] sm:$0x1] %v1895
        %s1897 = scalar_lea.vmem [#allocation5], 64
        %1898 = vst [vmem:[%s1897] sm:$0xf] 0
        %v1899 = vld [vmem:[%s1897 + $0x4] sm:$0x1]
        %v1900 = vsel %vm1893, 0, %v1899
        %1901 = vst [vmem:[%s1897 + $0x4] sm:$0x1] %v1900
        %v1902 = vld [vmem:[#allocation5] sm:$0x1]
        %v1903 = vsel %vm1893, 0, %v1902
        %1904 = vst [vmem:[#allocation5] sm:$0x1] %v1903
        %v1905 = vld [vmem:[#allocation5 + $0x8] sm:$0x1]
        %v1906 = vsel %vm1893, 0, %v1905
        %1907 = vst [vmem:[#allocation5 + $0x8] sm:$0x1] %v1906
        %v1908 = vld [vmem:[#allocation5 + $0x10] sm:$0x1]
        %v1909 = vsel %vm1893, 0, %v1908
        %1910 = vst [vmem:[#allocation5 + $0x10] sm:$0x1] %v1909
        %v1911 = vld [vmem:[#allocation5 + $0x18] sm:$0x1]
        %v1912 = vsel %vm1893, 0, %v1911
        %1913 = vst [vmem:[#allocation5 + $0x18] sm:$0x1] %v1912
        %v1914 = vld [vmem:[#allocation5 + $0x20] sm:$0x1]
        %v1915 = vsel %vm1893, 0, %v1914
        %1916 = vst [vmem:[#allocation5 + $0x20] sm:$0x1] %v1915
        %v1917 = vld [vmem:[#allocation5 + $0x28] sm:$0x1]
        %v1918 = vsel %vm1893, 0, %v1917
        %1919 = vst [vmem:[#allocation5 + $0x28] sm:$0x1] %v1918
        %v1920 = vld [vmem:[#allocation5 + $0x30] sm:$0x1]
        %v1921 = vsel %vm1893, 0, %v1920
        %1922 = vst [vmem:[#allocation5 + $0x30] sm:$0x1] %v1921
        %v1923 = vld [vmem:[#allocation5 + $0x38] sm:$0x1]
        %v1924 = vsel %vm1893, 0, %v1923
        %1925 = vst [vmem:[#allocation5 + $0x38] sm:$0x1] %v1924
        %v1926 = vld [vmem:[#allocation5 + $0x40] sm:$0x1]
        %v1927 = vsel %vm1893, 0, %v1926
        %1928 = vst [vmem:[#allocation5 + $0x40] sm:$0x1] %v1927
        %v1929 = vld [vmem:[#allocation5 + $0x4] sm:$0x1]
        %v1930 = vsel %vm1893, 0, %v1929
        %1931 = vst [vmem:[#allocation5 + $0x4] sm:$0x1] %v1930
        %v1932 = vld [vmem:[#allocation5 + $0xc] sm:$0x1]
        %v1933 = vsel %vm1893, 0, %v1932
        %1934 = vst [vmem:[#allocation5 + $0xc] sm:$0x1] %v1933
        %v1935 = vld [vmem:[#allocation5 + $0x14] sm:$0x1]
        %v1936 = vsel %vm1893, 0, %v1935
        %1937 = vst [vmem:[#allocation5 + $0x14] sm:$0x1] %v1936
        %v1938 = vld [vmem:[#allocation5 + $0x1c] sm:$0x1]
        %v1939 = vsel %vm1893, 0, %v1938
        %1940 = vst [vmem:[#allocation5 + $0x1c] sm:$0x1] %v1939
        %v1941 = vld [vmem:[#allocation5 + $0x24] sm:$0x1]
        %v1942 = vsel %vm1893, 0, %v1941
        %1943 = vst [vmem:[#allocation5 + $0x24] sm:$0x1] %v1942
        %v1944 = vld [vmem:[#allocation5 + $0x2c] sm:$0x1]
        %v1945 = vsel %vm1893, 0, %v1944
        %1946 = vst [vmem:[#allocation5 + $0x2c] sm:$0x1] %v1945
        %v1947 = vld [vmem:[#allocation5 + $0x34] sm:$0x1]
        %v1948 = vsel %vm1893, 0, %v1947
        %1949 = vst [vmem:[#allocation5 + $0x34] sm:$0x1] %v1948
        %v1950 = vld [vmem:[#allocation5 + $0x3c] sm:$0x1]
        %v1951 = vsel %vm1893, 0, %v1950
        %1952 = vst [vmem:[#allocation5 + $0x3c] sm:$0x1] %v1951
        %v1953 = vld [vmem:[#allocation5 + $0x44] sm:$0x1]
        %v1954 = vsel %vm1893, 0, %v1953
        %1955 = vst [vmem:[#allocation5 + $0x44] sm:$0x1] %v1954
        %1956 = vst [vmem:[#allocation1] ss:$9 sm:$0xff] %v1835
        %s1957 = scalar_lea.vmem [#allocation1], 1
        %1958 = vst [vmem:[%s1957] ss:$9 sm:$0xff] %v1849
        %s1959 = scalar_lea.vmem [#allocation1], 2
        %1960 = vst [vmem:[%s1959] ss:$9 sm:$0xff] %v1850
        %s1961 = scalar_lea.vmem [#allocation1], 3
        %1962 = vst [vmem:[%s1961] ss:$9 sm:$0xff] %v1851
        %s1963 = scalar_lea.vmem [#allocation1], 4
        %1964 = vst [vmem:[%s1963] ss:$9 sm:$0xff] %v1852
        %s1965 = scalar_lea.vmem [#allocation1], 5
        %1966 = vst [vmem:[%s1965] ss:$9 sm:$0xff] %v1853
        %s1967 = scalar_lea.vmem [#allocation1], 6
        %1968 = vst [vmem:[%s1967] ss:$9 sm:$0xff] %v1854
        %v1969 = vld [vmem:[#allocation1] sm:$0xff]
        %1970 = vst [vmem:[#allocation1] ss:$9 sm:$0xff] %v1855
        %1971 = vst [vmem:[%s1957] ss:$9 sm:$0xff] %v1836
        %1972 = vst [vmem:[%s1959] ss:$9 sm:$0xff] %v1856
        %1973 = vst [vmem:[%s1961] ss:$9 sm:$0xff] %v1857
        %1974 = vst [vmem:[%s1963] ss:$9 sm:$0xff] %v1858
        %1975 = vst [vmem:[%s1965] ss:$9 sm:$0xff] %v1859
        %1976 = vst [vmem:[%s1967] ss:$9 sm:$0xff] %v1860
        %v1977 = vld [vmem:[#allocation1] sm:$0xff]
        %1978 = vst [vmem:[#allocation1] ss:$9 sm:$0xff] %v1861
        %1979 = vst [vmem:[%s1957] ss:$9 sm:$0xff] %v1862
        %1980 = vst [vmem:[%s1959] ss:$9 sm:$0xff] %v1837
        %1981 = vst [vmem:[%s1961] ss:$9 sm:$0xff] %v1863
        %1982 = vst [vmem:[%s1963] ss:$9 sm:$0xff] %v1864
        %1983 = vst [vmem:[%s1965] ss:$9 sm:$0xff] %v1865
        %1984 = vst [vmem:[%s1967] ss:$9 sm:$0xff] %v1866
        %v1985 = vld [vmem:[#allocation1] sm:$0xff]
        %1986 = vst [vmem:[#allocation1] ss:$9 sm:$0xff] %v1867
        %1987 = vst [vmem:[%s1957] ss:$9 sm:$0xff] %v1868
        %1988 = vst [vmem:[%s1959] ss:$9 sm:$0xff] %v1869
        %1989 = vst [vmem:[%s1961] ss:$9 sm:$0xff] %v1838
        %1990 = vst [vmem:[%s1963] ss:$9 sm:$0xff] %v1870
        %1991 = vst [vmem:[%s1965] ss:$9 sm:$0xff] %v1871
        %1992 = vst [vmem:[%s1967] ss:$9 sm:$0xff] %v1872
        %v1993 = vld [vmem:[#allocation1] sm:$0xff]
        %1994 = vst [vmem:[#allocation1] ss:$9 sm:$0xff] %v1873
        %1995 = vst [vmem:[%s1957] ss:$9 sm:$0xff] %v1874
        %1996 = vst [vmem:[%s1959] ss:$9 sm:$0xff] %v1875
        %1997 = vst [vmem:[%s1961] ss:$9 sm:$0xff] %v1876
        %1998 = vst [vmem:[%s1963] ss:$9 sm:$0xff] %v1839
        %1999 = vst [vmem:[%s1965] ss:$9 sm:$0xff] %v1877
        %2000 = vst [vmem:[%s1967] ss:$9 sm:$0xff] %v1878
        %v2001 = vld [vmem:[#allocation1] sm:$0xff]
        %2002 = vst [vmem:[#allocation1] ss:$9 sm:$0xff] %v1879
        %2003 = vst [vmem:[%s1957] ss:$9 sm:$0xff] %v1880
        %2004 = vst [vmem:[%s1959] ss:$9 sm:$0xff] %v1881
        %2005 = vst [vmem:[%s1961] ss:$9 sm:$0xff] %v1882
        %2006 = vst [vmem:[%s1963] ss:$9 sm:$0xff] %v1883
        %2007 = vst [vmem:[%s1965] ss:$9 sm:$0xff] %v1840
        %2008 = vst [vmem:[%s1967] ss:$9 sm:$0xff] %v1884
        %v2009 = vld [vmem:[#allocation1] sm:$0xff]
        %2010 = vst [vmem:[#allocation1] ss:$9 sm:$0xff] %v1885
        %2011 = vst [vmem:[%s1957] ss:$9 sm:$0xff] %v1886
        %2012 = vst [vmem:[%s1959] ss:$9 sm:$0xff] %v1887
        %2013 = vst [vmem:[%s1961] ss:$9 sm:$0xff] %v1888
        %2014 = vst [vmem:[%s1963] ss:$9 sm:$0xff] %v1889
        %2015 = vst [vmem:[%s1965] ss:$9 sm:$0xff] %v1890
        %2016 = vst [vmem:[%s1967] ss:$9 sm:$0xff] %v1841
        %v2017 = vld [vmem:[#allocation1] sm:$0xff]
        %v2025 = vpack.c.bf16 %v1969, %v1969
        %v2026 = vpack.c.bf16 %v1977, %v1977
        %v2027 = vpack.c.bf16 %v1985, %v1985
        %v2028 = vpack.c.bf16 %v1993, %v1993
        %v2029 = vpack.c.bf16 %v2001, %v2001
        %v2030 = vpack.c.bf16 %v2009, %v2009
        %v2031 = vpack.c.bf16 %v2017, %v2017
        %v2033 = vshrl.u32 %v2025, 16
        %v2035 = vrot.slane %v2033, 7
        %v2036 = vshll.u32 %v2025, 16
        %v2038 = vor.u32 %v2035, %v2036
        %v2040 = vshrl.u32 %v2026, 16
        %v2042 = vrot.slane %v2040, 7
        %v2043 = vshll.u32 %v2026, 16
        %v2045 = vor.u32 %v2042, %v2043
        %v2047 = vshrl.u32 %v2027, 16
        %v2049 = vrot.slane %v2047, 7
        %v2050 = vshll.u32 %v2027, 16
        %v2052 = vor.u32 %v2049, %v2050
        %v2054 = vshrl.u32 %v2028, 16
        %v2056 = vrot.slane %v2054, 7
        %v2057 = vshll.u32 %v2028, 16
        %v2059 = vor.u32 %v2056, %v2057
        %v2061 = vshrl.u32 %v2029, 16
        %v2063 = vrot.slane %v2061, 7
        %v2064 = vshll.u32 %v2029, 16
        %v2066 = vor.u32 %v2063, %v2064
        %v2068 = vshrl.u32 %v2030, 16
        %v2070 = vrot.slane %v2068, 7
        %v2071 = vshll.u32 %v2030, 16
        %v2073 = vor.u32 %v2070, %v2071
        %v2075 = vshrl.u32 %v2031, 16
        %v2077 = vrot.slane %v2075, 7
        %v2078 = vshll.u32 %v2031, 16
        %v2080 = vor.u32 %v2077, %v2078
        %s2088 = scalar_lea.vmem [#allocation5], 8
        %vm2089 = vcmask 1043456
        %vm2090 = vmand %vm2089, %vm752
        %v2091 = vld [vmem:[%s2088] sm:$0xf]
        %v2092 = vsel %vm2090, %v2038, %v2091
        %2093 = vst [vmem:[%s2088] sm:$0xf] %v2092
        %v2094 = vld [vmem:[%s2088 + $0x8] sm:$0xf]
        %v2095 = vsel %vm2090, %v2045, %v2094
        %2096 = vst [vmem:[%s2088 + $0x8] sm:$0xf] %v2095
        %v2097 = vld [vmem:[%s2088 + $0x10] sm:$0xf]
        %v2098 = vsel %vm2090, %v2052, %v2097
        %2099 = vst [vmem:[%s2088 + $0x10] sm:$0xf] %v2098
        %v2100 = vld [vmem:[%s2088 + $0x18] sm:$0xf]
        %v2101 = vsel %vm2090, %v2059, %v2100
        %2102 = vst [vmem:[%s2088 + $0x18] sm:$0xf] %v2101
        %v2103 = vld [vmem:[%s2088 + $0x20] sm:$0xf]
        %v2104 = vsel %vm2090, %v2066, %v2103
        %2105 = vst [vmem:[%s2088 + $0x20] sm:$0xf] %v2104
        %v2106 = vld [vmem:[%s2088 + $0x28] sm:$0xf]
        %v2107 = vsel %vm2090, %v2073, %v2106
        %2108 = vst [vmem:[%s2088 + $0x28] sm:$0xf] %v2107
        %v2109 = vld [vmem:[%s2088 + $0x30] sm:$0xf]
        %v2110 = vsel %vm2090, %v2080, %v2109
        %2111 = vst [vmem:[%s2088 + $0x30] sm:$0xf] %v2110
        %v2112 = vld [vmem:[#allocation5] sm:$0xf]
        %v2113 = vld [vmem:[#allocation5 + $0x4] sm:$0x1]
        %v2114 = vld [vmem:[#allocation5 + $0x8] sm:$0xf]
        %v2115 = vld [vmem:[#allocation5 + $0xc] sm:$0x1]
        %v2116 = vld [vmem:[#allocation5 + $0x10] sm:$0xf]
        %v2117 = vld [vmem:[#allocation5 + $0x14] sm:$0x1]
        %v2118 = vld [vmem:[#allocation5 + $0x18] sm:$0xf]
        %v2119 = vld [vmem:[#allocation5 + $0x1c] sm:$0x1]
        %v2120 = vld [vmem:[#allocation5 + $0x20] sm:$0xf]
        %v2121 = vld [vmem:[#allocation5 + $0x24] sm:$0x1]
        %v2122 = vld [vmem:[#allocation5 + $0x28] sm:$0xf]
        %v2123 = vld [vmem:[#allocation5 + $0x2c] sm:$0x1]
        %v2124 = vld [vmem:[#allocation5 + $0x30] sm:$0xf]
        %v2125 = vld [vmem:[#allocation5 + $0x34] sm:$0x1]
        %v2126 = vld [vmem:[#allocation5 + $0x38] sm:$0xf]
        %v2127 = vld [vmem:[#allocation5 + $0x3c] sm:$0x1]
        %v2128 = vld [vmem:[#allocation5 + $0x40] sm:$0xf]
        %v2129 = vld [vmem:[#allocation5 + $0x44] sm:$0x1]
        %v2146 = vunpack.c.l.b16 %v2112
        %v2147 = vunpack.c.l.b16 %v2113
        %v2148 = vunpack.c.l.b16 %v2114
        %v2149 = vunpack.c.l.b16 %v2115
        %v2150 = vunpack.c.l.b16 %v2116
        %v2151 = vunpack.c.l.b16 %v2117
        %v2152 = vunpack.c.l.b16 %v2118
        %v2153 = vunpack.c.l.b16 %v2119
        %v2154 = vunpack.c.l.b16 %v2120
        %v2155 = vunpack.c.l.b16 %v2121
        %v2156 = vunpack.c.l.b16 %v2122
        %v2157 = vunpack.c.l.b16 %v2123
        %v2158 = vunpack.c.l.b16 %v2124
        %v2159 = vunpack.c.l.b16 %v2125
        %v2160 = vunpack.c.l.b16 %v2126
        %v2161 = vunpack.c.l.b16 %v2127
        %v2162 = vpack.c.b16 %v2147, %v2146
        %v2163 = vpack.c.b16 %v2149, %v2148
        %v2164 = vpack.c.b16 %v2151, %v2150
        %v2165 = vpack.c.b16 %v2153, %v2152
        %v2166 = vpack.c.b16 %v2155, %v2154
        %v2167 = vpack.c.b16 %v2157, %v2156
        %v2168 = vpack.c.b16 %v2159, %v2158
        %v2169 = vpack.c.b16 %v2161, %v2160
        %v2171 = vshrl.u32 %v2162, 16
        %v2173 = vshll.u32 %v2162, 16
        %v2175 = vrot.slane %v2173, 1
        %v2176 = vor.u32 %v2171, %v2175
        %v2178 = vshrl.u32 %v2163, 16
        %v2180 = vshll.u32 %v2163, 16
        %v2182 = vrot.slane %v2180, 1
        %v2183 = vor.u32 %v2178, %v2182
        %v2185 = vshrl.u32 %v2164, 16
        %v2187 = vshll.u32 %v2164, 16
        %v2189 = vrot.slane %v2187, 1
        %v2190 = vor.u32 %v2185, %v2189
        %v2192 = vshrl.u32 %v2165, 16
        %v2194 = vshll.u32 %v2165, 16
        %v2196 = vrot.slane %v2194, 1
        %v2197 = vor.u32 %v2192, %v2196
        %v2199 = vshrl.u32 %v2166, 16
        %v2201 = vshll.u32 %v2166, 16
        %v2203 = vrot.slane %v2201, 1
        %v2204 = vor.u32 %v2199, %v2203
        %v2206 = vshrl.u32 %v2167, 16
        %v2208 = vshll.u32 %v2167, 16
        %v2210 = vrot.slane %v2208, 1
        %v2211 = vor.u32 %v2206, %v2210
        %v2213 = vshrl.u32 %v2168, 16
        %v2215 = vshll.u32 %v2168, 16
        %v2217 = vrot.slane %v2215, 1
        %v2218 = vor.u32 %v2213, %v2217
        %v2220 = vshrl.u32 %v2169, 16
        %v2222 = vshll.u32 %v2169, 16
        %v2224 = vrot.slane %v2222, 1
        %v2225 = vor.u32 %v2220, %v2224
        %v2228 = vunpack.c.l.b16 %v2128
        %v2229 = vunpack.c.l.b16 %v2129
        %v2230 = vpack.c.b16 %v2229, %v2228
        %v2232 = vshrl.u32 %v2230, 16
        %v2234 = vshll.u32 %v2230, 16
        %v2236 = vrot.slane %v2234, 1
        %v2237 = vor.u32 %v2232, %v2236
        %v2238 = vunpack.c.l.b16 %v2176
        %v2239 = vunpack.c.l.b16 %v2183
        %v2240 = vunpack.c.l.b16 %v2190
        %v2241 = vunpack.c.l.b16 %v2197
        %v2242 = vunpack.c.l.b16 %v2204
        %v2243 = vunpack.c.l.b16 %v2211
        %v2244 = vunpack.c.l.b16 %v2218
        %v2245 = vunpack.c.l.b16 %v2225
        %v2246 = vunpack.c.l.b16 %v2237
        %v2247 = vld [vmem:[%s7] sm:$0xf]
        %v2248 = vld [vmem:[%s7 + $0x4] sm:$0xf]
        %v2249 = vld [vmem:[%s7 + $0x8] sm:$0xf]
        %v2250 = vld [vmem:[%s7 + $0xc] sm:$0xf]
        %v2251 = vld [vmem:[%s7 + $0x10] sm:$0xf]
        %v2252 = vld [vmem:[%s7 + $0x14] sm:$0xf]
        %v2253 = vld [vmem:[%s7 + $0x18] sm:$0xf]
        %v2254 = vld [vmem:[%s7 + $0x1c] sm:$0xf]
        %v2255 = vld [vmem:[%s7 + $0x20] sm:$0xf]
        %v2256 = vld [vmem:[%s7 + $0x24] sm:$0xf]
        %v2257 = vld [vmem:[%s7 + $0x28] sm:$0xf]
        %v2258 = vld [vmem:[%s7 + $0x2c] sm:$0xf]
        %v2259 = vld [vmem:[%s7 + $0x30] sm:$0xf]
        %v2260 = vld [vmem:[%s7 + $0x34] sm:$0xf]
        %v2261 = vld [vmem:[%s7 + $0x38] sm:$0xf]
        %v2262 = vld [vmem:[%s7 + $0x3c] sm:$0xf]
        %v2263 = vld [vmem:[%s7 + $0x40] sm:$0xf]
        %v2264 = vld [vmem:[%s7 + $0x44] sm:$0xf]
        %v2265 = vld [vmem:[%s7 + $0x48] sm:$0xf]
        %v2266 = vld [vmem:[%s7 + $0x4c] sm:$0xf]
        %v2267 = vld [vmem:[%s7 + $0x50] sm:$0xf]
        %v2268 = vld [vmem:[%s7 + $0x54] sm:$0xf]
        %v2269 = vld [vmem:[%s7 + $0x58] sm:$0xf]
        %v2270 = vld [vmem:[%s7 + $0x5c] sm:$0xf]
        %v2271 = vld [vmem:[%s7 + $0x60] sm:$0xf]
        %v2272 = vld [vmem:[%s7 + $0x64] sm:$0xf]
        %v2273 = vld [vmem:[%s7 + $0x68] sm:$0xf]
        %v2274 = vld [vmem:[%s7 + $0x6c] sm:$0xf]
        %v2275 = vld [vmem:[%s7 + $0x70] sm:$0xf]
        %v2276 = vld [vmem:[%s7 + $0x74] sm:$0xf]
        %v2277 = vld [vmem:[%s7 + $0x78] sm:$0xf]
        %v2278 = vld [vmem:[%s7 + $0x7c] sm:$0xf]
        %v2279 = vld [vmem:[%s7 + $0x80] sm:$0xf]
        %v2280 = vld [vmem:[%s7 + $0x84] sm:$0xf]
        %v2281 = vld [vmem:[%s7 + $0x88] sm:$0xf]
        %v2282 = vld [vmem:[%s7 + $0x8c] sm:$0xf]
        %v2283 = vld [vmem:[%s7 + $0x90] sm:$0xf]
        %v2284 = vld [vmem:[%s7 + $0x94] sm:$0xf]
        %v2285 = vld [vmem:[%s7 + $0x98] sm:$0xf]
        %v2286 = vld [vmem:[%s7 + $0x9c] sm:$0xf]
        %v2287 = vld [vmem:[%s7 + $0xa0] sm:$0xf]
        %v2288 = vld [vmem:[%s7 + $0xa4] sm:$0xf]
        %v2289 = vld [vmem:[%s7 + $0xa8] sm:$0xf]
        %v2290 = vld [vmem:[%s7 + $0xac] sm:$0xf]
        %v2291 = vld [vmem:[%s7 + $0xb0] sm:$0xf]
        %v2292 = vld [vmem:[%s7 + $0xb4] sm:$0xf]
        %v2293 = vld [vmem:[%s7 + $0xb8] sm:$0xf]
        %v2294 = vld [vmem:[%s7 + $0xbc] sm:$0xf]
        %v2295 = vld [vmem:[%s7 + $0xc0] sm:$0xf]
        %v2296 = vld [vmem:[%s7 + $0xc4] sm:$0xf]
        %v2297 = vld [vmem:[%s7 + $0xc8] sm:$0xf]
        %v2298 = vld [vmem:[%s7 + $0xcc] sm:$0xf]
        %v2299 = vld [vmem:[%s7 + $0xd0] sm:$0xf]
        %v2300 = vld [vmem:[%s7 + $0xd4] sm:$0xf]
        %v2301 = vld [vmem:[%s7 + $0xd8] sm:$0xf]
        %v2302 = vld [vmem:[%s7 + $0xdc] sm:$0xf]
        %v2303 = vld [vmem:[%s7 + $0xe0] sm:$0xf]
        %v2304 = vld [vmem:[%s7 + $0xe4] sm:$0xf]
        %v2305 = vld [vmem:[%s7 + $0xe8] sm:$0xf]
        %v2306 = vld [vmem:[%s7 + $0xec] sm:$0xf]
        %v2307 = vld [vmem:[%s7 + $0xf0] sm:$0xf]
        %v2308 = vld [vmem:[%s7 + $0xf4] sm:$0xf]
        %v2309 = vld [vmem:[%s7 + $0xf8] sm:$0xf]
        %v2310 = vld [vmem:[%s7 + $0xfc] sm:$0xf]
        %v2311 = vld [vmem:[%s8] sm:$0x1]
        %v2313 = vperm.slane %v2311, 0
        %v2315 = vpack.c.b16 %v2148, %v2146
        %v2316 = vpack.c.b16 %v2239, %v2238
        %v2317 = vpack.c.b16 %v2150, %v2148
        %v2318 = vpack.c.b16 %v2240, %v2239
        %v2319 = vpack.c.b16 %v2152, %v2150
        %v2320 = vpack.c.b16 %v2241, %v2240
        %v2321 = vpack.c.b16 %v2154, %v2152
        %v2322 = vpack.c.b16 %v2242, %v2241
        %v2323 = vpack.c.b16 %v2156, %v2154
        %v2324 = vpack.c.b16 %v2243, %v2242
        %v2325 = vpack.c.b16 %v2158, %v2156
        %v2326 = vpack.c.b16 %v2244, %v2243
        %v2327 = vpack.c.b16 %v2160, %v2158
        %v2328 = vpack.c.b16 %v2245, %v2244
        %v2329 = vpack.c.b16 %v2228, %v2160
        %v2330 = vpack.c.b16 %v2246, %v2245
        %v2411 = vunpack.c.l.b16 %v2247
        %v2412 = vunpack.c.l.b16 %v2248
        %v2413 = vunpack.c.l.b16 %v2249
        %v2414 = vunpack.c.l.b16 %v2250
        %v2415 = vunpack.c.l.b16 %v2251
        %v2416 = vunpack.c.l.b16 %v2252
        %v2417 = vunpack.c.l.b16 %v2253
        %v2418 = vunpack.c.l.b16 %v2254
        %v2419 = vunpack.c.l.b16 %v2255
        %v2420 = vunpack.c.l.b16 %v2256
        %v2421 = vunpack.c.l.b16 %v2257
        %v2422 = vunpack.c.l.b16 %v2258
        %v2423 = vunpack.c.l.b16 %v2259
        %v2424 = vunpack.c.l.b16 %v2260
        %v2425 = vunpack.c.l.b16 %v2261
        %v2426 = vunpack.c.l.b16 %v2262
        %v2427 = vunpack.c.l.b16 %v2263
        %v2428 = vunpack.c.l.b16 %v2264
        %v2429 = vunpack.c.l.b16 %v2265
        %v2430 = vunpack.c.l.b16 %v2266
        %v2431 = vunpack.c.l.b16 %v2267
        %v2432 = vunpack.c.l.b16 %v2268
        %v2433 = vunpack.c.l.b16 %v2269
        %v2434 = vunpack.c.l.b16 %v2270
        %v2435 = vunpack.c.l.b16 %v2271
        %v2436 = vunpack.c.l.b16 %v2272
        %v2437 = vunpack.c.l.b16 %v2273
        %v2438 = vunpack.c.l.b16 %v2274
        %v2439 = vunpack.c.l.b16 %v2275
        %v2440 = vunpack.c.l.b16 %v2276
        %v2441 = vunpack.c.l.b16 %v2277
        %v2442 = vunpack.c.l.b16 %v2278
        %v2443 = vunpack.c.l.b16 %v2279
        %v2444 = vunpack.c.l.b16 %v2280
        %v2445 = vunpack.c.l.b16 %v2281
        %v2446 = vunpack.c.l.b16 %v2282
        %v2447 = vunpack.c.l.b16 %v2283
        %v2448 = vunpack.c.l.b16 %v2284
        %v2449 = vunpack.c.l.b16 %v2285
        %v2450 = vunpack.c.l.b16 %v2286
        %v2451 = vunpack.c.l.b16 %v2287
        %v2452 = vunpack.c.l.b16 %v2288
        %v2453 = vunpack.c.l.b16 %v2289
        %v2454 = vunpack.c.l.b16 %v2290
        %v2455 = vunpack.c.l.b16 %v2291
        %v2456 = vunpack.c.l.b16 %v2292
        %v2457 = vunpack.c.l.b16 %v2293
        %v2458 = vunpack.c.l.b16 %v2294
        %v2459 = vunpack.c.l.b16 %v2295
        %v2460 = vunpack.c.l.b16 %v2296
        %v2461 = vunpack.c.l.b16 %v2297
        %v2462 = vunpack.c.l.b16 %v2298
        %v2463 = vunpack.c.l.b16 %v2299
        %v2464 = vunpack.c.l.b16 %v2300
        %v2465 = vunpack.c.l.b16 %v2301
        %v2466 = vunpack.c.l.b16 %v2302
        %v2467 = vunpack.c.l.b16 %v2303
        %v2468 = vunpack.c.l.b16 %v2304
        %v2469 = vunpack.c.l.b16 %v2305
        %v2470 = vunpack.c.l.b16 %v2306
        %v2471 = vunpack.c.l.b16 %v2307
        %v2472 = vunpack.c.l.b16 %v2308
        %v2473 = vunpack.c.l.b16 %v2309
        %v2474 = vunpack.c.l.b16 %v2310
        %v2475 = vpack.c.b16 %v2412, %v2411
        %v2476 = vpack.c.b16 %v2414, %v2413
        %v2477 = vpack.c.b16 %v2416, %v2415
        %v2478 = vpack.c.b16 %v2418, %v2417
        %v2479 = vpack.c.b16 %v2420, %v2419
        %v2480 = vpack.c.b16 %v2422, %v2421
        %v2481 = vpack.c.b16 %v2424, %v2423
        %v2482 = vpack.c.b16 %v2426, %v2425
        %v2483 = vpack.c.b16 %v2428, %v2427
        %v2484 = vpack.c.b16 %v2430, %v2429
        %v2485 = vpack.c.b16 %v2432, %v2431
        %v2486 = vpack.c.b16 %v2434, %v2433
        %v2487 = vpack.c.b16 %v2436, %v2435
        %v2488 = vpack.c.b16 %v2438, %v2437
        %v2489 = vpack.c.b16 %v2440, %v2439
        %v2490 = vpack.c.b16 %v2442, %v2441
        %v2491 = vpack.c.b16 %v2444, %v2443
        %v2492 = vpack.c.b16 %v2446, %v2445
        %v2493 = vpack.c.b16 %v2448, %v2447
        %v2494 = vpack.c.b16 %v2450, %v2449
        %v2495 = vpack.c.b16 %v2452, %v2451
        %v2496 = vpack.c.b16 %v2454, %v2453
        %v2497 = vpack.c.b16 %v2456, %v2455
        %v2498 = vpack.c.b16 %v2458, %v2457
        %v2499 = vpack.c.b16 %v2460, %v2459
        %v2500 = vpack.c.b16 %v2462, %v2461
        %v2501 = vpack.c.b16 %v2464, %v2463
        %v2502 = vpack.c.b16 %v2466, %v2465
        %v2503 = vpack.c.b16 %v2468, %v2467
        %v2504 = vpack.c.b16 %v2470, %v2469
        %v2505 = vpack.c.b16 %v2472, %v2471
        %v2506 = vpack.c.b16 %v2474, %v2473
        %2539 = vmatpush.bf16.msra.mxu0 %v2482
        %2540 = vmatpush.bf16.msra.mxu0 %v2481
        %2541 = vmatpush.bf16.msra.mxu0 %v2480
        %2542 = vmatpush.bf16.msra.mxu0 %v2479
        %2543 = vmatpush.bf16.msra.mxu0 %v2478
        %2544 = vmatpush.bf16.msra.mxu0 %v2477
        %2545 = vmatpush.bf16.msra.mxu0 %v2476
        %2546 = vmatpush.bf16.msra.mxu0 %v2475
        %2547 = vmatmul.bf16.gmra.mxu0 %v2315
        %v2548 = vpop.f32.mrf.mxu0
        %v2549 = vadd.f32 %v2313, %v2548
        %v2550 = vpop.f32.mrf.mxu0
        %v2551 = vadd.f32 %v2313, %v2550
        %2552 = vmatmul.bf16.gmra.mxu0 %v2319
        %v2553 = vpop.f32.mrf.mxu0
        %v2554 = vadd.f32 %v2313, %v2553
        %v2555 = vpop.f32.mrf.mxu0
        %v2556 = vadd.f32 %v2313, %v2555
        %2557 = vmatmul.bf16.gmra.mxu0 %v2323
        %v2558 = vpop.f32.mrf.mxu0
        %v2559 = vadd.f32 %v2313, %v2558
        %v2560 = vpop.f32.mrf.mxu0
        %v2561 = vadd.f32 %v2313, %v2560
        %2562 = vmatmul.bf16.gmra.mxu0 %v2327
        %v2563 = vpop.f32.mrf.mxu0
        %v2564 = vadd.f32 %v2313, %v2563
        %v2565 = vpop.f32.mrf.mxu0
        %v2566 = vadd.f32 %v2313, %v2565
        %2567 = vdwg.mxu0
        %2568 = vmatpush.bf16.msra.mxu0 %v2490
        %2569 = vmatpush.bf16.msra.mxu0 %v2489
        %2570 = vmatpush.bf16.msra.mxu0 %v2488
        %2571 = vmatpush.bf16.msra.mxu0 %v2487
        %2572 = vmatpush.bf16.msra.mxu0 %v2486
        %2573 = vmatpush.bf16.msra.mxu0 %v2485
        %2574 = vmatpush.bf16.msra.mxu0 %v2484
        %2575 = vmatpush.bf16.msra.mxu0 %v2483
        %2576 = vmatmul.bf16.gmra.mxu0 %v2316
        %v2577 = vpop.f32.mrf.mxu0
        %v2578 = vadd.f32 %v2549, %v2577
        %v2579 = vpop.f32.mrf.mxu0
        %v2580 = vadd.f32 %v2551, %v2579
        %2581 = vmatmul.bf16.gmra.mxu0 %v2320
        %v2582 = vpop.f32.mrf.mxu0
        %v2583 = vadd.f32 %v2554, %v2582
        %v2584 = vpop.f32.mrf.mxu0
        %v2585 = vadd.f32 %v2556, %v2584
        %2586 = vmatmul.bf16.gmra.mxu0 %v2324
        %v2587 = vpop.f32.mrf.mxu0
        %v2588 = vadd.f32 %v2559, %v2587
        %v2589 = vpop.f32.mrf.mxu0
        %v2590 = vadd.f32 %v2561, %v2589
        %2591 = vmatmul.bf16.gmra.mxu0 %v2328
        %v2592 = vpop.f32.mrf.mxu0
        %v2593 = vadd.f32 %v2564, %v2592
        %v2594 = vpop.f32.mrf.mxu0
        %v2595 = vadd.f32 %v2566, %v2594
        %2596 = vdwg.mxu0
        %2597 = vmatpush.bf16.msra.mxu0 %v2498
        %2598 = vmatpush.bf16.msra.mxu0 %v2497
        %2599 = vmatpush.bf16.msra.mxu0 %v2496
        %2600 = vmatpush.bf16.msra.mxu0 %v2495
        %2601 = vmatpush.bf16.msra.mxu0 %v2494
        %2602 = vmatpush.bf16.msra.mxu0 %v2493
        %2603 = vmatpush.bf16.msra.mxu0 %v2492
        %2604 = vmatpush.bf16.msra.mxu0 %v2491
        %2605 = vmatmul.bf16.gmra.mxu0 %v2317
        %v2606 = vpop.f32.mrf.mxu0
        %v2607 = vadd.f32 %v2578, %v2606
        %v2608 = vpop.f32.mrf.mxu0
        %v2609 = vadd.f32 %v2580, %v2608
        %2610 = vmatmul.bf16.gmra.mxu0 %v2321
        %v2611 = vpop.f32.mrf.mxu0
        %v2612 = vadd.f32 %v2583, %v2611
        %v2613 = vpop.f32.mrf.mxu0
        %v2614 = vadd.f32 %v2585, %v2613
        %2615 = vmatmul.bf16.gmra.mxu0 %v2325
        %v2616 = vpop.f32.mrf.mxu0
        %v2617 = vadd.f32 %v2588, %v2616
        %v2618 = vpop.f32.mrf.mxu0
        %v2619 = vadd.f32 %v2590, %v2618
        %2620 = vmatmul.bf16.gmra.mxu0 %v2329
        %v2621 = vpop.f32.mrf.mxu0
        %v2622 = vadd.f32 %v2593, %v2621
        %v2623 = vpop.f32.mrf.mxu0
        %v2624 = vadd.f32 %v2595, %v2623
        %2625 = vdwg.mxu0
        %2626 = vmatpush.bf16.msra.mxu0 %v2506
        %2627 = vmatpush.bf16.msra.mxu0 %v2505
        %2628 = vmatpush.bf16.msra.mxu0 %v2504
        %2629 = vmatpush.bf16.msra.mxu0 %v2503
        %2630 = vmatpush.bf16.msra.mxu0 %v2502
        %2631 = vmatpush.bf16.msra.mxu0 %v2501
        %2632 = vmatpush.bf16.msra.mxu0 %v2500
        %2633 = vmatpush.bf16.msra.mxu0 %v2499
        %2634 = vmatmul.bf16.gmra.mxu0 %v2318
        %v2635 = vpop.f32.mrf.mxu0
        %v2636 = vadd.f32 %v2607, %v2635
        %v2637 = vpop.f32.mrf.mxu0
        %v2638 = vadd.f32 %v2609, %v2637
        %2639 = vmatmul.bf16.gmra.mxu0 %v2322
        %v2640 = vpop.f32.mrf.mxu0
        %v2641 = vadd.f32 %v2612, %v2640
        %v2642 = vpop.f32.mrf.mxu0
        %v2643 = vadd.f32 %v2614, %v2642
        %2644 = vmatmul.bf16.gmra.mxu0 %v2326
        %v2645 = vpop.f32.mrf.mxu0
        %v2646 = vadd.f32 %v2617, %v2645
        %v2647 = vpop.f32.mrf.mxu0
        %v2648 = vadd.f32 %v2619, %v2647
        %2649 = vmatmul.bf16.gmra.mxu0 %v2330
        %v2650 = vpop.f32.mrf.mxu0
        %v2651 = vadd.f32 %v2622, %v2650
        %v2652 = vpop.f32.mrf.mxu0
        %v2653 = vadd.f32 %v2624, %v2652
        %2654 = vdwg.mxu0
        %v2655 = vmax.f32 %v2636, 0.0
        %v2656 = vmax.f32 %v2638, 0.0
        %v2657 = vmax.f32 %v2641, 0.0
        %v2658 = vmax.f32 %v2643, 0.0
        %v2659 = vmax.f32 %v2646, 0.0
        %v2660 = vmax.f32 %v2648, 0.0
        %v2661 = vmax.f32 %v2651, 0.0
        %v2662 = vmax.f32 %v2653, 0.0
        %v2663 = vpack.c.bf16 %v2655, %v2655
        %v2664 = vpack.c.bf16 %v2656, %v2656
        %v2665 = vpack.c.bf16 %v2657, %v2657
        %v2666 = vpack.c.bf16 %v2658, %v2658
        %v2667 = vpack.c.bf16 %v2659, %v2659
        %v2668 = vpack.c.bf16 %v2660, %v2660
        %v2669 = vpack.c.bf16 %v2661, %v2661
        %v2670 = vpack.c.bf16 %v2662, %v2662
        %v2678 = vunpack.c.l.b16 %v2663
        %v2679 = vunpack.c.l.b16 %v2664
        %v2680 = vunpack.c.l.b16 %v2665
        %v2681 = vunpack.c.l.b16 %v2666
        %v2682 = vunpack.c.l.b16 %v2667
        %v2683 = vunpack.c.l.b16 %v2668
        %v2684 = vunpack.c.l.b16 %v2669
        %v2685 = vpack.c.b16 %v2678, %v2678
        %v2686 = vpack.c.b16 %v2679, %v2679
        %v2687 = vpack.c.b16 %v2680, %v2680
        %v2688 = vpack.c.b16 %v2681, %v2681
        %v2689 = vpack.c.b16 %v2682, %v2682
        %v2690 = vpack.c.b16 %v2683, %v2683
        %v2691 = vpack.c.b16 %v2684, %v2684
        %v2693 = vshrl.u32 %v2685, 16
        %v2695 = vshll.u32 %v2685, 16
        %v2697 = vrot.slane %v2695, 1
        %v2698 = vor.u32 %v2693, %v2697
        %v2700 = vshrl.u32 %v2686, 16
        %v2702 = vshll.u32 %v2686, 16
        %v2704 = vrot.slane %v2702, 1
        %v2705 = vor.u32 %v2700, %v2704
        %v2707 = vshrl.u32 %v2687, 16
        %v2709 = vshll.u32 %v2687, 16
        %v2711 = vrot.slane %v2709, 1
        %v2712 = vor.u32 %v2707, %v2711
        %v2714 = vshrl.u32 %v2688, 16
        %v2716 = vshll.u32 %v2688, 16
        %v2718 = vrot.slane %v2716, 1
        %v2719 = vor.u32 %v2714, %v2718
        %v2721 = vshrl.u32 %v2689, 16
        %v2723 = vshll.u32 %v2689, 16
        %v2725 = vrot.slane %v2723, 1
        %v2726 = vor.u32 %v2721, %v2725
        %v2728 = vshrl.u32 %v2690, 16
        %v2730 = vshll.u32 %v2690, 16
        %v2732 = vrot.slane %v2730, 1
        %v2733 = vor.u32 %v2728, %v2732
        %v2735 = vshrl.u32 %v2691, 16
        %v2737 = vshll.u32 %v2691, 16
        %v2739 = vrot.slane %v2737, 1
        %v2740 = vor.u32 %v2735, %v2739
        %2741 = vrot.lane.b32.xlu0 %v2698, 64
        %v2742 = vpop.permute.xlu0 %2741
        %2743 = vrot.lane.b32.xlu0 %v2705, 64
        %v2744 = vpop.permute.xlu0 %2743
        %2745 = vrot.lane.b32.xlu0 %v2712, 64
        %v2746 = vpop.permute.xlu0 %2745
        %2747 = vrot.lane.b32.xlu0 %v2719, 64
        %v2748 = vpop.permute.xlu0 %2747
        %2749 = vrot.lane.b32.xlu0 %v2726, 64
        %v2750 = vpop.permute.xlu0 %2749
        %2751 = vrot.lane.b32.xlu0 %v2733, 64
        %v2752 = vpop.permute.xlu0 %2751
        %2753 = vrot.lane.b32.xlu0 %v2740, 64
        %v2754 = vpop.permute.xlu0 %2753
        %v2756 = vunpack.c.l.b16 %v2670
        %v2757 = vpack.c.b16 %v2756, %v2756
        %v2759 = vshrl.u32 %v2757, 16
        %v2761 = vshll.u32 %v2757, 16
        %v2763 = vrot.slane %v2761, 1
        %v2764 = vor.u32 %v2759, %v2763
        %2765 = vrot.lane.b32.xlu0 %v2764, 64
        %v2766 = vpop.permute.xlu0 %2765
        %v2769 = vsel %vm901, %v2663, %v2742
        %v2772 = vsel %vm901, %v2664, %v2744
        %v2775 = vsel %vm901, %v2665, %v2746
        %v2778 = vsel %vm901, %v2666, %v2748
        %v2781 = vsel %vm901, %v2667, %v2750
        %v2784 = vsel %vm901, %v2668, %v2752
        %v2787 = vsel %vm901, %v2669, %v2754
        %v2790 = vsel %vm901, %v2670, %v2766
        %v2798 = vrot.slane %v2772, 7
        %v2799 = vrot.slane %v2775, 7
        %v2800 = vrot.slane %v2778, 7
        %v2801 = vrot.slane %v2781, 7
        %v2802 = vrot.slane %v2784, 7
        %v2803 = vrot.slane %v2787, 7
        %v2804 = vrot.slane %v2790, 7
        %v2806 = vsel %vm1412, %v2769, %v2798
        %v2808 = vsel %vm1416, %v2769, %v2798
        %v2810 = vrot.slane %v2808, 1
        %v2811 = vsel %vm1420, %v2769, %v2798
        %v2813 = vrot.slane %v2811, 2
        %v2814 = vsel %vm1424, %v2769, %v2798
        %v2816 = vrot.slane %v2814, 3
        %v2818 = vsel %vm1412, %v2772, %v2799
        %v2820 = vsel %vm1416, %v2772, %v2799
        %v2822 = vrot.slane %v2820, 1
        %v2823 = vsel %vm1420, %v2772, %v2799
        %v2825 = vrot.slane %v2823, 2
        %v2826 = vsel %vm1424, %v2772, %v2799
        %v2828 = vrot.slane %v2826, 3
        %v2830 = vsel %vm1412, %v2775, %v2800
        %v2832 = vsel %vm1416, %v2775, %v2800
        %v2834 = vrot.slane %v2832, 1
        %v2835 = vsel %vm1420, %v2775, %v2800
        %v2837 = vrot.slane %v2835, 2
        %v2838 = vsel %vm1424, %v2775, %v2800
        %v2840 = vrot.slane %v2838, 3
        %v2842 = vsel %vm1412, %v2778, %v2801
        %v2844 = vsel %vm1416, %v2778, %v2801
        %v2846 = vrot.slane %v2844, 1
        %v2847 = vsel %vm1420, %v2778, %v2801
        %v2849 = vrot.slane %v2847, 2
        %v2850 = vsel %vm1424, %v2778, %v2801
        %v2852 = vrot.slane %v2850, 3
        %v2854 = vsel %vm1412, %v2781, %v2802
        %v2856 = vsel %vm1416, %v2781, %v2802
        %v2858 = vrot.slane %v2856, 1
        %v2859 = vsel %vm1420, %v2781, %v2802
        %v2861 = vrot.slane %v2859, 2
        %v2862 = vsel %vm1424, %v2781, %v2802
        %v2864 = vrot.slane %v2862, 3
        %v2866 = vsel %vm1412, %v2784, %v2803
        %v2868 = vsel %vm1416, %v2784, %v2803
        %v2870 = vrot.slane %v2868, 1
        %v2871 = vsel %vm1420, %v2784, %v2803
        %v2873 = vrot.slane %v2871, 2
        %v2874 = vsel %vm1424, %v2784, %v2803
        %v2876 = vrot.slane %v2874, 3
        %v2878 = vsel %vm1412, %v2787, %v2804
        %v2880 = vsel %vm1416, %v2787, %v2804
        %v2882 = vrot.slane %v2880, 1
        %v2883 = vsel %vm1420, %v2787, %v2804
        %v2885 = vrot.slane %v2883, 2
        %v2886 = vsel %vm1424, %v2787, %v2804
        %v2888 = vrot.slane %v2886, 3
        %v2889 = vunpack.i.l.s16 %v2806
        %v2890 = vunpack.i.h.s16 %v2806
        %v2891 = vunpack.i.l.s16 %v2810
        %v2892 = vunpack.i.h.s16 %v2810
        %v2893 = vunpack.i.l.s16 %v2813
        %v2894 = vunpack.i.h.s16 %v2813
        %v2895 = vunpack.i.l.s16 %v2816
        %v2896 = vunpack.i.l.s16 %v2818
        %v2897 = vunpack.i.h.s16 %v2818
        %v2898 = vunpack.i.l.s16 %v2822
        %v2899 = vunpack.i.h.s16 %v2822
        %v2900 = vunpack.i.l.s16 %v2825
        %v2901 = vunpack.i.h.s16 %v2825
        %v2902 = vunpack.i.l.s16 %v2828
        %v2903 = vunpack.i.l.s16 %v2830
        %v2904 = vunpack.i.h.s16 %v2830
        %v2905 = vunpack.i.l.s16 %v2834
        %v2906 = vunpack.i.h.s16 %v2834
        %v2907 = vunpack.i.l.s16 %v2837
        %v2908 = vunpack.i.h.s16 %v2837
        %v2909 = vunpack.i.l.s16 %v2840
        %v2910 = vunpack.i.l.s16 %v2842
        %v2911 = vunpack.i.h.s16 %v2842
        %v2912 = vunpack.i.l.s16 %v2846
        %v2913 = vunpack.i.h.s16 %v2846
        %v2914 = vunpack.i.l.s16 %v2849
        %v2915 = vunpack.i.h.s16 %v2849
        %v2916 = vunpack.i.l.s16 %v2852
        %v2917 = vunpack.i.l.s16 %v2854
        %v2918 = vunpack.i.h.s16 %v2854
        %v2919 = vunpack.i.l.s16 %v2858
        %v2920 = vunpack.i.h.s16 %v2858
        %v2921 = vunpack.i.l.s16 %v2861
        %v2922 = vunpack.i.h.s16 %v2861
        %v2923 = vunpack.i.l.s16 %v2864
        %v2924 = vunpack.i.l.s16 %v2866
        %v2925 = vunpack.i.h.s16 %v2866
        %v2926 = vunpack.i.l.s16 %v2870
        %v2927 = vunpack.i.h.s16 %v2870
        %v2928 = vunpack.i.l.s16 %v2873
        %v2929 = vunpack.i.h.s16 %v2873
        %v2930 = vunpack.i.l.s16 %v2876
        %v2931 = vunpack.i.l.s16 %v2878
        %v2932 = vunpack.i.h.s16 %v2878
        %v2933 = vunpack.i.l.s16 %v2882
        %v2934 = vunpack.i.h.s16 %v2882
        %v2935 = vunpack.i.l.s16 %v2885
        %v2936 = vunpack.i.h.s16 %v2885
        %v2937 = vunpack.i.l.s16 %v2888
        %v2938 = vld [vmem:[%s9] sm:$0xf]
        %v2939 = vld [vmem:[%s9 + $0x4] sm:$0xf]
        %v2940 = vld [vmem:[%s9 + $0x8] sm:$0xf]
        %v2941 = vld [vmem:[%s9 + $0xc] sm:$0xf]
        %v2942 = vld [vmem:[%s9 + $0x10] sm:$0xf]
        %v2943 = vld [vmem:[%s9 + $0x14] sm:$0xf]
        %v2944 = vld [vmem:[%s9 + $0x18] sm:$0xf]
        %v2945 = vld [vmem:[%s9 + $0x1c] sm:$0xf]
        %v2946 = vld [vmem:[%s9 + $0x20] sm:$0xf]
        %v2947 = vld [vmem:[%s9 + $0x24] sm:$0xf]
        %v2948 = vld [vmem:[%s9 + $0x28] sm:$0xf]
        %v2949 = vld [vmem:[%s9 + $0x2c] sm:$0xf]
        %v2950 = vld [vmem:[%s9 + $0x30] sm:$0xf]
        %v2951 = vld [vmem:[%s9 + $0x34] sm:$0xf]
        %v2952 = vld [vmem:[%s9 + $0x38] sm:$0xf]
        %v2953 = vld [vmem:[%s9 + $0x3c] sm:$0xf]
        %v2954 = vld [vmem:[%s9 + $0x40] sm:$0xf]
        %v2955 = vld [vmem:[%s9 + $0x44] sm:$0xf]
        %v2956 = vld [vmem:[%s9 + $0x48] sm:$0xf]
        %v2957 = vld [vmem:[%s9 + $0x4c] sm:$0xf]
        %v2958 = vld [vmem:[%s9 + $0x50] sm:$0xf]
        %v2959 = vld [vmem:[%s9 + $0x54] sm:$0xf]
        %v2960 = vld [vmem:[%s9 + $0x58] sm:$0xf]
        %v2961 = vld [vmem:[%s9 + $0x5c] sm:$0xf]
        %v2962 = vld [vmem:[%s9 + $0x60] sm:$0xf]
        %v2963 = vld [vmem:[%s9 + $0x64] sm:$0xf]
        %v2964 = vld [vmem:[%s9 + $0x68] sm:$0xf]
        %v2965 = vld [vmem:[%s9 + $0x6c] sm:$0xf]
        %v2966 = vld [vmem:[%s9 + $0x70] sm:$0xf]
        %v2967 = vld [vmem:[%s9 + $0x74] sm:$0xf]
        %v2968 = vld [vmem:[%s9 + $0x78] sm:$0xf]
        %v2969 = vld [vmem:[%s9 + $0x7c] sm:$0xf]
        %v2970 = vld [vmem:[%s10] sm:$0x1]
        %v2972 = vperm.slane %v2970, 0
        %v2974 = vpack.i.b16 %v2890, %v2889
        %v2975 = vpack.i.b16 %v2892, %v2891
        %v2976 = vpack.i.b16 %v2894, %v2893
        %v2977 = vpack.i.b16 %v2896, %v2895
        %v2978 = vpack.i.b16 %v2898, %v2897
        %v2979 = vpack.i.b16 %v2900, %v2899
        %v2980 = vpack.i.b16 %v2902, %v2901
        %v2981 = vpack.i.b16 %v2904, %v2903
        %v2982 = vpack.i.b16 %v2906, %v2905
        %v2983 = vpack.i.b16 %v2908, %v2907
        %v2984 = vpack.i.b16 %v2910, %v2909
        %v2985 = vpack.i.b16 %v2912, %v2911
        %v2986 = vpack.i.b16 %v2914, %v2913
        %v2987 = vpack.i.b16 %v2916, %v2915
        %v2988 = vpack.i.b16 %v2918, %v2917
        %v2989 = vpack.i.b16 %v2920, %v2919
        %v2990 = vpack.i.b16 %v2922, %v2921
        %v2991 = vpack.i.b16 %v2924, %v2923
        %v2992 = vpack.i.b16 %v2926, %v2925
        %v2993 = vpack.i.b16 %v2928, %v2927
        %v2994 = vpack.i.b16 %v2930, %v2929
        %v2995 = vpack.i.b16 %v2932, %v2931
        %v2996 = vpack.i.b16 %v2934, %v2933
        %v2997 = vpack.i.b16 %v2936, %v2935
        %3000 = vst [vmem:[#allocation1] ss:$9 sm:$0xff] %v2974
        %s3002 = scalar_lea.vmem [#allocation1], 1
        %3003 = vst [vmem:[%s3002] ss:$9 sm:$0xff] %v2975
        %s3005 = scalar_lea.vmem [#allocation1], 2
        %3006 = vst [vmem:[%s3005] ss:$9 sm:$0xff] %v2976
        %s3008 = scalar_lea.vmem [#allocation1], 3
        %3009 = vst [vmem:[%s3008] ss:$9 sm:$0xff] %v2977
        %s3011 = scalar_lea.vmem [#allocation1], 4
        %3012 = vst [vmem:[%s3011] ss:$9 sm:$0xff] %v2978
        %s3014 = scalar_lea.vmem [#allocation1], 5
        %3015 = vst [vmem:[%s3014] ss:$9 sm:$0xff] %v2979
        %s3017 = scalar_lea.vmem [#allocation1], 6
        %3018 = vst [vmem:[%s3017] ss:$9 sm:$0xff] %v2980
        %s3020 = scalar_lea.vmem [#allocation1], 7
        %3021 = vst [vmem:[%s3020] ss:$9 sm:$0xff] %v2981
        %v3022 = vld [vmem:[#allocation1] sm:$0xff]
        %v3023 = vld [vmem:[#allocation1 + $0x9] sm:$0xff]
        %3025 = vst [vmem:[#allocation1] ss:$9 sm:$0xff] %v2982
        %3027 = vst [vmem:[%s3002] ss:$9 sm:$0xff] %v2983
        %3029 = vst [vmem:[%s3005] ss:$9 sm:$0xff] %v2984
        %3031 = vst [vmem:[%s3008] ss:$9 sm:$0xff] %v2985
        %3033 = vst [vmem:[%s3011] ss:$9 sm:$0xff] %v2986
        %3035 = vst [vmem:[%s3014] ss:$9 sm:$0xff] %v2987
        %3037 = vst [vmem:[%s3017] ss:$9 sm:$0xff] %v2988
        %3039 = vst [vmem:[%s3020] ss:$9 sm:$0xff] %v2989
        %v3040 = vld [vmem:[#allocation1] sm:$0xff]
        %v3041 = vld [vmem:[#allocation1 + $0x9] sm:$0xff]
        %3043 = vst [vmem:[#allocation1] ss:$9 sm:$0xff] %v2990
        %3045 = vst [vmem:[%s3002] ss:$9 sm:$0xff] %v2991
        %3047 = vst [vmem:[%s3005] ss:$9 sm:$0xff] %v2992
        %3049 = vst [vmem:[%s3008] ss:$9 sm:$0xff] %v2993
        %3051 = vst [vmem:[%s3011] ss:$9 sm:$0xff] %v2994
        %3053 = vst [vmem:[%s3014] ss:$9 sm:$0xff] %v2995
        %3055 = vst [vmem:[%s3017] ss:$9 sm:$0xff] %v2996
        %3057 = vst [vmem:[%s3020] ss:$9 sm:$0xff] %v2997
        %v3058 = vld [vmem:[#allocation1] sm:$0xff]
        %v3059 = vld [vmem:[#allocation1 + $0x9] sm:$0xff]
        %3061 = vst [vmem:[#allocation1] ss:$9 sm:$0xff] %v2937
        %v3062 = vld [vmem:[#allocation1] sm:$0xff]
        %v3063 = vld [vmem:[#allocation1 + $0x9] sm:$0xff]
        %v3104 = vunpack.c.l.b16 %v2938
        %v3105 = vunpack.c.l.b16 %v2939
        %v3106 = vunpack.c.l.b16 %v2940
        %v3107 = vunpack.c.l.b16 %v2941
        %v3108 = vunpack.c.l.b16 %v2942
        %v3109 = vunpack.c.l.b16 %v2943
        %v3110 = vunpack.c.l.b16 %v2944
        %v3111 = vunpack.c.l.b16 %v2945
        %v3112 = vunpack.c.l.b16 %v2946
        %v3113 = vunpack.c.l.b16 %v2947
        %v3114 = vunpack.c.l.b16 %v2948
        %v3115 = vunpack.c.l.b16 %v2949
        %v3116 = vunpack.c.l.b16 %v2950
        %v3117 = vunpack.c.l.b16 %v2951
        %v3118 = vunpack.c.l.b16 %v2952
        %v3119 = vunpack.c.l.b16 %v2953
        %v3120 = vunpack.c.l.b16 %v2954
        %v3121 = vunpack.c.l.b16 %v2955
        %v3122 = vunpack.c.l.b16 %v2956
        %v3123 = vunpack.c.l.b16 %v2957
        %v3124 = vunpack.c.l.b16 %v2958
        %v3125 = vunpack.c.l.b16 %v2959
        %v3126 = vunpack.c.l.b16 %v2960
        %v3127 = vunpack.c.l.b16 %v2961
        %v3128 = vunpack.c.l.b16 %v2962
        %v3129 = vunpack.c.l.b16 %v2963
        %v3130 = vunpack.c.l.b16 %v2964
        %v3131 = vunpack.c.l.b16 %v2965
        %v3132 = vunpack.c.l.b16 %v2966
        %v3133 = vunpack.c.l.b16 %v2967
        %v3134 = vunpack.c.l.b16 %v2968
        %v3135 = vunpack.c.l.b16 %v2969
        %v3136 = vpack.c.b16 %v3105, %v3104
        %v3137 = vpack.c.b16 %v3107, %v3106
        %v3138 = vpack.c.b16 %v3109, %v3108
        %v3139 = vpack.c.b16 %v3111, %v3110
        %v3140 = vpack.c.b16 %v3113, %v3112
        %v3141 = vpack.c.b16 %v3115, %v3114
        %v3142 = vpack.c.b16 %v3117, %v3116
        %v3143 = vpack.c.b16 %v3119, %v3118
        %v3144 = vpack.c.b16 %v3121, %v3120
        %v3145 = vpack.c.b16 %v3123, %v3122
        %v3146 = vpack.c.b16 %v3125, %v3124
        %v3147 = vpack.c.b16 %v3127, %v3126
        %v3148 = vpack.c.b16 %v3129, %v3128
        %v3149 = vpack.c.b16 %v3131, %v3130
        %v3150 = vpack.c.b16 %v3133, %v3132
        %v3151 = vpack.c.b16 %v3135, %v3134
        %3168 = vmatpush.bf16.msra.mxu0 %v3143
        %3169 = vmatpush.bf16.msra.mxu0 %v3142
        %3170 = vmatpush.bf16.msra.mxu0 %v3141
        %3171 = vmatpush.bf16.msra.mxu0 %v3140
        %3172 = vmatpush.bf16.msra.mxu0 %v3139
        %3173 = vmatpush.bf16.msra.mxu0 %v3138
        %3174 = vmatpush.bf16.msra.mxu0 %v3137
        %3175 = vmatpush.bf16.msra.mxu0 %v3136
        %3176 = vmatmul.bf16.gmra.mxu0 %v3022
        %v3177 = vpop.f32.mrf.mxu0
        %v3178 = vadd.f32 %v2972, %v3177
        %v3179 = vpop.f32.mrf.mxu0
        %v3180 = vadd.f32 %v2972, %v3179
        %3181 = vmatmul.bf16.gmra.mxu0 %v3040
        %v3182 = vpop.f32.mrf.mxu0
        %v3183 = vadd.f32 %v2972, %v3182
        %v3184 = vpop.f32.mrf.mxu0
        %v3185 = vadd.f32 %v2972, %v3184
        %3186 = vmatmul.bf16.gmra.mxu0 %v3058
        %v3187 = vpop.f32.mrf.mxu0
        %v3188 = vadd.f32 %v2972, %v3187
        %v3189 = vpop.f32.mrf.mxu0
        %v3190 = vadd.f32 %v2972, %v3189
        %3191 = vmatmul.bf16.gmra.mxu0 %v3062
        %v3192 = vpop.f32.mrf.mxu0
        %v3193 = vadd.f32 %v2972, %v3192
        %v3194 = vpop.f32.mrf.mxu0
        %3195 = vdwg.mxu0
        %3196 = vmatpush.bf16.msra.mxu0 %v3151
        %3197 = vmatpush.bf16.msra.mxu0 %v3150
        %3198 = vmatpush.bf16.msra.mxu0 %v3149
        %3199 = vmatpush.bf16.msra.mxu0 %v3148
        %3200 = vmatpush.bf16.msra.mxu0 %v3147
        %3201 = vmatpush.bf16.msra.mxu0 %v3146
        %3202 = vmatpush.bf16.msra.mxu0 %v3145
        %3203 = vmatpush.bf16.msra.mxu0 %v3144
        %3204 = vmatmul.bf16.gmra.mxu0 %v3023
        %v3205 = vpop.f32.mrf.mxu0
        %v3206 = vadd.f32 %v3178, %v3205
        %v3207 = vpop.f32.mrf.mxu0
        %v3208 = vadd.f32 %v3180, %v3207
        %3209 = vmatmul.bf16.gmra.mxu0 %v3041
        %v3210 = vpop.f32.mrf.mxu0
        %v3211 = vadd.f32 %v3183, %v3210
        %v3212 = vpop.f32.mrf.mxu0
        %v3213 = vadd.f32 %v3185, %v3212
        %3214 = vmatmul.bf16.gmra.mxu0 %v3059
        %v3215 = vpop.f32.mrf.mxu0
        %v3216 = vadd.f32 %v3188, %v3215
        %v3217 = vpop.f32.mrf.mxu0
        %v3218 = vadd.f32 %v3190, %v3217
        %3219 = vmatmul.bf16.gmra.mxu0 %v3063
        %v3220 = vpop.f32.mrf.mxu0
        %v3221 = vadd.f32 %v3193, %v3220
        %v3222 = vpop.f32.mrf.mxu0
        %3223 = vdwg.mxu0
        %v3224 = vmax.f32 %v3206, 0.0
        %v3225 = vmax.f32 %v3208, 0.0
        %v3226 = vmax.f32 %v3211, 0.0
        %v3227 = vmax.f32 %v3213, 0.0
        %v3228 = vmax.f32 %v3216, 0.0
        %v3229 = vmax.f32 %v3218, 0.0
        %v3230 = vmax.f32 %v3221, 0.0
        %v3231 = vpack.c.bf16 %v3224, %v3224
        %v3232 = vld [vmem:[%s11] sm:$0xf]
        %v3233 = vld [vmem:[%s11 + $0x4] sm:$0xf]
        %v3234 = vld [vmem:[%s11 + $0x8] sm:$0xf]
        %v3235 = vld [vmem:[%s11 + $0xc] sm:$0xf]
        %s3236 = scalar_lea.vmem %s11, 16
        %v3237 = vld [vmem:[%s3236] sm:$0xf]
        %v3238 = vld [vmem:[%s3236 + $0x4] sm:$0xf]
        %v3239 = vld [vmem:[%s3236 + $0x8] sm:$0xf]
        %v3240 = vld [vmem:[%s3236 + $0xc] sm:$0xf]
        %v3242 = vshrl.u32 %v3231, 16
        %v3248 = vunpack.c.l.b16 %v3237
        %v3249 = vunpack.c.l.b16 %v3238
        %v3250 = vunpack.c.l.b16 %v3239
        %v3251 = vunpack.c.l.b16 %v3240
        %v3252 = vpack.c.b16 %v3249, %v3248
        %v3253 = vpack.c.b16 %v3251, %v3250
        %v3257 = vsel %vm882, %v3242, 0
        %3259 = vmatpush.bf16.msra.mxu0 0
        %3260 = vmatpush.bf16.msra.mxu0 0
        %3261 = vmatpush.bf16.msra.mxu0 0
        %3262 = vmatpush.bf16.msra.mxu0 0
        %3263 = vmatpush.bf16.msra.mxu0 0
        %3264 = vmatpush.bf16.msra.mxu0 0
        %3265 = vmatpush.bf16.msra.mxu0 %v3253
        %3266 = vmatpush.bf16.msra.mxu0 %v3252
        %3267 = vmatmul.bf16.gmra.mxu0 %v3257
        %v3268 = vpop.f32.mrf.mxu0
        %v3269 = vadd.f32 0.0, %v3268
        %v3270 = vpop.f32.mrf.mxu0
        %3271 = vdwg.mxu0
        %v3276 = vunpack.c.l.b16 %v3232
        %v3277 = vunpack.c.l.b16 %v3233
        %v3278 = vunpack.c.l.b16 %v3234
        %v3279 = vunpack.c.l.b16 %v3235
        %v3280 = vpack.c.b16 %v3277, %v3276
        %v3281 = vpack.c.b16 %v3279, %v3278
        %v3284 = vsel %vm882, %v3231, 0
        %3286 = vmatpush.bf16.msra.mxu0 0
        %3287 = vmatpush.bf16.msra.mxu0 0
        %3288 = vmatpush.bf16.msra.mxu0 0
        %3289 = vmatpush.bf16.msra.mxu0 0
        %3290 = vmatpush.bf16.msra.mxu0 0
        %3291 = vmatpush.bf16.msra.mxu0 0
        %3292 = vmatpush.bf16.msra.mxu0 %v3281
        %3293 = vmatpush.bf16.msra.mxu0 %v3280
        %3294 = vmatmul.bf16.gmra.mxu0 %v3284
        %v3295 = vpop.f32.mrf.mxu0
        %v3296 = vadd.f32 %v3269, %v3295
        %v3297 = vpop.f32.mrf.mxu0
        %3298 = vdwg.mxu0
        %s3299 = scalar_lea.vmem %s11, 32
        %v3300 = vld [vmem:[%s3299] sm:$0xf]
        %v3301 = vld [vmem:[%s3299 + $0x4] sm:$0xf]
        %v3302 = vld [vmem:[%s3299 + $0x8] sm:$0xf]
        %v3303 = vld [vmem:[%s3299 + $0xc] sm:$0xf]
        %v3305 = vrot.slane %v3231, 1
        %v3310 = vunpack.c.l.b16 %v3300
        %v3311 = vunpack.c.l.b16 %v3301
        %v3312 = vunpack.c.l.b16 %v3302
        %v3313 = vunpack.c.l.b16 %v3303
        %v3314 = vpack.c.b16 %v3311, %v3310
        %v3315 = vpack.c.b16 %v3313, %v3312
        %v3319 = vsel %vm882, %v3305, 0
        %3321 = vmatpush.bf16.msra.mxu0 0
        %3322 = vmatpush.bf16.msra.mxu0 0
        %3323 = vmatpush.bf16.msra.mxu0 0
        %3324 = vmatpush.bf16.msra.mxu0 0
        %3325 = vmatpush.bf16.msra.mxu0 0
        %3326 = vmatpush.bf16.msra.mxu0 0
        %3327 = vmatpush.bf16.msra.mxu0 %v3315
        %3328 = vmatpush.bf16.msra.mxu0 %v3314
        %3329 = vmatmul.bf16.gmra.mxu0 %v3319
        %v3330 = vpop.f32.mrf.mxu0
        %v3331 = vadd.f32 0.0, %v3330
        %v3332 = vpop.f32.mrf.mxu0
        %3333 = vdwg.mxu0
        %v3334 = vadd.f32 %v3296, %v3331
        %s3335 = scalar_lea.vmem %s11, 48
        %v3336 = vld [vmem:[%s3335] sm:$0xf]
        %v3337 = vld [vmem:[%s3335 + $0x4] sm:$0xf]
        %v3338 = vld [vmem:[%s3335 + $0x8] sm:$0xf]
        %v3339 = vld [vmem:[%s3335 + $0xc] sm:$0xf]
        %v3340 = vrot.slane %v3242, 1
        %v3345 = vunpack.c.l.b16 %v3336
        %v3346 = vunpack.c.l.b16 %v3337
        %v3347 = vunpack.c.l.b16 %v3338
        %v3348 = vunpack.c.l.b16 %v3339
        %v3349 = vpack.c.b16 %v3346, %v3345
        %v3350 = vpack.c.b16 %v3348, %v3347
        %v3354 = vsel %vm882, %v3340, 0
        %3356 = vmatpush.bf16.msra.mxu0 0
        %3357 = vmatpush.bf16.msra.mxu0 0
        %3358 = vmatpush.bf16.msra.mxu0 0
        %3359 = vmatpush.bf16.msra.mxu0 0
        %3360 = vmatpush.bf16.msra.mxu0 0
        %3361 = vmatpush.bf16.msra.mxu0 0
        %3362 = vmatpush.bf16.msra.mxu0 %v3350
        %3363 = vmatpush.bf16.msra.mxu0 %v3349
        %3364 = vmatmul.bf16.gmra.mxu0 %v3354
        %v3365 = vpop.f32.mrf.mxu0
        %v3366 = vadd.f32 0.0, %v3365
        %v3367 = vpop.f32.mrf.mxu0
        %3368 = vdwg.mxu0
        %v3369 = vadd.f32 %v3334, %v3366
        %s3370 = scalar_lea.vmem %s11, 64
        %v3371 = vld [vmem:[%s3370] sm:$0xf]
        %v3372 = vld [vmem:[%s3370 + $0x4] sm:$0xf]
        %v3373 = vld [vmem:[%s3370 + $0x8] sm:$0xf]
        %v3374 = vld [vmem:[%s3370 + $0xc] sm:$0xf]
        %v3375 = vrot.slane %v3231, 2
        %v3380 = vunpack.c.l.b16 %v3371
        %v3381 = vunpack.c.l.b16 %v3372
        %v3382 = vunpack.c.l.b16 %v3373
        %v3383 = vunpack.c.l.b16 %v3374
        %v3384 = vpack.c.b16 %v3381, %v3380
        %v3385 = vpack.c.b16 %v3383, %v3382
        %v3389 = vsel %vm882, %v3375, 0
        %3391 = vmatpush.bf16.msra.mxu0 0
        %3392 = vmatpush.bf16.msra.mxu0 0
        %3393 = vmatpush.bf16.msra.mxu0 0
        %3394 = vmatpush.bf16.msra.mxu0 0
        %3395 = vmatpush.bf16.msra.mxu0 0
        %3396 = vmatpush.bf16.msra.mxu0 0
        %3397 = vmatpush.bf16.msra.mxu0 %v3385
        %3398 = vmatpush.bf16.msra.mxu0 %v3384
        %3399 = vmatmul.bf16.gmra.mxu0 %v3389
        %v3400 = vpop.f32.mrf.mxu0
        %v3401 = vadd.f32 0.0, %v3400
        %v3402 = vpop.f32.mrf.mxu0
        %3403 = vdwg.mxu0
        %v3404 = vadd.f32 %v3369, %v3401
        %s3405 = scalar_lea.vmem %s11, 80
        %v3406 = vld [vmem:[%s3405] sm:$0xf]
        %v3407 = vld [vmem:[%s3405 + $0x4] sm:$0xf]
        %v3408 = vld [vmem:[%s3405 + $0x8] sm:$0xf]
        %v3409 = vld [vmem:[%s3405 + $0xc] sm:$0xf]
        %v3410 = vrot.slane %v3242, 2
        %v3415 = vunpack.c.l.b16 %v3406
        %v3416 = vunpack.c.l.b16 %v3407
        %v3417 = vunpack.c.l.b16 %v3408
        %v3418 = vunpack.c.l.b16 %v3409
        %v3419 = vpack.c.b16 %v3416, %v3415
        %v3420 = vpack.c.b16 %v3418, %v3417
        %v3424 = vsel %vm882, %v3410, 0
        %3426 = vmatpush.bf16.msra.mxu0 0
        %3427 = vmatpush.bf16.msra.mxu0 0
        %3428 = vmatpush.bf16.msra.mxu0 0
        %3429 = vmatpush.bf16.msra.mxu0 0
        %3430 = vmatpush.bf16.msra.mxu0 0
        %3431 = vmatpush.bf16.msra.mxu0 0
        %3432 = vmatpush.bf16.msra.mxu0 %v3420
        %3433 = vmatpush.bf16.msra.mxu0 %v3419
        %3434 = vmatmul.bf16.gmra.mxu0 %v3424
        %v3435 = vpop.f32.mrf.mxu0
        %v3436 = vadd.f32 0.0, %v3435
        %v3437 = vpop.f32.mrf.mxu0
        %3438 = vdwg.mxu0
        %v3439 = vadd.f32 %v3404, %v3436
        %s3440 = scalar_lea.vmem %s11, 96
        %v3441 = vld [vmem:[%s3440] sm:$0xf]
        %v3442 = vld [vmem:[%s3440 + $0x4] sm:$0xf]
        %v3443 = vld [vmem:[%s3440 + $0x8] sm:$0xf]
        %v3444 = vld [vmem:[%s3440 + $0xc] sm:$0xf]
        %v3445 = vrot.slane %v3231, 3
        %v3450 = vunpack.c.l.b16 %v3441
        %v3451 = vunpack.c.l.b16 %v3442
        %v3452 = vunpack.c.l.b16 %v3443
        %v3453 = vunpack.c.l.b16 %v3444
        %v3454 = vpack.c.b16 %v3451, %v3450
        %v3455 = vpack.c.b16 %v3453, %v3452
        %v3459 = vsel %vm882, %v3445, 0
        %3461 = vmatpush.bf16.msra.mxu0 0
        %3462 = vmatpush.bf16.msra.mxu0 0
        %3463 = vmatpush.bf16.msra.mxu0 0
        %3464 = vmatpush.bf16.msra.mxu0 0
        %3465 = vmatpush.bf16.msra.mxu0 0
        %3466 = vmatpush.bf16.msra.mxu0 0
        %3467 = vmatpush.bf16.msra.mxu0 %v3455
        %3468 = vmatpush.bf16.msra.mxu0 %v3454
        %3469 = vmatmul.bf16.gmra.mxu0 %v3459
        %v3470 = vpop.f32.mrf.mxu0
        %v3471 = vadd.f32 0.0, %v3470
        %v3472 = vpop.f32.mrf.mxu0
        %3473 = vdwg.mxu0
        %v3474 = vadd.f32 %v3439, %v3471
        %s3475 = scalar_lea.vmem %s11, 112
        %v3476 = vld [vmem:[%s3475] sm:$0xf]
        %v3477 = vld [vmem:[%s3475 + $0x4] sm:$0xf]
        %v3478 = vld [vmem:[%s3475 + $0x8] sm:$0xf]
        %v3479 = vld [vmem:[%s3475 + $0xc] sm:$0xf]
        %v3480 = vrot.slane %v3242, 3
        %v3485 = vunpack.c.l.b16 %v3476
        %v3486 = vunpack.c.l.b16 %v3477
        %v3487 = vunpack.c.l.b16 %v3478
        %v3488 = vunpack.c.l.b16 %v3479
        %v3489 = vpack.c.b16 %v3486, %v3485
        %v3490 = vpack.c.b16 %v3488, %v3487
        %v3494 = vsel %vm882, %v3480, 0
        %3496 = vmatpush.bf16.msra.mxu0 0
        %3497 = vmatpush.bf16.msra.mxu0 0
        %3498 = vmatpush.bf16.msra.mxu0 0
        %3499 = vmatpush.bf16.msra.mxu0 0
        %3500 = vmatpush.bf16.msra.mxu0 0
        %3501 = vmatpush.bf16.msra.mxu0 0
        %3502 = vmatpush.bf16.msra.mxu0 %v3490
        %3503 = vmatpush.bf16.msra.mxu0 %v3489
        %3504 = vmatmul.bf16.gmra.mxu0 %v3494
        %v3505 = vpop.f32.mrf.mxu0
        %v3506 = vadd.f32 0.0, %v3505
        %v3507 = vpop.f32.mrf.mxu0
        %3508 = vdwg.mxu0
        %v3509 = vadd.f32 %v3474, %v3506
        %v3510 = vpack.c.bf16 %v3225, %v3225
        %s3511 = scalar_lea.vmem %s11, 128
        %v3512 = vld [vmem:[%s3511] sm:$0xf]
        %v3513 = vld [vmem:[%s3511 + $0x4] sm:$0xf]
        %v3514 = vld [vmem:[%s3511 + $0x8] sm:$0xf]
        %v3515 = vld [vmem:[%s3511 + $0xc] sm:$0xf]
        %v3520 = vunpack.c.l.b16 %v3512
        %v3521 = vunpack.c.l.b16 %v3513
        %v3522 = vunpack.c.l.b16 %v3514
        %v3523 = vunpack.c.l.b16 %v3515
        %v3524 = vpack.c.b16 %v3521, %v3520
        %v3525 = vpack.c.b16 %v3523, %v3522
        %v3529 = vsel %vm882, %v3510, 0
        %3531 = vmatpush.bf16.msra.mxu0 0
        %3532 = vmatpush.bf16.msra.mxu0 0
        %3533 = vmatpush.bf16.msra.mxu0 0
        %3534 = vmatpush.bf16.msra.mxu0 0
        %3535 = vmatpush.bf16.msra.mxu0 0
        %3536 = vmatpush.bf16.msra.mxu0 0
        %3537 = vmatpush.bf16.msra.mxu0 %v3525
        %3538 = vmatpush.bf16.msra.mxu0 %v3524
        %3539 = vmatmul.bf16.gmra.mxu0 %v3529
        %v3540 = vpop.f32.mrf.mxu0
        %v3541 = vadd.f32 0.0, %v3540
        %v3542 = vpop.f32.mrf.mxu0
        %3543 = vdwg.mxu0
        %v3544 = vadd.f32 %v3509, %v3541
        %s3545 = scalar_lea.vmem %s11, 144
        %v3546 = vld [vmem:[%s3545] sm:$0xf]
        %v3547 = vld [vmem:[%s3545 + $0x4] sm:$0xf]
        %v3548 = vld [vmem:[%s3545 + $0x8] sm:$0xf]
        %v3549 = vld [vmem:[%s3545 + $0xc] sm:$0xf]
        %v3550 = vshrl.u32 %v3510, 16
        %v3556 = vunpack.c.l.b16 %v3546
        %v3557 = vunpack.c.l.b16 %v3547
        %v3558 = vunpack.c.l.b16 %v3548
        %v3559 = vunpack.c.l.b16 %v3549
        %v3560 = vpack.c.b16 %v3557, %v3556
        %v3561 = vpack.c.b16 %v3559, %v3558
        %v3565 = vsel %vm882, %v3550, 0
        %3567 = vmatpush.bf16.msra.mxu0 0
        %3568 = vmatpush.bf16.msra.mxu0 0
        %3569 = vmatpush.bf16.msra.mxu0 0
        %3570 = vmatpush.bf16.msra.mxu0 0
        %3571 = vmatpush.bf16.msra.mxu0 0
        %3572 = vmatpush.bf16.msra.mxu0 0
        %3573 = vmatpush.bf16.msra.mxu0 %v3561
        %3574 = vmatpush.bf16.msra.mxu0 %v3560
        %3575 = vmatmul.bf16.gmra.mxu0 %v3565
        %v3576 = vpop.f32.mrf.mxu0
        %v3577 = vadd.f32 0.0, %v3576
        %v3578 = vpop.f32.mrf.mxu0
        %3579 = vdwg.mxu0
        %v3580 = vadd.f32 %v3544, %v3577
        %s3581 = scalar_lea.vmem %s11, 160
        %v3582 = vld [vmem:[%s3581] sm:$0xf]
        %v3583 = vld [vmem:[%s3581 + $0x4] sm:$0xf]
        %v3584 = vld [vmem:[%s3581 + $0x8] sm:$0xf]
        %v3585 = vld [vmem:[%s3581 + $0xc] sm:$0xf]
        %v3587 = vrot.slane %v3510, 1
        %v3592 = vunpack.c.l.b16 %v3582
        %v3593 = vunpack.c.l.b16 %v3583
        %v3594 = vunpack.c.l.b16 %v3584
        %v3595 = vunpack.c.l.b16 %v3585
        %v3596 = vpack.c.b16 %v3593, %v3592
        %v3597 = vpack.c.b16 %v3595, %v3594
        %v3601 = vsel %vm882, %v3587, 0
        %3603 = vmatpush.bf16.msra.mxu0 0
        %3604 = vmatpush.bf16.msra.mxu0 0
        %3605 = vmatpush.bf16.msra.mxu0 0
        %3606 = vmatpush.bf16.msra.mxu0 0
        %3607 = vmatpush.bf16.msra.mxu0 0
        %3608 = vmatpush.bf16.msra.mxu0 0
        %3609 = vmatpush.bf16.msra.mxu0 %v3597
        %3610 = vmatpush.bf16.msra.mxu0 %v3596
        %3611 = vmatmul.bf16.gmra.mxu0 %v3601
        %v3612 = vpop.f32.mrf.mxu0
        %v3613 = vadd.f32 0.0, %v3612
        %v3614 = vpop.f32.mrf.mxu0
        %3615 = vdwg.mxu0
        %v3616 = vadd.f32 %v3580, %v3613
        %s3617 = scalar_lea.vmem %s11, 176
        %v3618 = vld [vmem:[%s3617] sm:$0xf]
        %v3619 = vld [vmem:[%s3617 + $0x4] sm:$0xf]
        %v3620 = vld [vmem:[%s3617 + $0x8] sm:$0xf]
        %v3621 = vld [vmem:[%s3617 + $0xc] sm:$0xf]
        %v3622 = vrot.slane %v3550, 1
        %v3627 = vunpack.c.l.b16 %v3618
        %v3628 = vunpack.c.l.b16 %v3619
        %v3629 = vunpack.c.l.b16 %v3620
        %v3630 = vunpack.c.l.b16 %v3621
        %v3631 = vpack.c.b16 %v3628, %v3627
        %v3632 = vpack.c.b16 %v3630, %v3629
        %v3636 = vsel %vm882, %v3622, 0
        %3638 = vmatpush.bf16.msra.mxu0 0
        %3639 = vmatpush.bf16.msra.mxu0 0
        %3640 = vmatpush.bf16.msra.mxu0 0
        %3641 = vmatpush.bf16.msra.mxu0 0
        %3642 = vmatpush.bf16.msra.mxu0 0
        %3643 = vmatpush.bf16.msra.mxu0 0
        %3644 = vmatpush.bf16.msra.mxu0 %v3632
        %3645 = vmatpush.bf16.msra.mxu0 %v3631
        %3646 = vmatmul.bf16.gmra.mxu0 %v3636
        %v3647 = vpop.f32.mrf.mxu0
        %v3648 = vadd.f32 0.0, %v3647
        %v3649 = vpop.f32.mrf.mxu0
        %3650 = vdwg.mxu0
        %v3651 = vadd.f32 %v3616, %v3648
        %s3652 = scalar_lea.vmem %s11, 192
        %v3653 = vld [vmem:[%s3652] sm:$0xf]
        %v3654 = vld [vmem:[%s3652 + $0x4] sm:$0xf]
        %v3655 = vld [vmem:[%s3652 + $0x8] sm:$0xf]
        %v3656 = vld [vmem:[%s3652 + $0xc] sm:$0xf]
        %v3657 = vrot.slane %v3510, 2
        %v3662 = vunpack.c.l.b16 %v3653
        %v3663 = vunpack.c.l.b16 %v3654
        %v3664 = vunpack.c.l.b16 %v3655
        %v3665 = vunpack.c.l.b16 %v3656
        %v3666 = vpack.c.b16 %v3663, %v3662
        %v3667 = vpack.c.b16 %v3665, %v3664
        %v3671 = vsel %vm882, %v3657, 0
        %3673 = vmatpush.bf16.msra.mxu0 0
        %3674 = vmatpush.bf16.msra.mxu0 0
        %3675 = vmatpush.bf16.msra.mxu0 0
        %3676 = vmatpush.bf16.msra.mxu0 0
        %3677 = vmatpush.bf16.msra.mxu0 0
        %3678 = vmatpush.bf16.msra.mxu0 0
        %3679 = vmatpush.bf16.msra.mxu0 %v3667
        %3680 = vmatpush.bf16.msra.mxu0 %v3666
        %3681 = vmatmul.bf16.gmra.mxu0 %v3671
        %v3682 = vpop.f32.mrf.mxu0
        %v3683 = vadd.f32 0.0, %v3682
        %v3684 = vpop.f32.mrf.mxu0
        %3685 = vdwg.mxu0
        %v3686 = vadd.f32 %v3651, %v3683
        %s3687 = scalar_lea.vmem %s11, 208
        %v3688 = vld [vmem:[%s3687] sm:$0xf]
        %v3689 = vld [vmem:[%s3687 + $0x4] sm:$0xf]
        %v3690 = vld [vmem:[%s3687 + $0x8] sm:$0xf]
        %v3691 = vld [vmem:[%s3687 + $0xc] sm:$0xf]
        %v3692 = vrot.slane %v3550, 2
        %v3697 = vunpack.c.l.b16 %v3688
        %v3698 = vunpack.c.l.b16 %v3689
        %v3699 = vunpack.c.l.b16 %v3690
        %v3700 = vunpack.c.l.b16 %v3691
        %v3701 = vpack.c.b16 %v3698, %v3697
        %v3702 = vpack.c.b16 %v3700, %v3699
        %v3706 = vsel %vm882, %v3692, 0
        %3708 = vmatpush.bf16.msra.mxu0 0
        %3709 = vmatpush.bf16.msra.mxu0 0
        %3710 = vmatpush.bf16.msra.mxu0 0
        %3711 = vmatpush.bf16.msra.mxu0 0
        %3712 = vmatpush.bf16.msra.mxu0 0
        %3713 = vmatpush.bf16.msra.mxu0 0
        %3714 = vmatpush.bf16.msra.mxu0 %v3702
        %3715 = vmatpush.bf16.msra.mxu0 %v3701
        %3716 = vmatmul.bf16.gmra.mxu0 %v3706
        %v3717 = vpop.f32.mrf.mxu0
        %v3718 = vadd.f32 0.0, %v3717
        %v3719 = vpop.f32.mrf.mxu0
        %3720 = vdwg.mxu0
        %v3721 = vadd.f32 %v3686, %v3718
        %s3722 = scalar_lea.vmem %s11, 224
        %v3723 = vld [vmem:[%s3722] sm:$0xf]
        %v3724 = vld [vmem:[%s3722 + $0x4] sm:$0xf]
        %v3725 = vld [vmem:[%s3722 + $0x8] sm:$0xf]
        %v3726 = vld [vmem:[%s3722 + $0xc] sm:$0xf]
        %v3727 = vrot.slane %v3510, 3
        %v3732 = vunpack.c.l.b16 %v3723
        %v3733 = vunpack.c.l.b16 %v3724
        %v3734 = vunpack.c.l.b16 %v3725
        %v3735 = vunpack.c.l.b16 %v3726
        %v3736 = vpack.c.b16 %v3733, %v3732
        %v3737 = vpack.c.b16 %v3735, %v3734
        %v3741 = vsel %vm882, %v3727, 0
        %3743 = vmatpush.bf16.msra.mxu0 0
        %3744 = vmatpush.bf16.msra.mxu0 0
        %3745 = vmatpush.bf16.msra.mxu0 0
        %3746 = vmatpush.bf16.msra.mxu0 0
        %3747 = vmatpush.bf16.msra.mxu0 0
        %3748 = vmatpush.bf16.msra.mxu0 0
        %3749 = vmatpush.bf16.msra.mxu0 %v3737
        %3750 = vmatpush.bf16.msra.mxu0 %v3736
        %3751 = vmatmul.bf16.gmra.mxu0 %v3741
        %v3752 = vpop.f32.mrf.mxu0
        %v3753 = vadd.f32 0.0, %v3752
        %v3754 = vpop.f32.mrf.mxu0
        %3755 = vdwg.mxu0
        %v3756 = vadd.f32 %v3721, %v3753
        %s3757 = scalar_lea.vmem %s11, 240
        %v3758 = vld [vmem:[%s3757] sm:$0xf]
        %v3759 = vld [vmem:[%s3757 + $0x4] sm:$0xf]
        %v3760 = vld [vmem:[%s3757 + $0x8] sm:$0xf]
        %v3761 = vld [vmem:[%s3757 + $0xc] sm:$0xf]
        %v3762 = vrot.slane %v3550, 3
        %v3767 = vunpack.c.l.b16 %v3758
        %v3768 = vunpack.c.l.b16 %v3759
        %v3769 = vunpack.c.l.b16 %v3760
        %v3770 = vunpack.c.l.b16 %v3761
        %v3771 = vpack.c.b16 %v3768, %v3767
        %v3772 = vpack.c.b16 %v3770, %v3769
        %v3776 = vsel %vm882, %v3762, 0
        %3778 = vmatpush.bf16.msra.mxu0 0
        %3779 = vmatpush.bf16.msra.mxu0 0
        %3780 = vmatpush.bf16.msra.mxu0 0
        %3781 = vmatpush.bf16.msra.mxu0 0
        %3782 = vmatpush.bf16.msra.mxu0 0
        %3783 = vmatpush.bf16.msra.mxu0 0
        %3784 = vmatpush.bf16.msra.mxu0 %v3772
        %3785 = vmatpush.bf16.msra.mxu0 %v3771
        %3786 = vmatmul.bf16.gmra.mxu0 %v3776
        %v3787 = vpop.f32.mrf.mxu0
        %v3788 = vadd.f32 0.0, %v3787
        %v3789 = vpop.f32.mrf.mxu0
        %3790 = vdwg.mxu0
        %v3791 = vadd.f32 %v3756, %v3788
        %v3792 = vpack.c.bf16 %v3226, %v3226
        %s3793 = scalar_lea.vmem %s11, 256
        %v3794 = vld [vmem:[%s3793] sm:$0xf]
        %v3795 = vld [vmem:[%s3793 + $0x4] sm:$0xf]
        %v3796 = vld [vmem:[%s3793 + $0x8] sm:$0xf]
        %v3797 = vld [vmem:[%s3793 + $0xc] sm:$0xf]
        %v3802 = vunpack.c.l.b16 %v3794
        %v3803 = vunpack.c.l.b16 %v3795
        %v3804 = vunpack.c.l.b16 %v3796
        %v3805 = vunpack.c.l.b16 %v3797
        %v3806 = vpack.c.b16 %v3803, %v3802
        %v3807 = vpack.c.b16 %v3805, %v3804
        %v3811 = vsel %vm882, %v3792, 0
        %3813 = vmatpush.bf16.msra.mxu0 0
        %3814 = vmatpush.bf16.msra.mxu0 0
        %3815 = vmatpush.bf16.msra.mxu0 0
        %3816 = vmatpush.bf16.msra.mxu0 0
        %3817 = vmatpush.bf16.msra.mxu0 0
        %3818 = vmatpush.bf16.msra.mxu0 0
        %3819 = vmatpush.bf16.msra.mxu0 %v3807
        %3820 = vmatpush.bf16.msra.mxu0 %v3806
        %3821 = vmatmul.bf16.gmra.mxu0 %v3811
        %v3822 = vpop.f32.mrf.mxu0
        %v3823 = vadd.f32 0.0, %v3822
        %v3824 = vpop.f32.mrf.mxu0
        %3825 = vdwg.mxu0
        %v3826 = vadd.f32 %v3791, %v3823
        %s3827 = scalar_lea.vmem %s11, 272
        %v3828 = vld [vmem:[%s3827] sm:$0xf]
        %v3829 = vld [vmem:[%s3827 + $0x4] sm:$0xf]
        %v3830 = vld [vmem:[%s3827 + $0x8] sm:$0xf]
        %v3831 = vld [vmem:[%s3827 + $0xc] sm:$0xf]
        %v3832 = vshrl.u32 %v3792, 16
        %v3838 = vunpack.c.l.b16 %v3828
        %v3839 = vunpack.c.l.b16 %v3829
        %v3840 = vunpack.c.l.b16 %v3830
        %v3841 = vunpack.c.l.b16 %v3831
        %v3842 = vpack.c.b16 %v3839, %v3838
        %v3843 = vpack.c.b16 %v3841, %v3840
        %v3847 = vsel %vm882, %v3832, 0
        %3849 = vmatpush.bf16.msra.mxu0 0
        %3850 = vmatpush.bf16.msra.mxu0 0
        %3851 = vmatpush.bf16.msra.mxu0 0
        %3852 = vmatpush.bf16.msra.mxu0 0
        %3853 = vmatpush.bf16.msra.mxu0 0
        %3854 = vmatpush.bf16.msra.mxu0 0
        %3855 = vmatpush.bf16.msra.mxu0 %v3843
        %3856 = vmatpush.bf16.msra.mxu0 %v3842
        %3857 = vmatmul.bf16.gmra.mxu0 %v3847
        %v3858 = vpop.f32.mrf.mxu0
        %v3859 = vadd.f32 0.0, %v3858
        %v3860 = vpop.f32.mrf.mxu0
        %3861 = vdwg.mxu0
        %v3862 = vadd.f32 %v3826, %v3859
        %s3863 = scalar_lea.vmem %s11, 288
        %v3864 = vld [vmem:[%s3863] sm:$0xf]
        %v3865 = vld [vmem:[%s3863 + $0x4] sm:$0xf]
        %v3866 = vld [vmem:[%s3863 + $0x8] sm:$0xf]
        %v3867 = vld [vmem:[%s3863 + $0xc] sm:$0xf]
        %v3869 = vrot.slane %v3792, 1
        %v3874 = vunpack.c.l.b16 %v3864
        %v3875 = vunpack.c.l.b16 %v3865
        %v3876 = vunpack.c.l.b16 %v3866
        %v3877 = vunpack.c.l.b16 %v3867
        %v3878 = vpack.c.b16 %v3875, %v3874
        %v3879 = vpack.c.b16 %v3877, %v3876
        %v3883 = vsel %vm882, %v3869, 0
        %3885 = vmatpush.bf16.msra.mxu0 0
        %3886 = vmatpush.bf16.msra.mxu0 0
        %3887 = vmatpush.bf16.msra.mxu0 0
        %3888 = vmatpush.bf16.msra.mxu0 0
        %3889 = vmatpush.bf16.msra.mxu0 0
        %3890 = vmatpush.bf16.msra.mxu0 0
        %3891 = vmatpush.bf16.msra.mxu0 %v3879
        %3892 = vmatpush.bf16.msra.mxu0 %v3878
        %3893 = vmatmul.bf16.gmra.mxu0 %v3883
        %v3894 = vpop.f32.mrf.mxu0
        %v3895 = vadd.f32 0.0, %v3894
        %v3896 = vpop.f32.mrf.mxu0
        %3897 = vdwg.mxu0
        %v3898 = vadd.f32 %v3862, %v3895
        %s3899 = scalar_lea.vmem %s11, 304
        %v3900 = vld [vmem:[%s3899] sm:$0xf]
        %v3901 = vld [vmem:[%s3899 + $0x4] sm:$0xf]
        %v3902 = vld [vmem:[%s3899 + $0x8] sm:$0xf]
        %v3903 = vld [vmem:[%s3899 + $0xc] sm:$0xf]
        %v3904 = vrot.slane %v3832, 1
        %v3909 = vunpack.c.l.b16 %v3900
        %v3910 = vunpack.c.l.b16 %v3901
        %v3911 = vunpack.c.l.b16 %v3902
        %v3912 = vunpack.c.l.b16 %v3903
        %v3913 = vpack.c.b16 %v3910, %v3909
        %v3914 = vpack.c.b16 %v3912, %v3911
        %v3918 = vsel %vm882, %v3904, 0
        %3920 = vmatpush.bf16.msra.mxu0 0
        %3921 = vmatpush.bf16.msra.mxu0 0
        %3922 = vmatpush.bf16.msra.mxu0 0
        %3923 = vmatpush.bf16.msra.mxu0 0
        %3924 = vmatpush.bf16.msra.mxu0 0
        %3925 = vmatpush.bf16.msra.mxu0 0
        %3926 = vmatpush.bf16.msra.mxu0 %v3914
        %3927 = vmatpush.bf16.msra.mxu0 %v3913
        %3928 = vmatmul.bf16.gmra.mxu0 %v3918
        %v3929 = vpop.f32.mrf.mxu0
        %v3930 = vadd.f32 0.0, %v3929
        %v3931 = vpop.f32.mrf.mxu0
        %3932 = vdwg.mxu0
        %v3933 = vadd.f32 %v3898, %v3930
        %s3934 = scalar_lea.vmem %s11, 320
        %v3935 = vld [vmem:[%s3934] sm:$0xf]
        %v3936 = vld [vmem:[%s3934 + $0x4] sm:$0xf]
        %v3937 = vld [vmem:[%s3934 + $0x8] sm:$0xf]
        %v3938 = vld [vmem:[%s3934 + $0xc] sm:$0xf]
        %v3939 = vrot.slane %v3792, 2
        %v3944 = vunpack.c.l.b16 %v3935
        %v3945 = vunpack.c.l.b16 %v3936
        %v3946 = vunpack.c.l.b16 %v3937
        %v3947 = vunpack.c.l.b16 %v3938
        %v3948 = vpack.c.b16 %v3945, %v3944
        %v3949 = vpack.c.b16 %v3947, %v3946
        %v3953 = vsel %vm882, %v3939, 0
        %3955 = vmatpush.bf16.msra.mxu0 0
        %3956 = vmatpush.bf16.msra.mxu0 0
        %3957 = vmatpush.bf16.msra.mxu0 0
        %3958 = vmatpush.bf16.msra.mxu0 0
        %3959 = vmatpush.bf16.msra.mxu0 0
        %3960 = vmatpush.bf16.msra.mxu0 0
        %3961 = vmatpush.bf16.msra.mxu0 %v3949
        %3962 = vmatpush.bf16.msra.mxu0 %v3948
        %3963 = vmatmul.bf16.gmra.mxu0 %v3953
        %v3964 = vpop.f32.mrf.mxu0
        %v3965 = vadd.f32 0.0, %v3964
        %v3966 = vpop.f32.mrf.mxu0
        %3967 = vdwg.mxu0
        %v3968 = vadd.f32 %v3933, %v3965
        %s3969 = scalar_lea.vmem %s11, 336
        %v3970 = vld [vmem:[%s3969] sm:$0xf]
        %v3971 = vld [vmem:[%s3969 + $0x4] sm:$0xf]
        %v3972 = vld [vmem:[%s3969 + $0x8] sm:$0xf]
        %v3973 = vld [vmem:[%s3969 + $0xc] sm:$0xf]
        %v3974 = vrot.slane %v3832, 2
        %v3979 = vunpack.c.l.b16 %v3970
        %v3980 = vunpack.c.l.b16 %v3971
        %v3981 = vunpack.c.l.b16 %v3972
        %v3982 = vunpack.c.l.b16 %v3973
        %v3983 = vpack.c.b16 %v3980, %v3979
        %v3984 = vpack.c.b16 %v3982, %v3981
        %v3988 = vsel %vm882, %v3974, 0
        %3990 = vmatpush.bf16.msra.mxu0 0
        %3991 = vmatpush.bf16.msra.mxu0 0
        %3992 = vmatpush.bf16.msra.mxu0 0
        %3993 = vmatpush.bf16.msra.mxu0 0
        %3994 = vmatpush.bf16.msra.mxu0 0
        %3995 = vmatpush.bf16.msra.mxu0 0
        %3996 = vmatpush.bf16.msra.mxu0 %v3984
        %3997 = vmatpush.bf16.msra.mxu0 %v3983
        %3998 = vmatmul.bf16.gmra.mxu0 %v3988
        %v3999 = vpop.f32.mrf.mxu0
        %v4000 = vadd.f32 0.0, %v3999
        %v4001 = vpop.f32.mrf.mxu0
        %4002 = vdwg.mxu0
        %v4003 = vadd.f32 %v3968, %v4000
        %s4004 = scalar_lea.vmem %s11, 352
        %v4005 = vld [vmem:[%s4004] sm:$0xf]
        %v4006 = vld [vmem:[%s4004 + $0x4] sm:$0xf]
        %v4007 = vld [vmem:[%s4004 + $0x8] sm:$0xf]
        %v4008 = vld [vmem:[%s4004 + $0xc] sm:$0xf]
        %v4009 = vrot.slane %v3792, 3
        %v4014 = vunpack.c.l.b16 %v4005
        %v4015 = vunpack.c.l.b16 %v4006
        %v4016 = vunpack.c.l.b16 %v4007
        %v4017 = vunpack.c.l.b16 %v4008
        %v4018 = vpack.c.b16 %v4015, %v4014
        %v4019 = vpack.c.b16 %v4017, %v4016
        %v4023 = vsel %vm882, %v4009, 0
        %4025 = vmatpush.bf16.msra.mxu0 0
        %4026 = vmatpush.bf16.msra.mxu0 0
        %4027 = vmatpush.bf16.msra.mxu0 0
        %4028 = vmatpush.bf16.msra.mxu0 0
        %4029 = vmatpush.bf16.msra.mxu0 0
        %4030 = vmatpush.bf16.msra.mxu0 0
        %4031 = vmatpush.bf16.msra.mxu0 %v4019
        %4032 = vmatpush.bf16.msra.mxu0 %v4018
        %4033 = vmatmul.bf16.gmra.mxu0 %v4023
        %v4034 = vpop.f32.mrf.mxu0
        %v4035 = vadd.f32 0.0, %v4034
        %v4036 = vpop.f32.mrf.mxu0
        %4037 = vdwg.mxu0
        %v4038 = vadd.f32 %v4003, %v4035
        %s4039 = scalar_lea.vmem %s11, 368
        %v4040 = vld [vmem:[%s4039] sm:$0xf]
        %v4041 = vld [vmem:[%s4039 + $0x4] sm:$0xf]
        %v4042 = vld [vmem:[%s4039 + $0x8] sm:$0xf]
        %v4043 = vld [vmem:[%s4039 + $0xc] sm:$0xf]
        %v4044 = vrot.slane %v3832, 3
        %v4049 = vunpack.c.l.b16 %v4040
        %v4050 = vunpack.c.l.b16 %v4041
        %v4051 = vunpack.c.l.b16 %v4042
        %v4052 = vunpack.c.l.b16 %v4043
        %v4053 = vpack.c.b16 %v4050, %v4049
        %v4054 = vpack.c.b16 %v4052, %v4051
        %v4058 = vsel %vm882, %v4044, 0
        %4060 = vmatpush.bf16.msra.mxu0 0
        %4061 = vmatpush.bf16.msra.mxu0 0
        %4062 = vmatpush.bf16.msra.mxu0 0
        %4063 = vmatpush.bf16.msra.mxu0 0
        %4064 = vmatpush.bf16.msra.mxu0 0
        %4065 = vmatpush.bf16.msra.mxu0 0
        %4066 = vmatpush.bf16.msra.mxu0 %v4054
        %4067 = vmatpush.bf16.msra.mxu0 %v4053
        %4068 = vmatmul.bf16.gmra.mxu0 %v4058
        %v4069 = vpop.f32.mrf.mxu0
        %v4070 = vadd.f32 0.0, %v4069
        %v4071 = vpop.f32.mrf.mxu0
        %4072 = vdwg.mxu0
        %v4073 = vadd.f32 %v4038, %v4070
        %v4074 = vpack.c.bf16 %v3227, %v3227
        %s4075 = scalar_lea.vmem %s11, 384
        %v4076 = vld [vmem:[%s4075] sm:$0xf]
        %v4077 = vld [vmem:[%s4075 + $0x4] sm:$0xf]
        %v4078 = vld [vmem:[%s4075 + $0x8] sm:$0xf]
        %v4079 = vld [vmem:[%s4075 + $0xc] sm:$0xf]
        %v4084 = vunpack.c.l.b16 %v4076
        %v4085 = vunpack.c.l.b16 %v4077
        %v4086 = vunpack.c.l.b16 %v4078
        %v4087 = vunpack.c.l.b16 %v4079
        %v4088 = vpack.c.b16 %v4085, %v4084
        %v4089 = vpack.c.b16 %v4087, %v4086
        %v4093 = vsel %vm882, %v4074, 0
        %4095 = vmatpush.bf16.msra.mxu0 0
        %4096 = vmatpush.bf16.msra.mxu0 0
        %4097 = vmatpush.bf16.msra.mxu0 0
        %4098 = vmatpush.bf16.msra.mxu0 0
        %4099 = vmatpush.bf16.msra.mxu0 0
        %4100 = vmatpush.bf16.msra.mxu0 0
        %4101 = vmatpush.bf16.msra.mxu0 %v4089
        %4102 = vmatpush.bf16.msra.mxu0 %v4088
        %4103 = vmatmul.bf16.gmra.mxu0 %v4093
        %v4104 = vpop.f32.mrf.mxu0
        %v4105 = vadd.f32 0.0, %v4104
        %v4106 = vpop.f32.mrf.mxu0
        %4107 = vdwg.mxu0
        %v4108 = vadd.f32 %v4073, %v4105
        %s4109 = scalar_lea.vmem %s11, 400
        %v4110 = vld [vmem:[%s4109] sm:$0xf]
        %v4111 = vld [vmem:[%s4109 + $0x4] sm:$0xf]
        %v4112 = vld [vmem:[%s4109 + $0x8] sm:$0xf]
        %v4113 = vld [vmem:[%s4109 + $0xc] sm:$0xf]
        %v4114 = vshrl.u32 %v4074, 16
        %v4120 = vunpack.c.l.b16 %v4110
        %v4121 = vunpack.c.l.b16 %v4111
        %v4122 = vunpack.c.l.b16 %v4112
        %v4123 = vunpack.c.l.b16 %v4113
        %v4124 = vpack.c.b16 %v4121, %v4120
        %v4125 = vpack.c.b16 %v4123, %v4122
        %v4129 = vsel %vm882, %v4114, 0
        %4131 = vmatpush.bf16.msra.mxu0 0
        %4132 = vmatpush.bf16.msra.mxu0 0
        %4133 = vmatpush.bf16.msra.mxu0 0
        %4134 = vmatpush.bf16.msra.mxu0 0
        %4135 = vmatpush.bf16.msra.mxu0 0
        %4136 = vmatpush.bf16.msra.mxu0 0
        %4137 = vmatpush.bf16.msra.mxu0 %v4125
        %4138 = vmatpush.bf16.msra.mxu0 %v4124
        %4139 = vmatmul.bf16.gmra.mxu0 %v4129
        %v4140 = vpop.f32.mrf.mxu0
        %v4141 = vadd.f32 0.0, %v4140
        %v4142 = vpop.f32.mrf.mxu0
        %4143 = vdwg.mxu0
        %v4144 = vadd.f32 %v4108, %v4141
        %s4145 = scalar_lea.vmem %s11, 416
        %v4146 = vld [vmem:[%s4145] sm:$0xf]
        %v4147 = vld [vmem:[%s4145 + $0x4] sm:$0xf]
        %v4148 = vld [vmem:[%s4145 + $0x8] sm:$0xf]
        %v4149 = vld [vmem:[%s4145 + $0xc] sm:$0xf]
        %v4151 = vrot.slane %v4074, 1
        %v4156 = vunpack.c.l.b16 %v4146
        %v4157 = vunpack.c.l.b16 %v4147
        %v4158 = vunpack.c.l.b16 %v4148
        %v4159 = vunpack.c.l.b16 %v4149
        %v4160 = vpack.c.b16 %v4157, %v4156
        %v4161 = vpack.c.b16 %v4159, %v4158
        %v4165 = vsel %vm882, %v4151, 0
        %4167 = vmatpush.bf16.msra.mxu0 0
        %4168 = vmatpush.bf16.msra.mxu0 0
        %4169 = vmatpush.bf16.msra.mxu0 0
        %4170 = vmatpush.bf16.msra.mxu0 0
        %4171 = vmatpush.bf16.msra.mxu0 0
        %4172 = vmatpush.bf16.msra.mxu0 0
        %4173 = vmatpush.bf16.msra.mxu0 %v4161
        %4174 = vmatpush.bf16.msra.mxu0 %v4160
        %4175 = vmatmul.bf16.gmra.mxu0 %v4165
        %v4176 = vpop.f32.mrf.mxu0
        %v4177 = vadd.f32 0.0, %v4176
        %v4178 = vpop.f32.mrf.mxu0
        %4179 = vdwg.mxu0
        %v4180 = vadd.f32 %v4144, %v4177
        %s4181 = scalar_lea.vmem %s11, 432
        %v4182 = vld [vmem:[%s4181] sm:$0xf]
        %v4183 = vld [vmem:[%s4181 + $0x4] sm:$0xf]
        %v4184 = vld [vmem:[%s4181 + $0x8] sm:$0xf]
        %v4185 = vld [vmem:[%s4181 + $0xc] sm:$0xf]
        %v4186 = vrot.slane %v4114, 1
        %v4191 = vunpack.c.l.b16 %v4182
        %v4192 = vunpack.c.l.b16 %v4183
        %v4193 = vunpack.c.l.b16 %v4184
        %v4194 = vunpack.c.l.b16 %v4185
        %v4195 = vpack.c.b16 %v4192, %v4191
        %v4196 = vpack.c.b16 %v4194, %v4193
        %v4200 = vsel %vm882, %v4186, 0
        %4202 = vmatpush.bf16.msra.mxu0 0
        %4203 = vmatpush.bf16.msra.mxu0 0
        %4204 = vmatpush.bf16.msra.mxu0 0
        %4205 = vmatpush.bf16.msra.mxu0 0
        %4206 = vmatpush.bf16.msra.mxu0 0
        %4207 = vmatpush.bf16.msra.mxu0 0
        %4208 = vmatpush.bf16.msra.mxu0 %v4196
        %4209 = vmatpush.bf16.msra.mxu0 %v4195
        %4210 = vmatmul.bf16.gmra.mxu0 %v4200
        %v4211 = vpop.f32.mrf.mxu0
        %v4212 = vadd.f32 0.0, %v4211
        %v4213 = vpop.f32.mrf.mxu0
        %4214 = vdwg.mxu0
        %v4215 = vadd.f32 %v4180, %v4212
        %s4216 = scalar_lea.vmem %s11, 448
        %v4217 = vld [vmem:[%s4216] sm:$0xf]
        %v4218 = vld [vmem:[%s4216 + $0x4] sm:$0xf]
        %v4219 = vld [vmem:[%s4216 + $0x8] sm:$0xf]
        %v4220 = vld [vmem:[%s4216 + $0xc] sm:$0xf]
        %v4221 = vrot.slane %v4074, 2
        %v4226 = vunpack.c.l.b16 %v4217
        %v4227 = vunpack.c.l.b16 %v4218
        %v4228 = vunpack.c.l.b16 %v4219
        %v4229 = vunpack.c.l.b16 %v4220
        %v4230 = vpack.c.b16 %v4227, %v4226
        %v4231 = vpack.c.b16 %v4229, %v4228
        %v4235 = vsel %vm882, %v4221, 0
        %4237 = vmatpush.bf16.msra.mxu0 0
        %4238 = vmatpush.bf16.msra.mxu0 0
        %4239 = vmatpush.bf16.msra.mxu0 0
        %4240 = vmatpush.bf16.msra.mxu0 0
        %4241 = vmatpush.bf16.msra.mxu0 0
        %4242 = vmatpush.bf16.msra.mxu0 0
        %4243 = vmatpush.bf16.msra.mxu0 %v4231
        %4244 = vmatpush.bf16.msra.mxu0 %v4230
        %4245 = vmatmul.bf16.gmra.mxu0 %v4235
        %v4246 = vpop.f32.mrf.mxu0
        %v4247 = vadd.f32 0.0, %v4246
        %v4248 = vpop.f32.mrf.mxu0
        %4249 = vdwg.mxu0
        %v4250 = vadd.f32 %v4215, %v4247
        %s4251 = scalar_lea.vmem %s11, 464
        %v4252 = vld [vmem:[%s4251] sm:$0xf]
        %v4253 = vld [vmem:[%s4251 + $0x4] sm:$0xf]
        %v4254 = vld [vmem:[%s4251 + $0x8] sm:$0xf]
        %v4255 = vld [vmem:[%s4251 + $0xc] sm:$0xf]
        %v4256 = vrot.slane %v4114, 2
        %v4261 = vunpack.c.l.b16 %v4252
        %v4262 = vunpack.c.l.b16 %v4253
        %v4263 = vunpack.c.l.b16 %v4254
        %v4264 = vunpack.c.l.b16 %v4255
        %v4265 = vpack.c.b16 %v4262, %v4261
        %v4266 = vpack.c.b16 %v4264, %v4263
        %v4270 = vsel %vm882, %v4256, 0
        %4272 = vmatpush.bf16.msra.mxu0 0
        %4273 = vmatpush.bf16.msra.mxu0 0
        %4274 = vmatpush.bf16.msra.mxu0 0
        %4275 = vmatpush.bf16.msra.mxu0 0
        %4276 = vmatpush.bf16.msra.mxu0 0
        %4277 = vmatpush.bf16.msra.mxu0 0
        %4278 = vmatpush.bf16.msra.mxu0 %v4266
        %4279 = vmatpush.bf16.msra.mxu0 %v4265
        %4280 = vmatmul.bf16.gmra.mxu0 %v4270
        %v4281 = vpop.f32.mrf.mxu0
        %v4282 = vadd.f32 0.0, %v4281
        %v4283 = vpop.f32.mrf.mxu0
        %4284 = vdwg.mxu0
        %v4285 = vadd.f32 %v4250, %v4282
        %s4286 = scalar_lea.vmem %s11, 480
        %v4287 = vld [vmem:[%s4286] sm:$0xf]
        %v4288 = vld [vmem:[%s4286 + $0x4] sm:$0xf]
        %v4289 = vld [vmem:[%s4286 + $0x8] sm:$0xf]
        %v4290 = vld [vmem:[%s4286 + $0xc] sm:$0xf]
        %v4291 = vrot.slane %v4074, 3
        %v4296 = vunpack.c.l.b16 %v4287
        %v4297 = vunpack.c.l.b16 %v4288
        %v4298 = vunpack.c.l.b16 %v4289
        %v4299 = vunpack.c.l.b16 %v4290
        %v4300 = vpack.c.b16 %v4297, %v4296
        %v4301 = vpack.c.b16 %v4299, %v4298
        %v4305 = vsel %vm882, %v4291, 0
        %4307 = vmatpush.bf16.msra.mxu0 0
        %4308 = vmatpush.bf16.msra.mxu0 0
        %4309 = vmatpush.bf16.msra.mxu0 0
        %4310 = vmatpush.bf16.msra.mxu0 0
        %4311 = vmatpush.bf16.msra.mxu0 0
        %4312 = vmatpush.bf16.msra.mxu0 0
        %4313 = vmatpush.bf16.msra.mxu0 %v4301
        %4314 = vmatpush.bf16.msra.mxu0 %v4300
        %4315 = vmatmul.bf16.gmra.mxu0 %v4305
        %v4316 = vpop.f32.mrf.mxu0
        %v4317 = vadd.f32 0.0, %v4316
        %v4318 = vpop.f32.mrf.mxu0
        %4319 = vdwg.mxu0
        %v4320 = vadd.f32 %v4285, %v4317
        %s4321 = scalar_lea.vmem %s11, 496
        %v4322 = vld [vmem:[%s4321] sm:$0xf]
        %v4323 = vld [vmem:[%s4321 + $0x4] sm:$0xf]
        %v4324 = vld [vmem:[%s4321 + $0x8] sm:$0xf]
        %v4325 = vld [vmem:[%s4321 + $0xc] sm:$0xf]
        %v4326 = vrot.slane %v4114, 3
        %v4331 = vunpack.c.l.b16 %v4322
        %v4332 = vunpack.c.l.b16 %v4323
        %v4333 = vunpack.c.l.b16 %v4324
        %v4334 = vunpack.c.l.b16 %v4325
        %v4335 = vpack.c.b16 %v4332, %v4331
        %v4336 = vpack.c.b16 %v4334, %v4333
        %v4340 = vsel %vm882, %v4326, 0
        %4342 = vmatpush.bf16.msra.mxu0 0
        %4343 = vmatpush.bf16.msra.mxu0 0
        %4344 = vmatpush.bf16.msra.mxu0 0
        %4345 = vmatpush.bf16.msra.mxu0 0
        %4346 = vmatpush.bf16.msra.mxu0 0
        %4347 = vmatpush.bf16.msra.mxu0 0
        %4348 = vmatpush.bf16.msra.mxu0 %v4336
        %4349 = vmatpush.bf16.msra.mxu0 %v4335
        %4350 = vmatmul.bf16.gmra.mxu0 %v4340
        %v4351 = vpop.f32.mrf.mxu0
        %v4352 = vadd.f32 0.0, %v4351
        %v4353 = vpop.f32.mrf.mxu0
        %4354 = vdwg.mxu0
        %v4355 = vadd.f32 %v4320, %v4352
        %v4356 = vpack.c.bf16 %v3228, %v3228
        %s4357 = scalar_lea.vmem %s11, 512
        %v4358 = vld [vmem:[%s4357] sm:$0xf]
        %v4359 = vld [vmem:[%s4357 + $0x4] sm:$0xf]
        %v4360 = vld [vmem:[%s4357 + $0x8] sm:$0xf]
        %v4361 = vld [vmem:[%s4357 + $0xc] sm:$0xf]
        %v4366 = vunpack.c.l.b16 %v4358
        %v4367 = vunpack.c.l.b16 %v4359
        %v4368 = vunpack.c.l.b16 %v4360
        %v4369 = vunpack.c.l.b16 %v4361
        %v4370 = vpack.c.b16 %v4367, %v4366
        %v4371 = vpack.c.b16 %v4369, %v4368
        %v4375 = vsel %vm882, %v4356, 0
        %4377 = vmatpush.bf16.msra.mxu0 0
        %4378 = vmatpush.bf16.msra.mxu0 0
        %4379 = vmatpush.bf16.msra.mxu0 0
        %4380 = vmatpush.bf16.msra.mxu0 0
        %4381 = vmatpush.bf16.msra.mxu0 0
        %4382 = vmatpush.bf16.msra.mxu0 0
        %4383 = vmatpush.bf16.msra.mxu0 %v4371
        %4384 = vmatpush.bf16.msra.mxu0 %v4370
        %4385 = vmatmul.bf16.gmra.mxu0 %v4375
        %v4386 = vpop.f32.mrf.mxu0
        %v4387 = vadd.f32 0.0, %v4386
        %v4388 = vpop.f32.mrf.mxu0
        %4389 = vdwg.mxu0
        %v4390 = vadd.f32 %v4355, %v4387
        %s4391 = scalar_lea.vmem %s11, 528
        %v4392 = vld [vmem:[%s4391] sm:$0xf]
        %v4393 = vld [vmem:[%s4391 + $0x4] sm:$0xf]
        %v4394 = vld [vmem:[%s4391 + $0x8] sm:$0xf]
        %v4395 = vld [vmem:[%s4391 + $0xc] sm:$0xf]
        %v4396 = vshrl.u32 %v4356, 16
        %v4402 = vunpack.c.l.b16 %v4392
        %v4403 = vunpack.c.l.b16 %v4393
        %v4404 = vunpack.c.l.b16 %v4394
        %v4405 = vunpack.c.l.b16 %v4395
        %v4406 = vpack.c.b16 %v4403, %v4402
        %v4407 = vpack.c.b16 %v4405, %v4404
        %v4411 = vsel %vm882, %v4396, 0
        %4413 = vmatpush.bf16.msra.mxu0 0
        %4414 = vmatpush.bf16.msra.mxu0 0
        %4415 = vmatpush.bf16.msra.mxu0 0
        %4416 = vmatpush.bf16.msra.mxu0 0
        %4417 = vmatpush.bf16.msra.mxu0 0
        %4418 = vmatpush.bf16.msra.mxu0 0
        %4419 = vmatpush.bf16.msra.mxu0 %v4407
        %4420 = vmatpush.bf16.msra.mxu0 %v4406
        %4421 = vmatmul.bf16.gmra.mxu0 %v4411
        %v4422 = vpop.f32.mrf.mxu0
        %v4423 = vadd.f32 0.0, %v4422
        %v4424 = vpop.f32.mrf.mxu0
        %4425 = vdwg.mxu0
        %v4426 = vadd.f32 %v4390, %v4423
        %s4427 = scalar_lea.vmem %s11, 544
        %v4428 = vld [vmem:[%s4427] sm:$0xf]
        %v4429 = vld [vmem:[%s4427 + $0x4] sm:$0xf]
        %v4430 = vld [vmem:[%s4427 + $0x8] sm:$0xf]
        %v4431 = vld [vmem:[%s4427 + $0xc] sm:$0xf]
        %v4433 = vrot.slane %v4356, 1
        %v4438 = vunpack.c.l.b16 %v4428
        %v4439 = vunpack.c.l.b16 %v4429
        %v4440 = vunpack.c.l.b16 %v4430
        %v4441 = vunpack.c.l.b16 %v4431
        %v4442 = vpack.c.b16 %v4439, %v4438
        %v4443 = vpack.c.b16 %v4441, %v4440
        %v4447 = vsel %vm882, %v4433, 0
        %4449 = vmatpush.bf16.msra.mxu0 0
        %4450 = vmatpush.bf16.msra.mxu0 0
        %4451 = vmatpush.bf16.msra.mxu0 0
        %4452 = vmatpush.bf16.msra.mxu0 0
        %4453 = vmatpush.bf16.msra.mxu0 0
        %4454 = vmatpush.bf16.msra.mxu0 0
        %4455 = vmatpush.bf16.msra.mxu0 %v4443
        %4456 = vmatpush.bf16.msra.mxu0 %v4442
        %4457 = vmatmul.bf16.gmra.mxu0 %v4447
        %v4458 = vpop.f32.mrf.mxu0
        %v4459 = vadd.f32 0.0, %v4458
        %v4460 = vpop.f32.mrf.mxu0
        %4461 = vdwg.mxu0
        %v4462 = vadd.f32 %v4426, %v4459
        %s4463 = scalar_lea.vmem %s11, 560
        %v4464 = vld [vmem:[%s4463] sm:$0xf]
        %v4465 = vld [vmem:[%s4463 + $0x4] sm:$0xf]
        %v4466 = vld [vmem:[%s4463 + $0x8] sm:$0xf]
        %v4467 = vld [vmem:[%s4463 + $0xc] sm:$0xf]
        %v4468 = vrot.slane %v4396, 1
        %v4473 = vunpack.c.l.b16 %v4464
        %v4474 = vunpack.c.l.b16 %v4465
        %v4475 = vunpack.c.l.b16 %v4466
        %v4476 = vunpack.c.l.b16 %v4467
        %v4477 = vpack.c.b16 %v4474, %v4473
        %v4478 = vpack.c.b16 %v4476, %v4475
        %v4482 = vsel %vm882, %v4468, 0
        %4484 = vmatpush.bf16.msra.mxu0 0
        %4485 = vmatpush.bf16.msra.mxu0 0
        %4486 = vmatpush.bf16.msra.mxu0 0
        %4487 = vmatpush.bf16.msra.mxu0 0
        %4488 = vmatpush.bf16.msra.mxu0 0
        %4489 = vmatpush.bf16.msra.mxu0 0
        %4490 = vmatpush.bf16.msra.mxu0 %v4478
        %4491 = vmatpush.bf16.msra.mxu0 %v4477
        %4492 = vmatmul.bf16.gmra.mxu0 %v4482
        %v4493 = vpop.f32.mrf.mxu0
        %v4494 = vadd.f32 0.0, %v4493
        %v4495 = vpop.f32.mrf.mxu0
        %4496 = vdwg.mxu0
        %v4497 = vadd.f32 %v4462, %v4494
        %s4498 = scalar_lea.vmem %s11, 576
        %v4499 = vld [vmem:[%s4498] sm:$0xf]
        %v4500 = vld [vmem:[%s4498 + $0x4] sm:$0xf]
        %v4501 = vld [vmem:[%s4498 + $0x8] sm:$0xf]
        %v4502 = vld [vmem:[%s4498 + $0xc] sm:$0xf]
        %v4503 = vrot.slane %v4356, 2
        %v4508 = vunpack.c.l.b16 %v4499
        %v4509 = vunpack.c.l.b16 %v4500
        %v4510 = vunpack.c.l.b16 %v4501
        %v4511 = vunpack.c.l.b16 %v4502
        %v4512 = vpack.c.b16 %v4509, %v4508
        %v4513 = vpack.c.b16 %v4511, %v4510
        %v4517 = vsel %vm882, %v4503, 0
        %4519 = vmatpush.bf16.msra.mxu0 0
        %4520 = vmatpush.bf16.msra.mxu0 0
        %4521 = vmatpush.bf16.msra.mxu0 0
        %4522 = vmatpush.bf16.msra.mxu0 0
        %4523 = vmatpush.bf16.msra.mxu0 0
        %4524 = vmatpush.bf16.msra.mxu0 0
        %4525 = vmatpush.bf16.msra.mxu0 %v4513
        %4526 = vmatpush.bf16.msra.mxu0 %v4512
        %4527 = vmatmul.bf16.gmra.mxu0 %v4517
        %v4528 = vpop.f32.mrf.mxu0
        %v4529 = vadd.f32 0.0, %v4528
        %v4530 = vpop.f32.mrf.mxu0
        %4531 = vdwg.mxu0
        %v4532 = vadd.f32 %v4497, %v4529
        %s4533 = scalar_lea.vmem %s11, 592
        %v4534 = vld [vmem:[%s4533] sm:$0xf]
        %v4535 = vld [vmem:[%s4533 + $0x4] sm:$0xf]
        %v4536 = vld [vmem:[%s4533 + $0x8] sm:$0xf]
        %v4537 = vld [vmem:[%s4533 + $0xc] sm:$0xf]
        %v4538 = vrot.slane %v4396, 2
        %v4543 = vunpack.c.l.b16 %v4534
        %v4544 = vunpack.c.l.b16 %v4535
        %v4545 = vunpack.c.l.b16 %v4536
        %v4546 = vunpack.c.l.b16 %v4537
        %v4547 = vpack.c.b16 %v4544, %v4543
        %v4548 = vpack.c.b16 %v4546, %v4545
        %v4552 = vsel %vm882, %v4538, 0
        %4554 = vmatpush.bf16.msra.mxu0 0
        %4555 = vmatpush.bf16.msra.mxu0 0
        %4556 = vmatpush.bf16.msra.mxu0 0
        %4557 = vmatpush.bf16.msra.mxu0 0
        %4558 = vmatpush.bf16.msra.mxu0 0
        %4559 = vmatpush.bf16.msra.mxu0 0
        %4560 = vmatpush.bf16.msra.mxu0 %v4548
        %4561 = vmatpush.bf16.msra.mxu0 %v4547
        %4562 = vmatmul.bf16.gmra.mxu0 %v4552
        %v4563 = vpop.f32.mrf.mxu0
        %v4564 = vadd.f32 0.0, %v4563
        %v4565 = vpop.f32.mrf.mxu0
        %4566 = vdwg.mxu0
        %v4567 = vadd.f32 %v4532, %v4564
        %s4568 = scalar_lea.vmem %s11, 608
        %v4569 = vld [vmem:[%s4568] sm:$0xf]
        %v4570 = vld [vmem:[%s4568 + $0x4] sm:$0xf]
        %v4571 = vld [vmem:[%s4568 + $0x8] sm:$0xf]
        %v4572 = vld [vmem:[%s4568 + $0xc] sm:$0xf]
        %v4573 = vrot.slane %v4356, 3
        %v4578 = vunpack.c.l.b16 %v4569
        %v4579 = vunpack.c.l.b16 %v4570
        %v4580 = vunpack.c.l.b16 %v4571
        %v4581 = vunpack.c.l.b16 %v4572
        %v4582 = vpack.c.b16 %v4579, %v4578
        %v4583 = vpack.c.b16 %v4581, %v4580
        %v4587 = vsel %vm882, %v4573, 0
        %4589 = vmatpush.bf16.msra.mxu0 0
        %4590 = vmatpush.bf16.msra.mxu0 0
        %4591 = vmatpush.bf16.msra.mxu0 0
        %4592 = vmatpush.bf16.msra.mxu0 0
        %4593 = vmatpush.bf16.msra.mxu0 0
        %4594 = vmatpush.bf16.msra.mxu0 0
        %4595 = vmatpush.bf16.msra.mxu0 %v4583
        %4596 = vmatpush.bf16.msra.mxu0 %v4582
        %4597 = vmatmul.bf16.gmra.mxu0 %v4587
        %v4598 = vpop.f32.mrf.mxu0
        %v4599 = vadd.f32 0.0, %v4598
        %v4600 = vpop.f32.mrf.mxu0
        %4601 = vdwg.mxu0
        %v4602 = vadd.f32 %v4567, %v4599
        %s4603 = scalar_lea.vmem %s11, 624
        %v4604 = vld [vmem:[%s4603] sm:$0xf]
        %v4605 = vld [vmem:[%s4603 + $0x4] sm:$0xf]
        %v4606 = vld [vmem:[%s4603 + $0x8] sm:$0xf]
        %v4607 = vld [vmem:[%s4603 + $0xc] sm:$0xf]
        %v4608 = vrot.slane %v4396, 3
        %v4613 = vunpack.c.l.b16 %v4604
        %v4614 = vunpack.c.l.b16 %v4605
        %v4615 = vunpack.c.l.b16 %v4606
        %v4616 = vunpack.c.l.b16 %v4607
        %v4617 = vpack.c.b16 %v4614, %v4613
        %v4618 = vpack.c.b16 %v4616, %v4615
        %v4622 = vsel %vm882, %v4608, 0
        %4624 = vmatpush.bf16.msra.mxu0 0
        %4625 = vmatpush.bf16.msra.mxu0 0
        %4626 = vmatpush.bf16.msra.mxu0 0
        %4627 = vmatpush.bf16.msra.mxu0 0
        %4628 = vmatpush.bf16.msra.mxu0 0
        %4629 = vmatpush.bf16.msra.mxu0 0
        %4630 = vmatpush.bf16.msra.mxu0 %v4618
        %4631 = vmatpush.bf16.msra.mxu0 %v4617
        %4632 = vmatmul.bf16.gmra.mxu0 %v4622
        %v4633 = vpop.f32.mrf.mxu0
        %v4634 = vadd.f32 0.0, %v4633
        %v4635 = vpop.f32.mrf.mxu0
        %4636 = vdwg.mxu0
        %v4637 = vadd.f32 %v4602, %v4634
        %v4638 = vpack.c.bf16 %v3229, %v3229
        %s4639 = scalar_lea.vmem %s11, 640
        %v4640 = vld [vmem:[%s4639] sm:$0xf]
        %v4641 = vld [vmem:[%s4639 + $0x4] sm:$0xf]
        %v4642 = vld [vmem:[%s4639 + $0x8] sm:$0xf]
        %v4643 = vld [vmem:[%s4639 + $0xc] sm:$0xf]
        %v4648 = vunpack.c.l.b16 %v4640
        %v4649 = vunpack.c.l.b16 %v4641
        %v4650 = vunpack.c.l.b16 %v4642
        %v4651 = vunpack.c.l.b16 %v4643
        %v4652 = vpack.c.b16 %v4649, %v4648
        %v4653 = vpack.c.b16 %v4651, %v4650
        %v4657 = vsel %vm882, %v4638, 0
        %4659 = vmatpush.bf16.msra.mxu0 0
        %4660 = vmatpush.bf16.msra.mxu0 0
        %4661 = vmatpush.bf16.msra.mxu0 0
        %4662 = vmatpush.bf16.msra.mxu0 0
        %4663 = vmatpush.bf16.msra.mxu0 0
        %4664 = vmatpush.bf16.msra.mxu0 0
        %4665 = vmatpush.bf16.msra.mxu0 %v4653
        %4666 = vmatpush.bf16.msra.mxu0 %v4652
        %4667 = vmatmul.bf16.gmra.mxu0 %v4657
        %v4668 = vpop.f32.mrf.mxu0
        %v4669 = vadd.f32 0.0, %v4668
        %v4670 = vpop.f32.mrf.mxu0
        %4671 = vdwg.mxu0
        %v4672 = vadd.f32 %v4637, %v4669
        %s4673 = scalar_lea.vmem %s11, 656
        %v4674 = vld [vmem:[%s4673] sm:$0xf]
        %v4675 = vld [vmem:[%s4673 + $0x4] sm:$0xf]
        %v4676 = vld [vmem:[%s4673 + $0x8] sm:$0xf]
        %v4677 = vld [vmem:[%s4673 + $0xc] sm:$0xf]
        %v4678 = vshrl.u32 %v4638, 16
        %v4684 = vunpack.c.l.b16 %v4674
        %v4685 = vunpack.c.l.b16 %v4675
        %v4686 = vunpack.c.l.b16 %v4676
        %v4687 = vunpack.c.l.b16 %v4677
        %v4688 = vpack.c.b16 %v4685, %v4684
        %v4689 = vpack.c.b16 %v4687, %v4686
        %v4693 = vsel %vm882, %v4678, 0
        %4695 = vmatpush.bf16.msra.mxu0 0
        %4696 = vmatpush.bf16.msra.mxu0 0
        %4697 = vmatpush.bf16.msra.mxu0 0
        %4698 = vmatpush.bf16.msra.mxu0 0
        %4699 = vmatpush.bf16.msra.mxu0 0
        %4700 = vmatpush.bf16.msra.mxu0 0
        %4701 = vmatpush.bf16.msra.mxu0 %v4689
        %4702 = vmatpush.bf16.msra.mxu0 %v4688
        %4703 = vmatmul.bf16.gmra.mxu0 %v4693
        %v4704 = vpop.f32.mrf.mxu0
        %v4705 = vadd.f32 0.0, %v4704
        %v4706 = vpop.f32.mrf.mxu0
        %4707 = vdwg.mxu0
        %v4708 = vadd.f32 %v4672, %v4705
        %s4709 = scalar_lea.vmem %s11, 672
        %v4710 = vld [vmem:[%s4709] sm:$0xf]
        %v4711 = vld [vmem:[%s4709 + $0x4] sm:$0xf]
        %v4712 = vld [vmem:[%s4709 + $0x8] sm:$0xf]
        %v4713 = vld [vmem:[%s4709 + $0xc] sm:$0xf]
        %v4715 = vrot.slane %v4638, 1
        %v4720 = vunpack.c.l.b16 %v4710
        %v4721 = vunpack.c.l.b16 %v4711
        %v4722 = vunpack.c.l.b16 %v4712
        %v4723 = vunpack.c.l.b16 %v4713
        %v4724 = vpack.c.b16 %v4721, %v4720
        %v4725 = vpack.c.b16 %v4723, %v4722
        %v4729 = vsel %vm882, %v4715, 0
        %4731 = vmatpush.bf16.msra.mxu0 0
        %4732 = vmatpush.bf16.msra.mxu0 0
        %4733 = vmatpush.bf16.msra.mxu0 0
        %4734 = vmatpush.bf16.msra.mxu0 0
        %4735 = vmatpush.bf16.msra.mxu0 0
        %4736 = vmatpush.bf16.msra.mxu0 0
        %4737 = vmatpush.bf16.msra.mxu0 %v4725
        %4738 = vmatpush.bf16.msra.mxu0 %v4724
        %4739 = vmatmul.bf16.gmra.mxu0 %v4729
        %v4740 = vpop.f32.mrf.mxu0
        %v4741 = vadd.f32 0.0, %v4740
        %v4742 = vpop.f32.mrf.mxu0
        %4743 = vdwg.mxu0
        %v4744 = vadd.f32 %v4708, %v4741
        %s4745 = scalar_lea.vmem %s11, 688
        %v4746 = vld [vmem:[%s4745] sm:$0xf]
        %v4747 = vld [vmem:[%s4745 + $0x4] sm:$0xf]
        %v4748 = vld [vmem:[%s4745 + $0x8] sm:$0xf]
        %v4749 = vld [vmem:[%s4745 + $0xc] sm:$0xf]
        %v4750 = vrot.slane %v4678, 1
        %v4755 = vunpack.c.l.b16 %v4746
        %v4756 = vunpack.c.l.b16 %v4747
        %v4757 = vunpack.c.l.b16 %v4748
        %v4758 = vunpack.c.l.b16 %v4749
        %v4759 = vpack.c.b16 %v4756, %v4755
        %v4760 = vpack.c.b16 %v4758, %v4757
        %v4764 = vsel %vm882, %v4750, 0
        %4766 = vmatpush.bf16.msra.mxu0 0
        %4767 = vmatpush.bf16.msra.mxu0 0
        %4768 = vmatpush.bf16.msra.mxu0 0
        %4769 = vmatpush.bf16.msra.mxu0 0
        %4770 = vmatpush.bf16.msra.mxu0 0
        %4771 = vmatpush.bf16.msra.mxu0 0
        %4772 = vmatpush.bf16.msra.mxu0 %v4760
        %4773 = vmatpush.bf16.msra.mxu0 %v4759
        %4774 = vmatmul.bf16.gmra.mxu0 %v4764
        %v4775 = vpop.f32.mrf.mxu0
        %v4776 = vadd.f32 0.0, %v4775
        %v4777 = vpop.f32.mrf.mxu0
        %4778 = vdwg.mxu0
        %v4779 = vadd.f32 %v4744, %v4776
        %s4780 = scalar_lea.vmem %s11, 704
        %v4781 = vld [vmem:[%s4780] sm:$0xf]
        %v4782 = vld [vmem:[%s4780 + $0x4] sm:$0xf]
        %v4783 = vld [vmem:[%s4780 + $0x8] sm:$0xf]
        %v4784 = vld [vmem:[%s4780 + $0xc] sm:$0xf]
        %v4785 = vrot.slane %v4638, 2
        %v4790 = vunpack.c.l.b16 %v4781
        %v4791 = vunpack.c.l.b16 %v4782
        %v4792 = vunpack.c.l.b16 %v4783
        %v4793 = vunpack.c.l.b16 %v4784
        %v4794 = vpack.c.b16 %v4791, %v4790
        %v4795 = vpack.c.b16 %v4793, %v4792
        %v4799 = vsel %vm882, %v4785, 0
        %4801 = vmatpush.bf16.msra.mxu0 0
        %4802 = vmatpush.bf16.msra.mxu0 0
        %4803 = vmatpush.bf16.msra.mxu0 0
        %4804 = vmatpush.bf16.msra.mxu0 0
        %4805 = vmatpush.bf16.msra.mxu0 0
        %4806 = vmatpush.bf16.msra.mxu0 0
        %4807 = vmatpush.bf16.msra.mxu0 %v4795
        %4808 = vmatpush.bf16.msra.mxu0 %v4794
        %4809 = vmatmul.bf16.gmra.mxu0 %v4799
        %v4810 = vpop.f32.mrf.mxu0
        %v4811 = vadd.f32 0.0, %v4810
        %v4812 = vpop.f32.mrf.mxu0
        %4813 = vdwg.mxu0
        %v4814 = vadd.f32 %v4779, %v4811
        %s4815 = scalar_lea.vmem %s11, 720
        %v4816 = vld [vmem:[%s4815] sm:$0xf]
        %v4817 = vld [vmem:[%s4815 + $0x4] sm:$0xf]
        %v4818 = vld [vmem:[%s4815 + $0x8] sm:$0xf]
        %v4819 = vld [vmem:[%s4815 + $0xc] sm:$0xf]
        %v4820 = vrot.slane %v4678, 2
        %v4825 = vunpack.c.l.b16 %v4816
        %v4826 = vunpack.c.l.b16 %v4817
        %v4827 = vunpack.c.l.b16 %v4818
        %v4828 = vunpack.c.l.b16 %v4819
        %v4829 = vpack.c.b16 %v4826, %v4825
        %v4830 = vpack.c.b16 %v4828, %v4827
        %v4834 = vsel %vm882, %v4820, 0
        %4836 = vmatpush.bf16.msra.mxu0 0
        %4837 = vmatpush.bf16.msra.mxu0 0
        %4838 = vmatpush.bf16.msra.mxu0 0
        %4839 = vmatpush.bf16.msra.mxu0 0
        %4840 = vmatpush.bf16.msra.mxu0 0
        %4841 = vmatpush.bf16.msra.mxu0 0
        %4842 = vmatpush.bf16.msra.mxu0 %v4830
        %4843 = vmatpush.bf16.msra.mxu0 %v4829
        %4844 = vmatmul.bf16.gmra.mxu0 %v4834
        %v4845 = vpop.f32.mrf.mxu0
        %v4846 = vadd.f32 0.0, %v4845
        %v4847 = vpop.f32.mrf.mxu0
        %4848 = vdwg.mxu0
        %v4849 = vadd.f32 %v4814, %v4846
        %s4850 = scalar_lea.vmem %s11, 736
        %v4851 = vld [vmem:[%s4850] sm:$0xf]
        %v4852 = vld [vmem:[%s4850 + $0x4] sm:$0xf]
        %v4853 = vld [vmem:[%s4850 + $0x8] sm:$0xf]
        %v4854 = vld [vmem:[%s4850 + $0xc] sm:$0xf]
        %v4855 = vrot.slane %v4638, 3
        %v4860 = vunpack.c.l.b16 %v4851
        %v4861 = vunpack.c.l.b16 %v4852
        %v4862 = vunpack.c.l.b16 %v4853
        %v4863 = vunpack.c.l.b16 %v4854
        %v4864 = vpack.c.b16 %v4861, %v4860
        %v4865 = vpack.c.b16 %v4863, %v4862
        %v4869 = vsel %vm882, %v4855, 0
        %4871 = vmatpush.bf16.msra.mxu0 0
        %4872 = vmatpush.bf16.msra.mxu0 0
        %4873 = vmatpush.bf16.msra.mxu0 0
        %4874 = vmatpush.bf16.msra.mxu0 0
        %4875 = vmatpush.bf16.msra.mxu0 0
        %4876 = vmatpush.bf16.msra.mxu0 0
        %4877 = vmatpush.bf16.msra.mxu0 %v4865
        %4878 = vmatpush.bf16.msra.mxu0 %v4864
        %4879 = vmatmul.bf16.gmra.mxu0 %v4869
        %v4880 = vpop.f32.mrf.mxu0
        %v4881 = vadd.f32 0.0, %v4880
        %v4882 = vpop.f32.mrf.mxu0
        %4883 = vdwg.mxu0
        %v4884 = vadd.f32 %v4849, %v4881
        %s4885 = scalar_lea.vmem %s11, 752
        %v4886 = vld [vmem:[%s4885] sm:$0xf]
        %v4887 = vld [vmem:[%s4885 + $0x4] sm:$0xf]
        %v4888 = vld [vmem:[%s4885 + $0x8] sm:$0xf]
        %v4889 = vld [vmem:[%s4885 + $0xc] sm:$0xf]
        %v4890 = vrot.slane %v4678, 3
        %v4895 = vunpack.c.l.b16 %v4886
        %v4896 = vunpack.c.l.b16 %v4887
        %v4897 = vunpack.c.l.b16 %v4888
        %v4898 = vunpack.c.l.b16 %v4889
        %v4899 = vpack.c.b16 %v4896, %v4895
        %v4900 = vpack.c.b16 %v4898, %v4897
        %v4904 = vsel %vm882, %v4890, 0
        %4906 = vmatpush.bf16.msra.mxu0 0
        %4907 = vmatpush.bf16.msra.mxu0 0
        %4908 = vmatpush.bf16.msra.mxu0 0
        %4909 = vmatpush.bf16.msra.mxu0 0
        %4910 = vmatpush.bf16.msra.mxu0 0
        %4911 = vmatpush.bf16.msra.mxu0 0
        %4912 = vmatpush.bf16.msra.mxu0 %v4900
        %4913 = vmatpush.bf16.msra.mxu0 %v4899
        %4914 = vmatmul.bf16.gmra.mxu0 %v4904
        %v4915 = vpop.f32.mrf.mxu0
        %v4916 = vadd.f32 0.0, %v4915
        %v4917 = vpop.f32.mrf.mxu0
        %4918 = vdwg.mxu0
        %v4919 = vadd.f32 %v4884, %v4916
        %v4920 = vpack.c.bf16 %v3230, %v3230
        %s4921 = scalar_lea.vmem %s11, 768
        %v4922 = vld [vmem:[%s4921] sm:$0xf]
        %v4923 = vld [vmem:[%s4921 + $0x4] sm:$0xf]
        %v4924 = vld [vmem:[%s4921 + $0x8] sm:$0xf]
        %v4925 = vld [vmem:[%s4921 + $0xc] sm:$0xf]
        %v4930 = vunpack.c.l.b16 %v4922
        %v4931 = vunpack.c.l.b16 %v4923
        %v4932 = vunpack.c.l.b16 %v4924
        %v4933 = vunpack.c.l.b16 %v4925
        %v4934 = vpack.c.b16 %v4931, %v4930
        %v4935 = vpack.c.b16 %v4933, %v4932
        %v4939 = vsel %vm882, %v4920, 0
        %4941 = vmatpush.bf16.msra.mxu0 0
        %4942 = vmatpush.bf16.msra.mxu0 0
        %4943 = vmatpush.bf16.msra.mxu0 0
        %4944 = vmatpush.bf16.msra.mxu0 0
        %4945 = vmatpush.bf16.msra.mxu0 0
        %4946 = vmatpush.bf16.msra.mxu0 0
        %4947 = vmatpush.bf16.msra.mxu0 %v4935
        %4948 = vmatpush.bf16.msra.mxu0 %v4934
        %4949 = vmatmul.bf16.gmra.mxu0 %v4939
        %v4950 = vpop.f32.mrf.mxu0
        %v4951 = vadd.f32 0.0, %v4950
        %v4952 = vpop.f32.mrf.mxu0
        %4953 = vdwg.mxu0
        %v4954 = vadd.f32 %v4919, %v4951
        %v4955 = vld [vmem:[%s12] sm:$0x1]
        %v4956 = vadd.f32 %v4954, %v4955
        %v4957 = vmax.f32 %v4956, 0.0
        %v4958 = vpack.c.bf16 %v4957, %v4957
        %v4959 = vld [vmem:[%s13] sm:$0xf]
        %v4960 = vld [vmem:[%s13 + $0x4] sm:$0xf]
        %v4961 = vld [vmem:[%s13 + $0x8] sm:$0xf]
        %v4962 = vld [vmem:[%s13 + $0xc] sm:$0xf]
        %v4963 = vld [vmem:[%s13 + $0x10] sm:$0xf]
        %v4964 = vld [vmem:[%s13 + $0x14] sm:$0xf]
        %v4965 = vld [vmem:[%s13 + $0x18] sm:$0xf]
        %v4966 = vld [vmem:[%s13 + $0x1c] sm:$0xf]
        %v4967 = vld [vmem:[%s14] sm:$0x1]
        %v4976 = vunpack.c.l.b16 %v4959
        %v4977 = vunpack.c.l.b16 %v4960
        %v4978 = vunpack.c.l.b16 %v4961
        %v4979 = vunpack.c.l.b16 %v4962
        %v4980 = vunpack.c.l.b16 %v4963
        %v4981 = vunpack.c.l.b16 %v4964
        %v4982 = vunpack.c.l.b16 %v4965
        %v4983 = vunpack.c.l.b16 %v4966
        %v4984 = vpack.c.b16 %v4977, %v4976
        %v4985 = vpack.c.b16 %v4979, %v4978
        %v4986 = vpack.c.b16 %v4981, %v4980
        %v4987 = vpack.c.b16 %v4983, %v4982
        %v4993 = vsel %vm901, %v4958, 0
        %4995 = vmatpush.bf16.msra.mxu0 0
        %4996 = vmatpush.bf16.msra.mxu0 0
        %4997 = vmatpush.bf16.msra.mxu0 0
        %4998 = vmatpush.bf16.msra.mxu0 0
        %4999 = vmatpush.bf16.msra.mxu0 %v4987
        %5000 = vmatpush.bf16.msra.mxu0 %v4986
        %5001 = vmatpush.bf16.msra.mxu0 %v4985
        %5002 = vmatpush.bf16.msra.mxu0 %v4984
        %5003 = vmatmul.bf16.gmra.mxu0 %v4993
        %v5004 = vpop.f32.mrf.mxu0
        %v5005 = vadd.f32 %v4967, %v5004
        %v5006 = vpop.f32.mrf.mxu0
        %5007 = vdwg.mxu0
        %vm5008 = vcmask 73728
        %5009 = vst.msk [vmem:[%s486] sm:$0x1] %vm5008, %v5005
        %s5010 = sand.u32 %s357, 1
        %s5011 = scalar_lea.sflag [#allocation7], %s5010
        %s5012 = sand.u32 %s357, 1
        %s5013 = scalar_lea.vmem [#allocation6], %s5012
        // Predicated region
        $region81: #{net_forward.1} parent=79 // pred_check
          %p5014 = pneg %p367
        $region82: #{net_forward.1} parent=79 // pred_check_branch
          %5016 = sbr.rel (%p5014) target = $region84
        $region83: #{net_forward.1} parent=79 // pred_region
          %5018 = vsyncadd %s5011, 0
          %s5019 = scalar_lea.hbm %s15, %s29
          %s5021 = sshll.u32 %s5013, 4
          %s5022 = int_to_ptr.vmem [resolvable:$true] %s5021
          %s5023 = sshll.u32 %s5019, 4
          %s5024 = int_to_ptr.hbm [resolvable:$true] %s5023
          %5026 = dma.vmem_to_hbm [thread:$0]  %s5022, 16, %s5024, %s5011
        $region84: #{net_forward.1} parent=79 // pred_fallthru
          _
      $region80: #{net_forward.1} parent=5 // pred_fallthru
        _
      %p5027 = scmp.le.s32.totalorder 2, %s24
      // Predicated region
      $region85: #{net_forward.1} parent=5 // pred_check
        %p5028 = pneg %p5027
      $region86: #{net_forward.1} parent=5 // pred_check_branch
        %5030 = sbr.rel (%p5028) target = $region88
      $region87: #{net_forward.1} parent=5 // pred_region
        %s5031 = ssub.s32 %s24, 2
        // Predicated region
        $region89: #{net_forward.1} parent=87 // pred_check
          %p5032 = pneg %p373
        $region90: #{net_forward.1} parent=87 // pred_check_branch
          %5034 = sbr.rel (%p5032) target = $region92
        $region91: #{net_forward.1} parent=87 // pred_region
          %s5035 = sand.u32 %s358, 1
          %s5036 = scalar_lea.sflag [#allocation7], %s5035
          %s5037 = sand.u32 %s358, 1
          %s5038 = scalar_lea.vmem [#allocation6], %s5037
          %5040 = dma.done %s5036, 16
        $region92: #{net_forward.1} parent=87 // pred_fallthru
          _
      $region88: #{net_forward.1} parent=5 // pred_fallthru
        _
    $region6: #{net_forward.1} parent=1 // loop_footer
      %s28 = sadd.s32 1, %s24
    $region7: #{net_forward.1} parent=1 // loop_footer_branch
      %23 = sbr.rel target = $region3
    $region8: #{net_forward.1} parent=1 // loop_exit
      _
    %5041 = vsyncpa [#allocation7], 1
    %s5042 = scalar_lea.sflag [#allocation7], 1
    %5043 = vsyncpa %s5042, 1

</llo_original>
